<compile_context>
chip_gen: v7x
topology: tpu7x:2x2x1
jax: 0.10.0
libtpu: 0.0.40
codegen_flags: <defaults>
</compile_context>

<pallas_src>
import math
from functools import partial

import jax
import jax.numpy as jnp
from jax.experimental import pallas as pl
from jax.experimental.pallas import tpu as pltpu


# ----------------------------- generation-aware sizing -----------------------------

def _tpu_vmem_capacity():
    try:
        return pltpu.get_tpu_info().vmem_capacity_bytes
    except Exception:
        return 64 * 1024 * 1024  # conservative fallback (v7x-class)


_VMEM_CAP = _tpu_vmem_capacity()
_SMALL_VMEM = _VMEM_CAP <= 64 * 1024 * 1024           # v7x: 64 MiB / TC
_VMEM_LIMIT = (48 if _SMALL_VMEM else 96) * 1024 * 1024
_ROW_TILE_CAP = 256 if _SMALL_VMEM else 512            # measured: 512 ~85% HBM roofline on v6e
_FFN_TILE_CAP = 2048


def _row_tile(M, cap):
    """Row tile TM and padded row count Mp. Prefers a divisor of M (no jnp.pad)."""
    if M <= cap:
        return M, M
    for tm in range(cap, 7, -1):                # largest divisor <= cap, sublane-friendly
        if M % tm == 0 and tm % 8 == 0:
            return tm, M
    TM = cap                                    # fallback: pad the tail
    Mp = ((M + TM - 1) // TM) * TM
    return TM, Mp


def _col_tile(N, cap):
    """Tile a feature dim when large and evenly divisible (lane-aligned)."""
    if N > cap and N % cap == 0:
        return cap
    return N


# --------------------------- fused (LN +) linear (+ residual) ---------------------------

def _fused_linear_kernel(*refs, apply_ln, add_residual):
    idx = 0
    x_ref = refs[idx]; idx += 1
    if apply_ln:
        g_ref, be_ref = refs[idx], refs[idx + 1]; idx += 2
    w_ref, b_ref = refs[idx], refs[idx + 1]; idx += 2
    if add_residual:
        r_ref = refs[idx]; idx += 1
    o_ref = refs[idx]

    if apply_ln:                                       # LN stats in f32
        x = x_ref[...].astype(jnp.float32)
        mu = jnp.mean(x, axis=-1, keepdims=True)
        var = jnp.mean(jnp.square(x - mu), axis=-1, keepdims=True)
        xb = ((x - mu) * jax.lax.rsqrt(var + 1e-5) * g_ref[...]
              + be_ref[...]).astype(jnp.bfloat16)
    else:
        xb = x_ref[...]                                # already bf16
    acc = jnp.dot(xb, w_ref[...], preferred_element_type=jnp.float32)   # MXU, f32 acc
    acc = acc + b_ref[...]
    if add_residual:
        acc = acc + r_ref[...].astype(jnp.float32)     # residual fused into output store
    o_ref[...] = acc.astype(o_ref.dtype)


def fused_linear(x2d, w, b, *, ln=None, residual=None, out_dtype=jnp.bfloat16,
                 tile_n=512):
    """(M, K) @ (K, N) + b, optionally LayerNorm(x) first and/or + residual after."""
    M, K = x2d.shape
    N = w.shape[1]
    TM, Mp = _row_tile(M, _ROW_TILE_CAP)
    TN = _col_tile(N, tile_n)
    x2d = x2d.astype(jnp.bfloat16)
    if residual is not None:
        residual = residual.astype(jnp.bfloat16)
    if Mp != M:
        x2d = jnp.pad(x2d, ((0, Mp - M), (0, 0)))
        if residual is not None:
            residual = jnp.pad(residual, ((0, Mp - M), (0, 0)))

    # Grid: N outermost, M innermost -> weight tile index constant along inner axis
    # (DMA'd once per N tile), bf16 x tiles stream.
    in_specs = [pl.BlockSpec((TM, K), lambda j, i: (i, 0))]
    args = [x2d]
    if ln is not None:
        g, be = ln
        in_specs += [pl.BlockSpec((1, K), lambda j, i: (0, 0)),
                     pl.BlockSpec((1, K), lambda j, i: (0, 0))]
        args += [g.reshape(1, K), be.reshape(1, K)]
    in_specs += [pl.BlockSpec((K, TN), lambda j, i: (0, j)),
                 pl.BlockSpec((1, TN), lambda j, i: (0, j))]
    args += [w.astype(jnp.bfloat16), b.reshape(1, N)]
    if residual is not None:
        in_specs.append(pl.BlockSpec((TM, TN), lambda j, i: (i, j)))
        args.append(residual)

    out = pl.pallas_call(
        partial(_fused_linear_kernel,
                apply_ln=ln is not None, add_residual=residual is not None),
        out_shape=jax.ShapeDtypeStruct((Mp, N), out_dtype),
        grid=(N // TN, Mp // TM),
        in_specs=in_specs,
        out_specs=pl.BlockSpec((TM, TN), lambda j, i: (i, j)),
        compiler_params=pltpu.CompilerParams(
            dimension_semantics=("parallel", "parallel"),
            vmem_limit_bytes=_VMEM_LIMIT),
    )(*args)
    return out[:M] if Mp != M else out


# --------------------------- fused LN + FFN + residual (Fh-tiled) ---------------------------

def _ln_ffn_kernel(x_ref, g_ref, be_ref, w1_ref, b1_ref, w2_ref, b2_ref, r_ref,
                   o_ref, acc_ref):
    fh = pl.program_id(1)

    @pl.when(fh == 0)
    def _():
        acc_ref[...] = jnp.zeros_like(acc_ref)

    x = x_ref[...].astype(jnp.float32)
    mu = jnp.mean(x, axis=-1, keepdims=True)
    var = jnp.mean(jnp.square(x - mu), axis=-1, keepdims=True)
    xn = ((x - mu) * jax.lax.rsqrt(var + 1e-5) * g_ref[...]
          + be_ref[...]).astype(jnp.bfloat16)
    h = jnp.dot(xn, w1_ref[...], preferred_element_type=jnp.float32) + b1_ref[...]
    h = jax.nn.gelu(h)
    acc_ref[...] += jnp.dot(h.astype(jnp.bfloat16), w2_ref[...],
                            preferred_element_type=jnp.float32)

    @pl.when(fh == pl.num_programs(1) - 1)
    def _():
        o_ref[...] = (acc_ref[...] + b2_ref[...]
                      + r_ref[...].astype(jnp.float32)).astype(o_ref.dtype)


def ln_ffn_residual(x2d, g, be, w1, b1, w2, b2, residual):
    M, D = x2d.shape
    Fh = w1.shape[1]
    TM, Mp = _row_tile(M, _ROW_TILE_CAP)
    TF = _col_tile(Fh, _FFN_TILE_CAP)             # bound weight-block VMEM on v7x
    x2d = x2d.astype(jnp.bfloat16)
    residual = residual.astype(jnp.bfloat16)
    if Mp != M:
        x2d = jnp.pad(x2d, ((0, Mp - M), (0, 0)))
        residual = jnp.pad(residual, ((0, Mp - M), (0, 0)))
    out = pl.pallas_call(
        _ln_ffn_kernel,
        out_shape=jax.ShapeDtypeStruct((Mp, D), jnp.bfloat16),
        grid=(Mp // TM, Fh // TF),
        in_specs=[pl.BlockSpec((TM, D), lambda i, f: (i, 0)),
                  pl.BlockSpec((1, D), lambda i, f: (0, 0)),
                  pl.BlockSpec((1, D), lambda i, f: (0, 0)),
                  pl.BlockSpec((D, TF), lambda i, f: (0, f)),
                  pl.BlockSpec((1, TF), lambda i, f: (0, f)),
                  pl.BlockSpec((TF, D), lambda i, f: (f, 0)),
                  pl.BlockSpec((1, D), lambda i, f: (0, 0)),
                  pl.BlockSpec((TM, D), lambda i, f: (i, 0))],
        out_specs=pl.BlockSpec((TM, D), lambda i, f: (i, 0)),
        scratch_shapes=[pltpu.VMEM((TM, D), jnp.float32)],
        compiler_params=pltpu.CompilerParams(
            dimension_semantics=("parallel", "arbitrary"),
            vmem_limit_bytes=_VMEM_LIMIT),
    )(x2d, g.reshape(1, D), be.reshape(1, D),
      w1.astype(jnp.bfloat16), b1.reshape(1, Fh),
      w2.astype(jnp.bfloat16), b2.reshape(1, D), residual)
    return out[:M] if Mp != M else out


# --------------------------- multi-head attention ---------------------------

def _mha_heads(q, k, v, o_ref, num_heads):
    """q: (Sq, D), k/v: (Sk, D) bf16 (scale already folded into q). Stores per head."""
    Sq, D = q.shape
    Dh = D // num_heads
    for h in range(num_heads):                              # static unroll over heads
        sl = slice(h * Dh, (h + 1) * Dh)
        qh, kh, vh = q[:, sl], k[:, sl], v[:, sl]
        s = jax.lax.dot_general(qh, kh, (((1,), (1,)), ((), ())),
                                preferred_element_type=jnp.float32)
        m = jnp.max(s, axis=-1, keepdims=True)               # softmax stats in f32
        p = jnp.exp(s - m)
        denom = jnp.sum(p, axis=-1, keepdims=True)
        attn = (p * pl.reciprocal(denom, approx=True)).astype(vh.dtype)
        o_ref[0, :, h * Dh:(h + 1) * Dh] = jnp.dot(           # per-head lane-slice store
            attn, vh, preferred_element_type=jnp.float32).astype(o_ref.dtype)


def _self_attn_kernel(qkv_ref, o_ref, *, num_heads, scale):
    D = o_ref.shape[-1]
    qkv = qkv_ref[0]                                         # (S, 3D) bf16
    q = qkv[:, :D] * scale                                   # fold scale into q (bf16)
    k = qkv[:, D:2 * D]
    v = qkv[:, 2 * D:]
    _mha_heads(q, k, v, o_ref, num_heads)


def _cross_attn_kernel(q_ref, kv_ref, o_ref, *, num_heads, scale):
    D = o_ref.shape[-1]
    q = q_ref[0] * scale                                     # (Sq, D) bf16
    kv = kv_ref[0]                                           # (Sk, 2D) bf16
    _mha_heads(q, kv[:, :D], kv[:, D:], o_ref, num_heads)


def self_attention(qkv3d, num_heads):
    """qkv3d: (B, S, 3D) bf16 -> (B, S, D) bf16 (bidirectional softmax attention)."""
    B, S, threeD = qkv3d.shape
    D = threeD // 3
    scale = 1.0 / math.sqrt(D // num_heads)
    return pl.pallas_call(
        partial(_self_attn_kernel, num_heads=num_heads, scale=scale),
        out_shape=jax.ShapeDtypeStruct((B, S, D), jnp.bfloat16),
        grid=(B,),
        in_specs=[pl.BlockSpec((1, S, threeD), lambda b: (b, 0, 0))],
        out_specs=pl.BlockSpec((1, S, D), lambda b: (b, 0, 0)),
        compiler_params=pltpu.CompilerParams(
            dimension_semantics=("parallel",),
            vmem_limit_bytes=_VMEM_LIMIT),
    )(qkv3d)


def cross_attention(q3d, kv3d, num_heads):
    """q3d: (B, Sq, D), kv3d: (B, Sk, 2D) -> (B, Sq, D), all bf16."""
    B, Sq, D = q3d.shape
    Sk = kv3d.shape[1]
    scale = 1.0 / math.sqrt(D // num_heads)
    return pl.pallas_call(
        partial(_cross_attn_kernel, num_heads=num_heads, scale=scale),
        out_shape=jax.ShapeDtypeStruct((B, Sq, D), jnp.bfloat16),
        grid=(B,),
        in_specs=[pl.BlockSpec((1, Sq, D), lambda b: (b, 0, 0)),
                  pl.BlockSpec((1, Sk, 2 * D), lambda b: (b, 0, 0))],
        out_specs=pl.BlockSpec((1, Sq, D), lambda b: (b, 0, 0)),
        compiler_params=pltpu.CompilerParams(
            dimension_semantics=("parallel",),
            vmem_limit_bytes=_VMEM_LIMIT),
    )(q3d, kv3d)


# --------------------------- fused final LN + logits + cross-entropy ---------------------------

def _ln_logits_ce_kernel(x_ref, g_ref, be_ref, w_ref, b_ref, lab_ref,
                         logits_ref, loss_ref, cnt_ref):
    @pl.when(pl.program_id(0) == 0)
    def _():
        loss_ref[...] = jnp.zeros_like(loss_ref)
        cnt_ref[...] = jnp.zeros_like(cnt_ref)

    x = x_ref[...].astype(jnp.float32)
    mu = jnp.mean(x, axis=-1, keepdims=True)
    var = jnp.mean(jnp.square(x - mu), axis=-1, keepdims=True)
    xn = ((x - mu) * jax.lax.rsqrt(var + 1e-5) * g_ref[...]
          + be_ref[...]).astype(jnp.bfloat16)
    logits = jnp.dot(xn, w_ref[...], preferred_element_type=jnp.float32) + b_ref[...]
    logits_ref[...] = logits                              # logits never round-trip HBM for CE

    labels = lab_ref[...]                                  # (TM, 1) int32, -1 == ignore
    m = jnp.max(logits, axis=-1, keepdims=True)
    lse = jnp.log(jnp.sum(jnp.exp(logits - m), axis=-1, keepdims=True)) + m
    iota = jax.lax.broadcasted_iota(jnp.int32, logits.shape, 1)
    picked = jnp.sum(jnp.where(iota == labels, logits, 0.0), axis=-1, keepdims=True)
    valid = labels != -1
    per_tok = jnp.where(valid, lse - picked, 0.0)
    loss_ref[...] += jnp.sum(per_tok, axis=(0, 1), keepdims=True)
    cnt_ref[...] += jnp.sum(valid.astype(jnp.float32), axis=(0, 1), keepdims=True)


def ln_logits_ce(x2d, g, be, w, b, labels1d):
    """LayerNorm(x) @ w + b -> logits (f32) and mean CE over labels != -1."""
    M, D = x2d.shape
    V = w.shape[1]
    TM, Mp = _row_tile(M, _ROW_TILE_CAP)
    x2d = x2d.astype(jnp.bfloat16)
    labels = labels1d.reshape(M, 1).astype(jnp.int32)
    if Mp != M:
        x2d = jnp.pad(x2d, ((0, Mp - M), (0, 0)))
        labels = jnp.pad(labels, ((0, Mp - M), (0, 0)), constant_values=-1)
    logits, loss, cnt = pl.pallas_call(
        _ln_logits_ce_kernel,
        out_shape=(jax.ShapeDtypeStruct((Mp, V), jnp.float32),
                   jax.ShapeDtypeStruct((1, 1), jnp.float32),
                   jax.ShapeDtypeStruct((1, 1), jnp.float32)),
        grid=(Mp // TM,),
        in_specs=[pl.BlockSpec((TM, D), lambda i: (i, 0)),
                  pl.BlockSpec((1, D), lambda i: (0, 0)),
                  pl.BlockSpec((1, D), lambda i: (0, 0)),
                  pl.BlockSpec((D, V), lambda i: (0, 0)),
                  pl.BlockSpec((1, V), lambda i: (0, 0)),
                  pl.BlockSpec((TM, 1), lambda i: (i, 0))],
        out_specs=(pl.BlockSpec((TM, V), lambda i: (i, 0)),
                   pl.BlockSpec((1, 1), lambda i: (0, 0)),
                   pl.BlockSpec((1, 1), lambda i: (0, 0))),
        compiler_params=pltpu.CompilerParams(
            dimension_semantics=("arbitrary",),            # loss accumulation axis
            vmem_limit_bytes=_VMEM_LIMIT),
    )(x2d, g.reshape(1, D), be.reshape(1, D),
      w.astype(jnp.bfloat16), b.reshape(1, V), labels)
    logits = logits[:M] if Mp != M else logits
    return loss[0, 0] / cnt[0, 0], logits


# ----------------------------- model (glue in JAX) -----------------------------

def transformer_decoder(params, x, ctx, cfg):
    # TODO(synk): TransformerDecoder internals are not provided in the source module;
    # this implements a standard pre-LN decoder block (self-attn -> cross-attn(context) -> GELU FFN).
    B, S, D = x.shape
    Bc, St, _ = ctx.shape
    H = cfg['num_heads']
    xf = x.reshape(B * S, D).astype(jnp.bfloat16)          # bf16 residual stream
    ctxf = ctx.reshape(Bc * St, D)
    for lp in params['layers']:
        # --- self attention: fused LN + QKV projection; fused qkv fed straight to attention ---
        qkv = fused_linear(xf, lp['self_wqkv'], lp['self_bqkv'],
                           ln=(lp['ln1_g'], lp['ln1_b']))                 # (M, 3D) bf16
        attn = self_attention(qkv.reshape(B, S, 3 * D), H).reshape(B * S, D)
        xf = fused_linear(attn, lp['self_wo'], lp['self_bo'], residual=xf)

        # --- cross attention over text context (fused LN+Q, fused KV) ---
        # TODO(synk): no key-padding mask is applied over padded text positions
        # (decoder internals unspecified in the source module).
        q = fused_linear(xf, lp['cross_wq'], lp['cross_bq'],
                         ln=(lp['ln2_g'], lp['ln2_b'])).reshape(B, S, D)
        kv = fused_linear(ctxf, lp['cross_wkv'], lp['cross_bkv']).reshape(Bc, St, 2 * D)
        attn = cross_attention(q, kv, H).reshape(B * S, D)
        xf = fused_linear(attn, lp['cross_wo'], lp['cross_bo'], residual=xf)

        # --- fused LN + FFN + residual (Fh tiled, f32 accumulator) ---
        xf = ln_ffn_residual(xf, lp['ln3_g'], lp['ln3_b'],
                             lp['ffn_w1'], lp['ffn_b1'],
                             lp['ffn_w2'], lp['ffn_b2'], xf)
    return xf  # (B*S, D) bf16; final LN fused into the logits/CE kernel


def model_forward(params, x_img, x_txt, rng, cfg):
    """x_img: (B, S) int image-token ids in [0, 1024); x_txt: (B, St, 2) [ids, attn_mask]."""
    B, S = x_img.shape
    D = cfg['embed_dim']
    x_txt_ids, x_txt_mask = x_txt[..., 0], x_txt[..., 1]

    # TODO(synk): the frozen pretrained text tokenizer/encoder is an external module
    # with no Pallas equivalent; substituted with a deterministic embedding lookup.
    txt_hidden = params['txt_tok_emb'][x_txt_ids] * x_txt_mask[..., None].astype(jnp.float32)
    # F.normalize(x_txt, dim=1): L2-normalize along the sequence axis.
    norm = jnp.sqrt(jnp.sum(txt_hidden * txt_hidden, axis=1, keepdims=True))
    txt_hidden = txt_hidden / jnp.maximum(norm, 1e-12)

    # cosine-schedule random masking of image tokens
    k1, k2 = jax.random.split(rng)
    rand_time = jax.random.uniform(k1, (B,), jnp.float32)
    rand_mask_probs = jnp.cos(rand_time * (math.pi * 0.5))
    num_token_masked = jnp.clip(jnp.round(S * rand_mask_probs), 1, None)
    batch_rand_perm = jnp.argsort(jax.random.uniform(k2, (B, S)), axis=-1)
    mask = batch_rand_perm < num_token_masked[:, None]

    x = jnp.where(mask, 1024, x_img)                        # 1024 == [MASK] token id
    labels = jnp.where(mask, x_img, -1).astype(jnp.int32)   # -1 == ignore_index

    img_emb = params['img_emb'][x]                           # (B, S, D) embedding gather
    pos_emb = params['pos_emb'][:S][None, :, :]              # learnable positional embeddings
    h = img_emb + pos_emb

    # text projector: Linear(txt_embed_dim -> embed_dim)
    Bt, St, Dt = txt_hidden.shape
    ctx = fused_linear(txt_hidden.reshape(Bt * St, Dt),
                       params['txt_proj_w'], params['txt_proj_b']).reshape(Bt, St, D)

    out2d = transformer_decoder(params, h, ctx, cfg)         # (B*S, D) bf16

    # fused final LN + logits head + cross-entropy (ignore_index=-1)
    loss, logits = ln_logits_ce(out2d, params['final_ln_g'], params['final_ln_b'],
                                params['final_w'], params['final_b'],
                                labels.reshape(B * S))
    logits3d = logits.reshape(B, S, 1024)
    return loss, logits3d


# ----------------------------- deterministic init -----------------------------

def init_params(key, cfg):
    D, Fh, Dt = cfg['embed_dim'], cfg['ffn_dim'], cfg['txt_embed_dim']
    keys = iter(jax.random.split(key, 128))

    def dense(shape, scale=0.02):
        return jax.random.normal(next(keys), shape, jnp.float32) * scale

    params = {
        'img_emb': dense((1025, D)),          # 1024 codes + mask token
        'pos_emb': dense((1024, D)),          # max_seq_len = 1024
        'txt_tok_emb': dense((cfg['txt_vocab'], Dt)),
        'txt_proj_w': dense((Dt, D)),
        'txt_proj_b': jnp.zeros((D,), jnp.float32),
        'final_w': dense((D, 1024)),
        'final_b': jnp.zeros((1024,), jnp.float32),
        'final_ln_g': jnp.ones((D,), jnp.float32),
        'final_ln_b': jnp.zeros((D,), jnp.float32),
        'layers': [],
    }
    for _ in range(cfg['num_layers']):
        lp = {
            'self_wqkv': dense((D, 3 * D)), 'self_bqkv': jnp.zeros((3 * D,), jnp.float32),
            'self_wo': dense((D, D)), 'self_bo': jnp.zeros((D,), jnp.float32),
            'cross_wq': dense((D, D)), 'cross_bq': jnp.zeros((D,), jnp.float32),
            'cross_wkv': dense((D, 2 * D)), 'cross_bkv': jnp.zeros((2 * D,), jnp.float32),
            'cross_wo': dense((D, D)), 'cross_bo': jnp.zeros((D,), jnp.float32),
            'ffn_w1': dense((D, Fh)), 'ffn_b1': jnp.zeros((Fh,), jnp.float32),
            'ffn_w2': dense((Fh, D)), 'ffn_b2': jnp.zeros((D,), jnp.float32),
        }
        for n in (1, 2, 3):
            lp[f'ln{n}_g'] = jnp.ones((D,), jnp.float32)
            lp[f'ln{n}_b'] = jnp.zeros((D,), jnp.float32)
        params['layers'].append(lp)
    return params


if __name__ == "__main__":
    cfg = dict(embed_dim=32, num_heads=4, num_layers=2, ffn_dim=128,
               txt_embed_dim=48, txt_vocab=100)

    key = jax.random.PRNGKey(0)
    kp, ki, kt, km = jax.random.split(key, 4)

    params = init_params(kp, cfg)

    B, S, St = 2, 16, 8
    x_img = jax.random.randint(ki, (B, S), 0, 1024, dtype=jnp.int32)
    txt_ids = jax.random.randint(kt, (B, St), 0, cfg['txt_vocab'], dtype=jnp.int32)
    txt_mask = jnp.ones((B, St), jnp.int32)
    x_txt = jnp.stack([txt_ids, txt_mask], axis=-1)       # (B, St, 2)

    fwd = jax.jit(partial(model_forward, cfg=cfg))
    loss, logits = fwd(params, x_img, x_txt, km)
    jax.block_until_ready((loss, logits))
    assert logits.shape == (B, S, 1024) and jnp.isfinite(loss)
    print("KERNEL_OK")
</pallas_src>

<mosaic_0001>
module attributes {stable_mosaic.version = 11 : i64} {
  func.func @_fused_linear_kernel(%arg0: i32, %arg1: i32, %arg2: memref<32x32xbf16, #tpu.memory_space<vmem>>, %arg3: memref<32x32xbf16, #tpu.memory_space<vmem>>, %arg4: memref<1x32xf32, #tpu.memory_space<vmem>>, %arg5: memref<32x32xbf16, #tpu.memory_space<vmem>>, %arg6: memref<32x32xbf16, #tpu.memory_space<vmem>>) attributes {dimension_semantics = [#tpu.dimension_semantics<parallel>, #tpu.dimension_semantics<parallel>], iteration_bounds = array<i64: 1, 1>, scalar_prefetch = 0 : i64, scratch_operands = 0 : i64, tpu.core_type = #tpu.core_type<tc>, window_params = [{transform_indices = @transform_0, window_bounds = array<i64: 32, 32>}, {transform_indices = @transform_1, window_bounds = array<i64: 32, 32>}, {transform_indices = @transform_2, window_bounds = array<i64: 1, 32>}, {transform_indices = @transform_3, window_bounds = array<i64: 32, 32>}, {transform_indices = @transform_4, window_bounds = array<i64: 32, 32>}]} {
    %c0 = arith.constant 0 : index
    %c0_0 = arith.constant 0 : index
    %0 = vector.load %arg2[%c0, %c0_0] : memref<32x32xbf16, #tpu.memory_space<vmem>>, vector<32x32xbf16>
    %c0_1 = arith.constant 0 : index
    %c0_2 = arith.constant 0 : index
    %1 = vector.load %arg3[%c0_1, %c0_2] : memref<32x32xbf16, #tpu.memory_space<vmem>>, vector<32x32xbf16>
    %cst = arith.constant dense<0.000000e+00> : vector<32x32xf32>
    %2 = tpu.matmul %0, %1, %cst {dimension_numbers = #tpu.dot_dimension_numbers<[1], [0], [0], [1], [0, 0, 1, 1], [], []>} : vector<32x32xbf16>, vector<32x32xbf16>, vector<32x32xf32> -> vector<32x32xf32>
    %c0_3 = arith.constant 0 : index
    %c0_4 = arith.constant 0 : index
    %3 = vector.load %arg4[%c0_3, %c0_4] : memref<1x32xf32, #tpu.memory_space<vmem>>, vector<1x32xf32>
    %4 = vector.broadcast %3 : vector<1x32xf32> to vector<32x32xf32>
    %5 = arith.addf %2, %4 : vector<32x32xf32>
    %c0_5 = arith.constant 0 : index
    %c0_6 = arith.constant 0 : index
    %6 = vector.load %arg5[%c0_5, %c0_6] : memref<32x32xbf16, #tpu.memory_space<vmem>>, vector<32x32xbf16>
    %7 = arith.extf %6 : vector<32x32xbf16> to vector<32x32xf32>
    %8 = arith.addf %5, %7 : vector<32x32xf32>
    %9 = arith.truncf %8 : vector<32x32xf32> to vector<32x32xbf16>
    %c0_7 = arith.constant 0 : index
    %c0_8 = arith.constant 0 : index
    %10 = vector.load %arg6[%c0_7, %c0_8] : memref<32x32xbf16, #tpu.memory_space<vmem>>, vector<32x32xbf16>
    tpu.vector_store %arg6[%c0_7, %c0_8], %9 {strides = array<i32>} : memref<32x32xbf16, #tpu.memory_space<vmem>>, vector<32x32xbf16>,
    return
  }
  func.func @transform_0(%arg0: i32, %arg1: i32) -> (i32, i32) {
    %c0_i32 = arith.constant 0 : i32
    %c0_i32_0 = arith.constant 0 : i32
    return %arg1, %c0_i32 : i32, i32
  }
  func.func @transform_1(%arg0: i32, %arg1: i32) -> (i32, i32) {
    %c0_i32 = arith.constant 0 : i32
    %c0_i32_0 = arith.constant 0 : i32
    return %c0_i32, %arg0 : i32, i32
  }
  func.func @transform_2(%arg0: i32, %arg1: i32) -> (i32, i32) {
    %c0_i32 = arith.constant 0 : i32
    %c0_i32_0 = arith.constant 0 : i32
    return %c0_i32, %arg0 : i32, i32
  }
  func.func @transform_3(%arg0: i32, %arg1: i32) -> (i32, i32) {
    %c0_i32 = arith.constant 0 : i32
    return %arg1, %arg0 : i32, i32
  }
  func.func @transform_4(%arg0: i32, %arg1: i32) -> (i32, i32) {
    %c0_i32 = arith.constant 0 : i32
    return %arg1, %arg0 : i32, i32
  }
}

module attributes {stable_mosaic.version = 11 : i64} {
  func.func @_fused_linear_kernel(%arg0: i32, %arg1: i32, %arg2: memref<32x32xbf16, #tpu.memory_space<vmem>>, %arg3: memref<1x32xf32, #tpu.memory_space<vmem>>, %arg4: memref<1x32xf32, #tpu.memory_space<vmem>>, %arg5: memref<32x96xbf16, #tpu.memory_space<vmem>>, %arg6: memref<1x96xf32, #tpu.memory_space<vmem>>, %arg7: memref<32x96xbf16, #tpu.memory_space<vmem>>) attributes {dimension_semantics = [#tpu.dimension_semantics<parallel>, #tpu.dimension_semantics<parallel>], iteration_bounds = array<i64: 1, 1>, scalar_prefetch = 0 : i64, scratch_operands = 0 : i64, tpu.core_type = #tpu.core_type<tc>, window_params = [{transform_indices = @transform_0, window_bounds = array<i64: 32, 32>}, {pipeline_mode = #tpu.pipeline_mode<synchronous>, transform_indices = @transform_1, window_bounds = array<i64: 1, 32>}, {pipeline_mode = #tpu.pipeline_mode<synchronous>, transform_indices = @transform_2, window_bounds = array<i64: 1, 32>}, {transform_indices = @transform_3, window_bounds = array<i64: 32, 96>}, {transform_indices = @transform_4, window_bounds = array<i64: 1, 96>}, {transform_indices = @transform_5, window_bounds = array<i64: 32, 96>}]} {
    %c0 = arith.constant 0 : index
    %c0_0 = arith.constant 0 : index
    %0 = vector.load %arg2[%c0, %c0_0] : memref<32x32xbf16, #tpu.memory_space<vmem>>, vector<32x32xbf16>
    %1 = arith.extf %0 : vector<32x32xbf16> to vector<32x32xf32>
    %cst = arith.constant dense<0.000000e+00> : vector<32xf32>
    %2 = vector.multi_reduction <add>, %1, %cst [1] : vector<32x32xf32> to vector<32xf32>
    %3 = vector.shape_cast %2 : vector<32xf32> to vector<32x1xf32>
    %cst_1 = arith.constant 3.200000e+01 : f32
    %4 = vector.broadcast %cst_1 : f32 to vector<32x1xf32>
    %5 = arith.divf %3, %4 : vector<32x1xf32>
    %6 = vector.broadcast %5 : vector<32x1xf32> to vector<32x32xf32>
    %7 = arith.subf %1, %6 : vector<32x32xf32>
    %8 = arith.mulf %7, %7 : vector<32x32xf32>
    %cst_2 = arith.constant dense<0.000000e+00> : vector<32xf32>
    %9 = vector.multi_reduction <add>, %8, %cst_2 [1] : vector<32x32xf32> to vector<32xf32>
    %10 = vector.shape_cast %9 : vector<32xf32> to vector<32x1xf32>
    %cst_3 = arith.constant 3.200000e+01 : f32
    %11 = vector.broadcast %cst_3 : f32 to vector<32x1xf32>
    %12 = arith.divf %10, %11 : vector<32x1xf32>
    %13 = vector.broadcast %5 : vector<32x1xf32> to vector<32x32xf32>
    %14 = arith.subf %1, %13 : vector<32x32xf32>
    %cst_4 = arith.constant 9.99999974E-6 : f32
    %15 = vector.broadcast %cst_4 : f32 to vector<32x1xf32>
    %16 = arith.addf %12, %15 : vector<32x1xf32>
    %17 = math.rsqrt %16 : vector<32x1xf32>
    %18 = vector.broadcast %17 : vector<32x1xf32> to vector<32x32xf32>
    %19 = arith.mulf %14, %18 : vector<32x32xf32>
    %c0_5 = arith.constant 0 : index
    %c0_6 = arith.constant 0 : index
    %20 = vector.load %arg3[%c0_5, %c0_6] : memref<1x32xf32, #tpu.memory_space<vmem>>, vector<1x32xf32>
    %21 = vector.broadcast %20 : vector<1x32xf32> to vector<32x32xf32>
    %22 = arith.mulf %19, %21 : vector<32x32xf32>
    %c0_7 = arith.constant 0 : index
    %c0_8 = arith.constant 0 : index
    %23 = vector.load %arg4[%c0_7, %c0_8] : memref<1x32xf32, #tpu.memory_space<vmem>>, vector<1x32xf32>
    %24 = vector.broadcast %23 : vector<1x32xf32> to vector<32x32xf32>
    %25 = arith.addf %22, %24 : vector<32x32xf32>
    %26 = arith.truncf %25 : vector<32x32xf32> to vector<32x32xbf16>
    %c0_9 = arith.constant 0 : index
    %c0_10 = arith.constant 0 : index
    %27 = vector.load %arg5[%c0_9, %c0_10] : memref<32x96xbf16, #tpu.memory_space<vmem>>, vector<32x96xbf16>
    %cst_11 = arith.constant dense<0.000000e+00> : vector<32x96xf32>
    %28 = tpu.matmul %26, %27, %cst_11 {dimension_numbers = #tpu.dot_dimension_numbers<[1], [0], [0], [1], [0, 0, 1, 1], [], []>} : vector<32x32xbf16>, vector<32x96xbf16>, vector<32x96xf32> -> vector<32x96xf32>
    %c0_12 = arith.constant 0 : index
    %c0_13 = arith.constant 0 : index
    %29 = vector.load %arg6[%c0_12, %c0_13] : memref<1x96xf32, #tpu.memory_space<vmem>>, vector<1x96xf32>
    %30 = vector.broadcast %29 : vector<1x96xf32> to vector<32x96xf32>
    %31 = arith.addf %28, %30 : vector<32x96xf32>
    %32 = arith.truncf %31 : vector<32x96xf32> to vector<32x96xbf16>
    %c0_14 = arith.constant 0 : index
    %c0_15 = arith.constant 0 : index
    %33 = vector.load %arg7[%c0_14, %c0_15] : memref<32x96xbf16, #tpu.memory_space<vmem>>, vector<32x96xbf16>
    tpu.vector_store %arg7[%c0_14, %c0_15], %32 {strides = array<i32>} : memref<32x96xbf16, #tpu.memory_space<vmem>>, vector<32x96xbf16>,
    return
  }
  func.func @transform_0(%arg0: i32, %arg1: i32) -> (i32, i32) {
    %c0_i32 = arith.constant 0 : i32
    %c0_i32_0 = arith.constant 0 : i32
    return %arg1, %c0_i32 : i32, i32
  }
  func.func @transform_1(%arg0: i32, %arg1: i32) -> (i32, i32) {
    %c0_i32 = arith.constant 0 : i32
    %c0_i32_0 = arith.constant 0 : i32
    %c0_i32_1 = arith.constant 0 : i32
    return %c0_i32, %c0_i32_0 : i32, i32
  }
  func.func @transform_2(%arg0: i32, %arg1: i32) -> (i32, i32) {
    %c0_i32 = arith.constant 0 : i32
    %c0_i32_0 = arith.constant 0 : i32
    %c0_i32_1 = arith.constant 0 : i32
    return %c0_i32, %c0_i32_0 : i32, i32
  }
  func.func @transform_3(%arg0: i32, %arg1: i32) -> (i32, i32) {
    %c0_i32 = arith.constant 0 : i32
    %c0_i32_0 = arith.constant 0 : i32
    return %c0_i32, %arg0 : i32, i32
  }
  func.func @transform_4(%arg0: i32, %arg1: i32) -> (i32, i32) {
    %c0_i32 = arith.constant 0 : i32
    %c0_i32_0 = arith.constant 0 : i32
    return %c0_i32, %arg0 : i32, i32
  }
  func.func @transform_5(%arg0: i32, %arg1: i32) -> (i32, i32) {
    %c0_i32 = arith.constant 0 : i32
    return %arg1, %arg0 : i32, i32
  }
}

module attributes {stable_mosaic.version = 11 : i64} {
  func.func @_self_attn_kernel(%arg0: i32, %arg1: memref<1x16x96xbf16, #tpu.memory_space<vmem>>, %arg2: memref<1x16x32xbf16, #tpu.memory_space<vmem>>) attributes {dimension_semantics = [#tpu.dimension_semantics<parallel>], iteration_bounds = array<i64: 2>, scalar_prefetch = 0 : i64, scratch_operands = 0 : i64, tpu.core_type = #tpu.core_type<tc>, window_params = [{transform_indices = @transform_0, window_bounds = array<i64: 1, 16, 96>}, {transform_indices = @transform_1, window_bounds = array<i64: 1, 16, 32>}]} {
    %c0 = arith.constant 0 : index
    %c0_0 = arith.constant 0 : index
    %c0_1 = arith.constant 0 : index
    %0 = vector.load %arg1[%c0, %c0_0, %c0_1] : memref<1x16x96xbf16, #tpu.memory_space<vmem>>, vector<1x16x96xbf16>
    %1 = vector.shape_cast %0 : vector<1x16x96xbf16> to vector<16x96xbf16>
    %2 = vector.extract_strided_slice %1 {offsets = [0, 0], sizes = [16, 32], strides = [1, 1]} : vector<16x96xbf16> to vector<16x32xbf16>
    %cst = arith.constant 3.535160e-01 : bf16
    %3 = vector.broadcast %cst : bf16 to vector<16x32xbf16>
    %4 = arith.mulf %2, %3 : vector<16x32xbf16>
    %5 = vector.extract_strided_slice %1 {offsets = [0, 32], sizes = [16, 32], strides = [1, 1]} : vector<16x96xbf16> to vector<16x32xbf16>
    %6 = vector.extract_strided_slice %1 {offsets = [0, 64], sizes = [16, 32], strides = [1, 1]} : vector<16x96xbf16> to vector<16x32xbf16>
    %7 = vector.extract_strided_slice %4 {offsets = [0, 0], sizes = [16, 8], strides = [1, 1]} : vector<16x32xbf16> to vector<16x8xbf16>
    %8 = vector.extract_strided_slice %5 {offsets = [0, 0], sizes = [16, 8], strides = [1, 1]} : vector<16x32xbf16> to vector<16x8xbf16>
    %9 = vector.extract_strided_slice %6 {offsets = [0, 0], sizes = [16, 8], strides = [1, 1]} : vector<16x32xbf16> to vector<16x8xbf16>
    %cst_2 = arith.constant dense<0.000000e+00> : vector<16x16xf32>
    %10 = tpu.matmul %7, %8, %cst_2 {dimension_numbers = #tpu.dot_dimension_numbers<[1], [1], [0], [0], [0, 0, 1, 0], [], []>} : vector<16x8xbf16>, vector<16x8xbf16>, vector<16x16xf32> -> vector<16x16xf32>
    %cst_3 = arith.constant dense<0xFF800000> : vector<16xf32>
    %11 = vector.multi_reduction <maximumf>, %10, %cst_3 [1] : vector<16x16xf32> to vector<16xf32>
    %12 = vector.shape_cast %11 : vector<16xf32> to vector<16x1xf32>
    %13 = vector.broadcast %12 : vector<16x1xf32> to vector<16x16xf32>
    %14 = arith.subf %10, %13 : vector<16x16xf32>
    %15 = math.exp %14 : vector<16x16xf32>
    %cst_4 = arith.constant dense<0.000000e+00> : vector<16xf32>
    %16 = vector.multi_reduction <add>, %15, %cst_4 [1] : vector<16x16xf32> to vector<16xf32>
    %17 = vector.shape_cast %16 : vector<16xf32> to vector<16x1xf32>
    %18 = tpu.reciprocal %17 {approx = true} : vector<16x1xf32> -> vector<16x1xf32>
    %19 = vector.broadcast %18 : vector<16x1xf32> to vector<16x16xf32>
    %20 = arith.mulf %15, %19 : vector<16x16xf32>
    %21 = arith.truncf %20 : vector<16x16xf32> to vector<16x16xbf16>
    %cst_5 = arith.constant dense<0.000000e+00> : vector<16x8xf32>
    %22 = tpu.matmul %21, %9, %cst_5 {dimension_numbers = #tpu.dot_dimension_numbers<[1], [0], [0], [1], [0, 0, 1, 1], [], []>} : vector<16x16xbf16>, vector<16x8xbf16>, vector<16x8xf32> -> vector<16x8xf32>
    %23 = arith.truncf %22 : vector<16x8xf32> to vector<16x8xbf16>
    %c0_6 = arith.constant 0 : index
    %c0_7 = arith.constant 0 : index
    %c0_8 = arith.constant 0 : index
    %24 = vector.load %arg2[%c0_6, %c0_7, %c0_8] : memref<1x16x32xbf16, #tpu.memory_space<vmem>>, vector<1x16x8xbf16>
    %25 = vector.shape_cast %24 : vector<1x16x8xbf16> to vector<16x8xbf16>
    %26 = vector.shape_cast %23 : vector<16x8xbf16> to vector<1x16x8xbf16>
    tpu.vector_store %arg2[%c0_6, %c0_7, %c0_8], %26 {strides = array<i32>} : memref<1x16x32xbf16, #tpu.memory_space<vmem>>, vector<1x16x8xbf16>,
    %27 = vector.extract_strided_slice %4 {offsets = [0, 8], sizes = [16, 8], strides = [1, 1]} : vector<16x32xbf16> to vector<16x8xbf16>
    %28 = vector.extract_strided_slice %5 {offsets = [0, 8], sizes = [16, 8], strides = [1, 1]} : vector<16x32xbf16> to vector<16x8xbf16>
    %29 = vector.extract_strided_slice %6 {offsets = [0, 8], sizes = [16, 8], strides = [1, 1]} : vector<16x32xbf16> to vector<16x8xbf16>
    %cst_9 = arith.constant dense<0.000000e+00> : vector<16x16xf32>
    %30 = tpu.matmul %27, %28, %cst_9 {dimension_numbers = #tpu.dot_dimension_numbers<[1], [1], [0], [0], [0, 0, 1, 0], [], []>} : vector<16x8xbf16>, vector<16x8xbf16>, vector<16x16xf32> -> vector<16x16xf32>
    %cst_10 = arith.constant dense<0xFF800000> : vector<16xf32>
    %31 = vector.multi_reduction <maximumf>, %30, %cst_10 [1] : vector<16x16xf32> to vector<16xf32>
    %32 = vector.shape_cast %31 : vector<16xf32> to vector<16x1xf32>
    %33 = vector.broadcast %32 : vector<16x1xf32> to vector<16x16xf32>
    %34 = arith.subf %30, %33 : vector<16x16xf32>
    %35 = math.exp %34 : vector<16x16xf32>
    %cst_11 = arith.constant dense<0.000000e+00> : vector<16xf32>
    %36 = vector.multi_reduction <add>, %35, %cst_11 [1] : vector<16x16xf32> to vector<16xf32>
    %37 = vector.shape_cast %36 : vector<16xf32> to vector<16x1xf32>
    %38 = tpu.reciprocal %37 {approx = true} : vector<16x1xf32> -> vector<16x1xf32>
    %39 = vector.broadcast %38 : vector<16x1xf32> to vector<16x16xf32>
    %40 = arith.mulf %35, %39 : vector<16x16xf32>
    %41 = arith.truncf %40 : vector<16x16xf32> to vector<16x16xbf16>
    %cst_12 = arith.constant dense<0.000000e+00> : vector<16x8xf32>
    %42 = tpu.matmul %41, %29, %cst_12 {dimension_numbers = #tpu.dot_dimension_numbers<[1], [0], [0], [1], [0, 0, 1, 1], [], []>} : vector<16x16xbf16>, vector<16x8xbf16>, vector<16x8xf32> -> vector<16x8xf32>
    %43 = arith.truncf %42 : vector<16x8xf32> to vector<16x8xbf16>
    %c0_13 = arith.constant 0 : index
    %c0_14 = arith.constant 0 : index
    %c8 = arith.constant 8 : index
    %44 = vector.load %arg2[%c0_13, %c0_14, %c8] : memref<1x16x32xbf16, #tpu.memory_space<vmem>>, vector<1x16x8xbf16>
    %45 = vector.shape_cast %44 : vector<1x16x8xbf16> to vector<16x8xbf16>
    %46 = vector.shape_cast %43 : vector<16x8xbf16> to vector<1x16x8xbf16>
    tpu.vector_store %arg2[%c0_13, %c0_14, %c8], %46 {strides = array<i32>} : memref<1x16x32xbf16, #tpu.memory_space<vmem>>, vector<1x16x8xbf16>,
    %47 = vector.extract_strided_slice %4 {offsets = [0, 16], sizes = [16, 8], strides = [1, 1]} : vector<16x32xbf16> to vector<16x8xbf16>
    %48 = vector.extract_strided_slice %5 {offsets = [0, 16], sizes = [16, 8], strides = [1, 1]} : vector<16x32xbf16> to vector<16x8xbf16>
    %49 = vector.extract_strided_slice %6 {offsets = [0, 16], sizes = [16, 8], strides = [1, 1]} : vector<16x32xbf16> to vector<16x8xbf16>
    %cst_15 = arith.constant dense<0.000000e+00> : vector<16x16xf32>
    %50 = tpu.matmul %47, %48, %cst_15 {dimension_numbers = #tpu.dot_dimension_numbers<[1], [1], [0], [0], [0, 0, 1, 0], [], []>} : vector<16x8xbf16>, vector<16x8xbf16>, vector<16x16xf32> -> vector<16x16xf32>
    %cst_16 = arith.constant dense<0xFF800000> : vector<16xf32>
    %51 = vector.multi_reduction <maximumf>, %50, %cst_16 [1] : vector<16x16xf32> to vector<16xf32>
    %52 = vector.shape_cast %51 : vector<16xf32> to vector<16x1xf32>
    %53 = vector.broadcast %52 : vector<16x1xf32> to vector<16x16xf32>
    %54 = arith.subf %50, %53 : vector<16x16xf32>
    %55 = math.exp %54 : vector<16x16xf32>
    %cst_17 = arith.constant dense<0.000000e+00> : vector<16xf32>
    %56 = vector.multi_reduction <add>, %55, %cst_17 [1] : vector<16x16xf32> to vector<16xf32>
    %57 = vector.shape_cast %56 : vector<16xf32> to vector<16x1xf32>
    %58 = tpu.reciprocal %57 {approx = true} : vector<16x1xf32> -> vector<16x1xf32>
    %59 = vector.broadcast %58 : vector<16x1xf32> to vector<16x16xf32>
    %60 = arith.mulf %55, %59 : vector<16x16xf32>
    %61 = arith.truncf %60 : vector<16x16xf32> to vector<16x16xbf16>
    %cst_18 = arith.constant dense<0.000000e+00> : vector<16x8xf32>
    %62 = tpu.matmul %61, %49, %cst_18 {dimension_numbers = #tpu.dot_dimension_numbers<[1], [0], [0], [1], [0, 0, 1, 1], [], []>} : vector<16x16xbf16>, vector<16x8xbf16>, vector<16x8xf32> -> vector<16x8xf32>
    %63 = arith.truncf %62 : vector<16x8xf32> to vector<16x8xbf16>
    %c0_19 = arith.constant 0 : index
    %c0_20 = arith.constant 0 : index
    %c16 = arith.constant 16 : index
    %64 = vector.load %arg2[%c0_19, %c0_20, %c16] : memref<1x16x32xbf16, #tpu.memory_space<vmem>>, vector<1x16x8xbf16>
    %65 = vector.shape_cast %64 : vector<1x16x8xbf16> to vector<16x8xbf16>
    %66 = vector.shape_cast %63 : vector<16x8xbf16> to vector<1x16x8xbf16>
    tpu.vector_store %arg2[%c0_19, %c0_20, %c16], %66 {strides = array<i32>} : memref<1x16x32xbf16, #tpu.memory_space<vmem>>, vector<1x16x8xbf16>,
    %67 = vector.extract_strided_slice %4 {offsets = [0, 24], sizes = [16, 8], strides = [1, 1]} : vector<16x32xbf16> to vector<16x8xbf16>
    %68 = vector.extract_strided_slice %5 {offsets = [0, 24], sizes = [16, 8], strides = [1, 1]} : vector<16x32xbf16> to vector<16x8xbf16>
    %69 = vector.extract_strided_slice %6 {offsets = [0, 24], sizes = [16, 8], strides = [1, 1]} : vector<16x32xbf16> to vector<16x8xbf16>
    %cst_21 = arith.constant dense<0.000000e+00> : vector<16x16xf32>
    %70 = tpu.matmul %67, %68, %cst_21 {dimension_numbers = #tpu.dot_dimension_numbers<[1], [1], [0], [0], [0, 0, 1, 0], [], []>} : vector<16x8xbf16>, vector<16x8xbf16>, vector<16x16xf32> -> vector<16x16xf32>
    %cst_22 = arith.constant dense<0xFF800000> : vector<16xf32>
    %71 = vector.multi_reduction <maximumf>, %70, %cst_22 [1] : vector<16x16xf32> to vector<16xf32>
    %72 = vector.shape_cast %71 : vector<16xf32> to vector<16x1xf32>
    %73 = vector.broadcast %72 : vector<16x1xf32> to vector<16x16xf32>
    %74 = arith.subf %70, %73 : vector<16x16xf32>
    %75 = math.exp %74 : vector<16x16xf32>
    %cst_23 = arith.constant dense<0.000000e+00> : vector<16xf32>
    %76 = vector.multi_reduction <add>, %75, %cst_23 [1] : vector<16x16xf32> to vector<16xf32>
    %77 = vector.shape_cast %76 : vector<16xf32> to vector<16x1xf32>
    %78 = tpu.reciprocal %77 {approx = true} : vector<16x1xf32> -> vector<16x1xf32>
    %79 = vector.broadcast %78 : vector<16x1xf32> to vector<16x16xf32>
    %80 = arith.mulf %75, %79 : vector<16x16xf32>
    %81 = arith.truncf %80 : vector<16x16xf32> to vector<16x16xbf16>
    %cst_24 = arith.constant dense<0.000000e+00> : vector<16x8xf32>
    %82 = tpu.matmul %81, %69, %cst_24 {dimension_numbers = #tpu.dot_dimension_numbers<[1], [0], [0], [1], [0, 0, 1, 1], [], []>} : vector<16x16xbf16>, vector<16x8xbf16>, vector<16x8xf32> -> vector<16x8xf32>
    %83 = arith.truncf %82 : vector<16x8xf32> to vector<16x8xbf16>
    %c0_25 = arith.constant 0 : index
    %c0_26 = arith.constant 0 : index
    %c24 = arith.constant 24 : index
    %84 = vector.load %arg2[%c0_25, %c0_26, %c24] : memref<1x16x32xbf16, #tpu.memory_space<vmem>>, vector<1x16x8xbf16>
    %85 = vector.shape_cast %84 : vector<1x16x8xbf16> to vector<16x8xbf16>
    %86 = vector.shape_cast %83 : vector<16x8xbf16> to vector<1x16x8xbf16>
    tpu.vector_store %arg2[%c0_25, %c0_26, %c24], %86 {strides = array<i32>} : memref<1x16x32xbf16, #tpu.memory_space<vmem>>, vector<1x16x8xbf16>,
    return
  }
  func.func @transform_0(%arg0: i32) -> (i32, i32, i32) {
    %c0_i32 = arith.constant 0 : i32
    %c0_i32_0 = arith.constant 0 : i32
    %c0_i32_1 = arith.constant 0 : i32
    return %arg0, %c0_i32, %c0_i32_0 : i32, i32, i32
  }
  func.func @transform_1(%arg0: i32) -> (i32, i32, i32) {
    %c0_i32 = arith.constant 0 : i32
    %c0_i32_0 = arith.constant 0 : i32
    %c0_i32_1 = arith.constant 0 : i32
    return %arg0, %c0_i32, %c0_i32_0 : i32, i32, i32
  }
}

module attributes {stable_mosaic.version = 11 : i64} {
  func.func @_fused_linear_kernel(%arg0: i32, %arg1: i32, %arg2: memref<32x32xbf16, #tpu.memory_space<vmem>>, %arg3: memref<1x32xf32, #tpu.memory_space<vmem>>, %arg4: memref<1x32xf32, #tpu.memory_space<vmem>>, %arg5: memref<32x32xbf16, #tpu.memory_space<vmem>>, %arg6: memref<1x32xf32, #tpu.memory_space<vmem>>, %arg7: memref<32x32xbf16, #tpu.memory_space<vmem>>) attributes {dimension_semantics = [#tpu.dimension_semantics<parallel>, #tpu.dimension_semantics<parallel>], iteration_bounds = array<i64: 1, 1>, scalar_prefetch = 0 : i64, scratch_operands = 0 : i64, tpu.core_type = #tpu.core_type<tc>, window_params = [{transform_indices = @transform_0, window_bounds = array<i64: 32, 32>}, {pipeline_mode = #tpu.pipeline_mode<synchronous>, transform_indices = @transform_1, window_bounds = array<i64: 1, 32>}, {pipeline_mode = #tpu.pipeline_mode<synchronous>, transform_indices = @transform_2, window_bounds = array<i64: 1, 32>}, {transform_indices = @transform_3, window_bounds = array<i64: 32, 32>}, {transform_indices = @transform_4, window_bounds = array<i64: 1, 32>}, {transform_indices = @transform_5, window_bounds = array<i64: 32, 32>}]} {
    %c0 = arith.constant 0 : index
    %c0_0 = arith.constant 0 : index
    %0 = vector.load %arg2[%c0, %c0_0] : memref<32x32xbf16, #tpu.memory_space<vmem>>, vector<32x32xbf16>
    %1 = arith.extf %0 : vector<32x32xbf16> to vector<32x32xf32>
    %cst = arith.constant dense<0.000000e+00> : vector<32xf32>
    %2 = vector.multi_reduction <add>, %1, %cst [1] : vector<32x32xf32> to vector<32xf32>
    %3 = vector.shape_cast %2 : vector<32xf32> to vector<32x1xf32>
    %cst_1 = arith.constant 3.200000e+01 : f32
    %4 = vector.broadcast %cst_1 : f32 to vector<32x1xf32>
    %5 = arith.divf %3, %4 : vector<32x1xf32>
    %6 = vector.broadcast %5 : vector<32x1xf32> to vector<32x32xf32>
    %7 = arith.subf %1, %6 : vector<32x32xf32>
    %8 = arith.mulf %7, %7 : vector<32x32xf32>
    %cst_2 = arith.constant dense<0.000000e+00> : vector<32xf32>
    %9 = vector.multi_reduction <add>, %8, %cst_2 [1] : vector<32x32xf32> to vector<32xf32>
    %10 = vector.shape_cast %9 : vector<32xf32> to vector<32x1xf32>
    %cst_3 = arith.constant 3.200000e+01 : f32
    %11 = vector.broadcast %cst_3 : f32 to vector<32x1xf32>
    %12 = arith.divf %10, %11 : vector<32x1xf32>
    %13 = vector.broadcast %5 : vector<32x1xf32> to vector<32x32xf32>
    %14 = arith.subf %1, %13 : vector<32x32xf32>
    %cst_4 = arith.constant 9.99999974E-6 : f32
    %15 = vector.broadcast %cst_4 : f32 to vector<32x1xf32>
    %16 = arith.addf %12, %15 : vector<32x1xf32>
    %17 = math.rsqrt %16 : vector<32x1xf32>
    %18 = vector.broadcast %17 : vector<32x1xf32> to vector<32x32xf32>
    %19 = arith.mulf %14, %18 : vector<32x32xf32>
    %c0_5 = arith.constant 0 : index
    %c0_6 = arith.constant 0 : index
    %20 = vector.load %arg3[%c0_5, %c0_6] : memref<1x32xf32, #tpu.memory_space<vmem>>, vector<1x32xf32>
    %21 = vector.broadcast %20 : vector<1x32xf32> to vector<32x32xf32>
    %22 = arith.mulf %19, %21 : vector<32x32xf32>
    %c0_7 = arith.constant 0 : index
    %c0_8 = arith.constant 0 : index
    %23 = vector.load %arg4[%c0_7, %c0_8] : memref<1x32xf32, #tpu.memory_space<vmem>>, vector<1x32xf32>
    %24 = vector.broadcast %23 : vector<1x32xf32> to vector<32x32xf32>
    %25 = arith.addf %22, %24 : vector<32x32xf32>
    %26 = arith.truncf %25 : vector<32x32xf32> to vector<32x32xbf16>
    %c0_9 = arith.constant 0 : index
    %c0_10 = arith.constant 0 : index
    %27 = vector.load %arg5[%c0_9, %c0_10] : memref<32x32xbf16, #tpu.memory_space<vmem>>, vector<32x32xbf16>
    %cst_11 = arith.constant dense<0.000000e+00> : vector<32x32xf32>
    %28 = tpu.matmul %26, %27, %cst_11 {dimension_numbers = #tpu.dot_dimension_numbers<[1], [0], [0], [1], [0, 0, 1, 1], [], []>} : vector<32x32xbf16>, vector<32x32xbf16>, vector<32x32xf32> -> vector<32x32xf32>
    %c0_12 = arith.constant 0 : index
    %c0_13 = arith.constant 0 : index
    %29 = vector.load %arg6[%c0_12, %c0_13] : memref<1x32xf32, #tpu.memory_space<vmem>>, vector<1x32xf32>
    %30 = vector.broadcast %29 : vector<1x32xf32> to vector<32x32xf32>
    %31 = arith.addf %28, %30 : vector<32x32xf32>
    %32 = arith.truncf %31 : vector<32x32xf32> to vector<32x32xbf16>
    %c0_14 = arith.constant 0 : index
    %c0_15 = arith.constant 0 : index
    %33 = vector.load %arg7[%c0_14, %c0_15] : memref<32x32xbf16, #tpu.memory_space<vmem>>, vector<32x32xbf16>
    tpu.vector_store %arg7[%c0_14, %c0_15], %32 {strides = array<i32>} : memref<32x32xbf16, #tpu.memory_space<vmem>>, vector<32x32xbf16>,
    return
  }
  func.func @transform_0(%arg0: i32, %arg1: i32) -> (i32, i32) {
    %c0_i32 = arith.constant 0 : i32
    %c0_i32_0 = arith.constant 0 : i32
    return %arg1, %c0_i32 : i32, i32
  }
  func.func @transform_1(%arg0: i32, %arg1: i32) -> (i32, i32) {
    %c0_i32 = arith.constant 0 : i32
    %c0_i32_0 = arith.constant 0 : i32
    %c0_i32_1 = arith.constant 0 : i32
    return %c0_i32, %c0_i32_0 : i32, i32
  }
  func.func @transform_2(%arg0: i32, %arg1: i32) -> (i32, i32) {
    %c0_i32 = arith.constant 0 : i32
    %c0_i32_0 = arith.constant 0 : i32
    %c0_i32_1 = arith.constant 0 : i32
    return %c0_i32, %c0_i32_0 : i32, i32
  }
  func.func @transform_3(%arg0: i32, %arg1: i32) -> (i32, i32) {
    %c0_i32 = arith.constant 0 : i32
    %c0_i32_0 = arith.constant 0 : i32
    return %c0_i32, %arg0 : i32, i32
  }
  func.func @transform_4(%arg0: i32, %arg1: i32) -> (i32, i32) {
    %c0_i32 = arith.constant 0 : i32
    %c0_i32_0 = arith.constant 0 : i32
    return %c0_i32, %arg0 : i32, i32
  }
  func.func @transform_5(%arg0: i32, %arg1: i32) -> (i32, i32) {
    %c0_i32 = arith.constant 0 : i32
    return %arg1, %arg0 : i32, i32
  }
}

module attributes {stable_mosaic.version = 11 : i64} {
  func.func @_fused_linear_kernel(%arg0: i32, %arg1: i32, %arg2: memref<16x32xbf16, #tpu.memory_space<vmem>>, %arg3: memref<32x64xbf16, #tpu.memory_space<vmem>>, %arg4: memref<1x64xf32, #tpu.memory_space<vmem>>, %arg5: memref<16x64xbf16, #tpu.memory_space<vmem>>) attributes {dimension_semantics = [#tpu.dimension_semantics<parallel>, #tpu.dimension_semantics<parallel>], iteration_bounds = array<i64: 1, 1>, scalar_prefetch = 0 : i64, scratch_operands = 0 : i64, tpu.core_type = #tpu.core_type<tc>, window_params = [{transform_indices = @transform_0, window_bounds = array<i64: 16, 32>}, {transform_indices = @transform_1, window_bounds = array<i64: 32, 64>}, {transform_indices = @transform_2, window_bounds = array<i64: 1, 64>}, {transform_indices = @transform_3, window_bounds = array<i64: 16, 64>}]} {
    %c0 = arith.constant 0 : index
    %c0_0 = arith.constant 0 : index
    %0 = vector.load %arg2[%c0, %c0_0] : memref<16x32xbf16, #tpu.memory_space<vmem>>, vector<16x32xbf16>
    %c0_1 = arith.constant 0 : index
    %c0_2 = arith.constant 0 : index
    %1 = vector.load %arg3[%c0_1, %c0_2] : memref<32x64xbf16, #tpu.memory_space<vmem>>, vector<32x64xbf16>
    %cst = arith.constant dense<0.000000e+00> : vector<16x64xf32>
    %2 = tpu.matmul %0, %1, %cst {dimension_numbers = #tpu.dot_dimension_numbers<[1], [0], [0], [1], [0, 0, 1, 1], [], []>} : vector<16x32xbf16>, vector<32x64xbf16>, vector<16x64xf32> -> vector<16x64xf32>
    %c0_3 = arith.constant 0 : index
    %c0_4 = arith.constant 0 : index
    %3 = vector.load %arg4[%c0_3, %c0_4] : memref<1x64xf32, #tpu.memory_space<vmem>>, vector<1x64xf32>
    %4 = vector.broadcast %3 : vector<1x64xf32> to vector<16x64xf32>
    %5 = arith.addf %2, %4 : vector<16x64xf32>
    %6 = arith.truncf %5 : vector<16x64xf32> to vector<16x64xbf16>
    %c0_5 = arith.constant 0 : index
    %c0_6 = arith.constant 0 : index
    %7 = vector.load %arg5[%c0_5, %c0_6] : memref<16x64xbf16, #tpu.memory_space<vmem>>, vector<16x64xbf16>
    tpu.vector_store %arg5[%c0_5, %c0_6], %6 {strides = array<i32>} : memref<16x64xbf16, #tpu.memory_space<vmem>>, vector<16x64xbf16>,
    return
  }
  func.func @transform_0(%arg0: i32, %arg1: i32) -> (i32, i32) {
    %c0_i32 = arith.constant 0 : i32
    %c0_i32_0 = arith.constant 0 : i32
    return %arg1, %c0_i32 : i32, i32
  }
  func.func @transform_1(%arg0: i32, %arg1: i32) -> (i32, i32) {
    %c0_i32 = arith.constant 0 : i32
    %c0_i32_0 = arith.constant 0 : i32
    return %c0_i32, %arg0 : i32, i32
  }
  func.func @transform_2(%arg0: i32, %arg1: i32) -> (i32, i32) {
    %c0_i32 = arith.constant 0 : i32
    %c0_i32_0 = arith.constant 0 : i32
    return %c0_i32, %arg0 : i32, i32
  }
  func.func @transform_3(%arg0: i32, %arg1: i32) -> (i32, i32) {
    %c0_i32 = arith.constant 0 : i32
    return %arg1, %arg0 : i32, i32
  }
}

module attributes {stable_mosaic.version = 11 : i64} {
  func.func @_ln_ffn_kernel(%arg0: i32, %arg1: i32, %arg2: memref<32x32xbf16, #tpu.memory_space<vmem>>, %arg3: memref<1x32xf32, #tpu.memory_space<vmem>>, %arg4: memref<1x32xf32, #tpu.memory_space<vmem>>, %arg5: memref<32x128xbf16, #tpu.memory_space<vmem>>, %arg6: memref<1x128xf32, #tpu.memory_space<vmem>>, %arg7: memref<128x32xbf16, #tpu.memory_space<vmem>>, %arg8: memref<1x32xf32, #tpu.memory_space<vmem>>, %arg9: memref<32x32xbf16, #tpu.memory_space<vmem>>, %arg10: memref<32x32xbf16, #tpu.memory_space<vmem>>, %arg11: memref<32x32xf32, #tpu.memory_space<vmem>>) attributes {dimension_semantics = [#tpu.dimension_semantics<parallel>, #tpu.dimension_semantics<arbitrary>], iteration_bounds = array<i64: 1, 1>, scalar_prefetch = 0 : i64, scratch_operands = 1 : i64, tpu.core_type = #tpu.core_type<tc>, window_params = [{transform_indices = @transform_0, window_bounds = array<i64: 32, 32>}, {pipeline_mode = #tpu.pipeline_mode<synchronous>, transform_indices = @transform_1, window_bounds = array<i64: 1, 32>}, {pipeline_mode = #tpu.pipeline_mode<synchronous>, transform_indices = @transform_2, window_bounds = array<i64: 1, 32>}, {transform_indices = @transform_3, window_bounds = array<i64: 32, 128>}, {transform_indices = @transform_4, window_bounds = array<i64: 1, 128>}, {transform_indices = @transform_5, window_bounds = array<i64: 128, 32>}, {pipeline_mode = #tpu.pipeline_mode<synchronous>, transform_indices = @transform_6, window_bounds = array<i64: 1, 32>}, {transform_indices = @transform_7, window_bounds = array<i64: 32, 32>}, {transform_indices = @transform_8, window_bounds = array<i64: 32, 32>}]} {
    %c0_i32 = arith.constant 0 : i32
    %0 = arith.cmpi eq, %arg1, %c0_i32 : i32
    %1 = arith.extui %0 : i1 to i32
    %c0_i32_0 = arith.constant 0 : i32
    %2 = arith.cmpi ne, %1, %c0_i32_0 : i32
    scf.if %2 {
      %cst_28 = arith.constant 0.000000e+00 : f32
      %57 = vector.broadcast %cst_28 : f32 to vector<32x32xf32>
      %c0_29 = arith.constant 0 : index
      %c0_30 = arith.constant 0 : index
      %58 = vector.load %arg11[%c0_29, %c0_30] : memref<32x32xf32, #tpu.memory_space<vmem>>, vector<32x32xf32>
      tpu.vector_store %arg11[%c0_29, %c0_30], %57 {strides = array<i32>} : memref<32x32xf32, #tpu.memory_space<vmem>>, vector<32x32xf32>,
    } else {
    }
    %c0 = arith.constant 0 : index
    %c0_1 = arith.constant 0 : index
    %3 = vector.load %arg2[%c0, %c0_1] : memref<32x32xbf16, #tpu.memory_space<vmem>>, vector<32x32xbf16>
    %4 = arith.extf %3 : vector<32x32xbf16> to vector<32x32xf32>
    %cst = arith.constant dense<0.000000e+00> : vector<32xf32>
    %5 = vector.multi_reduction <add>, %4, %cst [1] : vector<32x32xf32> to vector<32xf32>
    %6 = vector.shape_cast %5 : vector<32xf32> to vector<32x1xf32>
    %cst_2 = arith.constant 3.200000e+01 : f32
    %7 = vector.broadcast %cst_2 : f32 to vector<32x1xf32>
    %8 = arith.divf %6, %7 : vector<32x1xf32>
    %9 = vector.broadcast %8 : vector<32x1xf32> to vector<32x32xf32>
    %10 = arith.subf %4, %9 : vector<32x32xf32>
    %11 = arith.mulf %10, %10 : vector<32x32xf32>
    %cst_3 = arith.constant dense<0.000000e+00> : vector<32xf32>
    %12 = vector.multi_reduction <add>, %11, %cst_3 [1] : vector<32x32xf32> to vector<32xf32>
    %13 = vector.shape_cast %12 : vector<32xf32> to vector<32x1xf32>
    %cst_4 = arith.constant 3.200000e+01 : f32
    %14 = vector.broadcast %cst_4 : f32 to vector<32x1xf32>
    %15 = arith.divf %13, %14 : vector<32x1xf32>
    %16 = vector.broadcast %8 : vector<32x1xf32> to vector<32x32xf32>
    %17 = arith.subf %4, %16 : vector<32x32xf32>
    %cst_5 = arith.constant 9.99999974E-6 : f32
    %18 = vector.broadcast %cst_5 : f32 to vector<32x1xf32>
    %19 = arith.addf %15, %18 : vector<32x1xf32>
    %20 = math.rsqrt %19 : vector<32x1xf32>
    %21 = vector.broadcast %20 : vector<32x1xf32> to vector<32x32xf32>
    %22 = arith.mulf %17, %21 : vector<32x32xf32>
    %c0_6 = arith.constant 0 : index
    %c0_7 = arith.constant 0 : index
    %23 = vector.load %arg3[%c0_6, %c0_7] : memref<1x32xf32, #tpu.memory_space<vmem>>, vector<1x32xf32>
    %24 = vector.broadcast %23 : vector<1x32xf32> to vector<32x32xf32>
    %25 = arith.mulf %22, %24 : vector<32x32xf32>
    %c0_8 = arith.constant 0 : index
    %c0_9 = arith.constant 0 : index
    %26 = vector.load %arg4[%c0_8, %c0_9] : memref<1x32xf32, #tpu.memory_space<vmem>>, vector<1x32xf32>
    %27 = vector.broadcast %26 : vector<1x32xf32> to vector<32x32xf32>
    %28 = arith.addf %25, %27 : vector<32x32xf32>
    %29 = arith.truncf %28 : vector<32x32xf32> to vector<32x32xbf16>
    %c0_10 = arith.constant 0 : index
    %c0_11 = arith.constant 0 : index
    %30 = vector.load %arg5[%c0_10, %c0_11] : memref<32x128xbf16, #tpu.memory_space<vmem>>, vector<32x128xbf16>
    %cst_12 = arith.constant dense<0.000000e+00> : vector<32x128xf32>
    %31 = tpu.matmul %29, %30, %cst_12 {dimension_numbers = #tpu.dot_dimension_numbers<[1], [0], [0], [1], [0, 0, 1, 1], [], []>} : vector<32x32xbf16>, vector<32x128xbf16>, vector<32x128xf32> -> vector<32x128xf32>
    %c0_13 = arith.constant 0 : index
    %c0_14 = arith.constant 0 : index
    %32 = vector.load %arg6[%c0_13, %c0_14] : memref<1x128xf32, #tpu.memory_space<vmem>>, vector<1x128xf32>
    %33 = vector.broadcast %32 : vector<1x128xf32> to vector<32x128xf32>
    %34 = arith.addf %31, %33 : vector<32x128xf32>
    %35 = arith.mulf %34, %34 : vector<32x128xf32>
    %36 = arith.mulf %34, %35 : vector<32x128xf32>
    %cst_15 = arith.constant 4.471500e-02 : f32
    %37 = vector.broadcast %cst_15 : f32 to vector<32x128xf32>
    %38 = arith.mulf %37, %36 : vector<32x128xf32>
    %39 = arith.addf %34, %38 : vector<32x128xf32>
    %cst_16 = arith.constant 0.797884583 : f32
    %40 = vector.broadcast %cst_16 : f32 to vector<32x128xf32>
    %41 = arith.mulf %40, %39 : vector<32x128xf32>
    %42 = math.tanh %41 : vector<32x128xf32>
    %cst_17 = arith.constant 1.000000e+00 : f32
    %43 = vector.broadcast %cst_17 : f32 to vector<32x128xf32>
    %44 = arith.addf %43, %42 : vector<32x128xf32>
    %cst_18 = arith.constant 5.000000e-01 : f32
    %45 = vector.broadcast %cst_18 : f32 to vector<32x128xf32>
    %46 = arith.mulf %45, %44 : vector<32x128xf32>
    %47 = arith.mulf %34, %46 : vector<32x128xf32>
    %c0_19 = arith.constant 0 : index
    %c0_20 = arith.constant 0 : index
    %48 = vector.load %arg11[%c0_19, %c0_20] : memref<32x32xf32, #tpu.memory_space<vmem>>, vector<32x32xf32>
    %49 = arith.truncf %47 : vector<32x128xf32> to vector<32x128xbf16>
    %c0_21 = arith.constant 0 : index
    %c0_22 = arith.constant 0 : index
    %50 = vector.load %arg7[%c0_21, %c0_22] : memref<128x32xbf16, #tpu.memory_space<vmem>>, vector<128x32xbf16>
    %cst_23 = arith.constant dense<0.000000e+00> : vector<32x32xf32>
    %51 = tpu.matmul %49, %50, %cst_23 {dimension_numbers = #tpu.dot_dimension_numbers<[1], [0], [0], [1], [0, 0, 1, 1], [], []>} : vector<32x128xbf16>, vector<128x32xbf16>, vector<32x32xf32> -> vector<32x32xf32>
    %52 = arith.addf %48, %51 : vector<32x32xf32>
    %c0_24 = arith.constant 0 : index
    %c0_25 = arith.constant 0 : index
    %53 = vector.load %arg11[%c0_24, %c0_25] : memref<32x32xf32, #tpu.memory_space<vmem>>, vector<32x32xf32>
    tpu.vector_store %arg11[%c0_24, %c0_25], %52 {strides = array<i32>} : memref<32x32xf32, #tpu.memory_space<vmem>>, vector<32x32xf32>,
    %c0_i32_26 = arith.constant 0 : i32
    %54 = arith.cmpi eq, %arg1, %c0_i32_26 : i32
    %55 = arith.extui %54 : i1 to i32
    %c0_i32_27 = arith.constant 0 : i32
    %56 = arith.cmpi ne, %55, %c0_i32_27 : i32
    scf.if %56 {
      %c0_28 = arith.constant 0 : index
      %c0_29 = arith.constant 0 : index
      %57 = vector.load %arg11[%c0_28, %c0_29] : memref<32x32xf32, #tpu.memory_space<vmem>>, vector<32x32xf32>
      %c0_30 = arith.constant 0 : index
      %c0_31 = arith.constant 0 : index
      %58 = vector.load %arg8[%c0_30, %c0_31] : memref<1x32xf32, #tpu.memory_space<vmem>>, vector<1x32xf32>
      %59 = vector.broadcast %58 : vector<1x32xf32> to vector<32x32xf32>
      %60 = arith.addf %57, %59 : vector<32x32xf32>
      %c0_32 = arith.constant 0 : index
      %c0_33 = arith.constant 0 : index
      %61 = vector.load %arg9[%c0_32, %c0_33] : memref<32x32xbf16, #tpu.memory_space<vmem>>, vector<32x32xbf16>
      %62 = arith.extf %61 : vector<32x32xbf16> to vector<32x32xf32>
      %63 = arith.addf %60, %62 : vector<32x32xf32>
      %64 = arith.truncf %63 : vector<32x32xf32> to vector<32x32xbf16>
      %c0_34 = arith.constant 0 : index
      %c0_35 = arith.constant 0 : index
      %65 = vector.load %arg10[%c0_34, %c0_35] : memref<32x32xbf16, #tpu.memory_space<vmem>>, vector<32x32xbf16>
      tpu.vector_store %arg10[%c0_34, %c0_35], %64 {strides = array<i32>} : memref<32x32xbf16, #tpu.memory_space<vmem>>, vector<32x32xbf16>,
    } else {
    }
    return
  }
  func.func @transform_0(%arg0: i32, %arg1: i32) -> (i32, i32) {
    %c0_i32 = arith.constant 0 : i32
    %c0_i32_0 = arith.constant 0 : i32
    return %arg0, %c0_i32 : i32, i32
  }
  func.func @transform_1(%arg0: i32, %arg1: i32) -> (i32, i32) {
    %c0_i32 = arith.constant 0 : i32
    %c0_i32_0 = arith.constant 0 : i32
    %c0_i32_1 = arith.constant 0 : i32
    return %c0_i32, %c0_i32_0 : i32, i32
  }
  func.func @transform_2(%arg0: i32, %arg1: i32) -> (i32, i32) {
    %c0_i32 = arith.constant 0 : i32
    %c0_i32_0 = arith.constant 0 : i32
    %c0_i32_1 = arith.constant 0 : i32
    return %c0_i32, %c0_i32_0 : i32, i32
  }
  func.func @transform_3(%arg0: i32, %arg1: i32) -> (i32, i32) {
    %c0_i32 = arith.constant 0 : i32
    %c0_i32_0 = arith.constant 0 : i32
    return %c0_i32, %arg1 : i32, i32
  }
  func.func @transform_4(%arg0: i32, %arg1: i32) -> (i32, i32) {
    %c0_i32 = arith.constant 0 : i32
    %c0_i32_0 = arith.constant 0 : i32
    return %c0_i32, %arg1 : i32, i32
  }
  func.func @transform_5(%arg0: i32, %arg1: i32) -> (i32, i32) {
    %c0_i32 = arith.constant 0 : i32
    %c0_i32_0 = arith.constant 0 : i32
    return %arg1, %c0_i32 : i32, i32
  }
  func.func @transform_6(%arg0: i32, %arg1: i32) -> (i32, i32) {
    %c0_i32 = arith.constant 0 : i32
    %c0_i32_0 = arith.constant 0 : i32
    %c0_i32_1 = arith.constant 0 : i32
    return %c0_i32, %c0_i32_0 : i32, i32
  }
  func.func @transform_7(%arg0: i32, %arg1: i32) -> (i32, i32) {
    %c0_i32 = arith.constant 0 : i32
    %c0_i32_0 = arith.constant 0 : i32
    return %arg0, %c0_i32 : i32, i32
  }
  func.func @transform_8(%arg0: i32, %arg1: i32) -> (i32, i32) {
    %c0_i32 = arith.constant 0 : i32
    %c0_i32_0 = arith.constant 0 : i32
    return %arg0, %c0_i32 : i32, i32
  }
}

module attributes {stable_mosaic.version = 11 : i64} {
  func.func @_cross_attn_kernel(%arg0: i32, %arg1: memref<1x16x32xbf16, #tpu.memory_space<vmem>>, %arg2: memref<1x8x64xbf16, #tpu.memory_space<vmem>>, %arg3: memref<1x16x32xbf16, #tpu.memory_space<vmem>>) attributes {dimension_semantics = [#tpu.dimension_semantics<parallel>], iteration_bounds = array<i64: 2>, scalar_prefetch = 0 : i64, scratch_operands = 0 : i64, tpu.core_type = #tpu.core_type<tc>, window_params = [{transform_indices = @transform_0, window_bounds = array<i64: 1, 16, 32>}, {transform_indices = @transform_1, window_bounds = array<i64: 1, 8, 64>}, {transform_indices = @transform_2, window_bounds = array<i64: 1, 16, 32>}]} {
    %c0 = arith.constant 0 : index
    %c0_0 = arith.constant 0 : index
    %c0_1 = arith.constant 0 : index
    %0 = vector.load %arg1[%c0, %c0_0, %c0_1] : memref<1x16x32xbf16, #tpu.memory_space<vmem>>, vector<1x16x32xbf16>
    %1 = vector.shape_cast %0 : vector<1x16x32xbf16> to vector<16x32xbf16>
    %cst = arith.constant 3.535160e-01 : bf16
    %2 = vector.broadcast %cst : bf16 to vector<16x32xbf16>
    %3 = arith.mulf %1, %2 : vector<16x32xbf16>
    %c0_2 = arith.constant 0 : index
    %c0_3 = arith.constant 0 : index
    %c0_4 = arith.constant 0 : index
    %4 = vector.load %arg2[%c0_2, %c0_3, %c0_4] : memref<1x8x64xbf16, #tpu.memory_space<vmem>>, vector<1x8x64xbf16>
    %5 = vector.shape_cast %4 : vector<1x8x64xbf16> to vector<8x64xbf16>
    %6 = vector.extract_strided_slice %5 {offsets = [0, 0], sizes = [8, 32], strides = [1, 1]} : vector<8x64xbf16> to vector<8x32xbf16>
    %7 = vector.extract_strided_slice %5 {offsets = [0, 32], sizes = [8, 32], strides = [1, 1]} : vector<8x64xbf16> to vector<8x32xbf16>
    %8 = vector.extract_strided_slice %3 {offsets = [0, 0], sizes = [16, 8], strides = [1, 1]} : vector<16x32xbf16> to vector<16x8xbf16>
    %9 = vector.extract_strided_slice %6 {offsets = [0, 0], sizes = [8, 8], strides = [1, 1]} : vector<8x32xbf16> to vector<8x8xbf16>
    %10 = vector.extract_strided_slice %7 {offsets = [0, 0], sizes = [8, 8], strides = [1, 1]} : vector<8x32xbf16> to vector<8x8xbf16>
    %cst_5 = arith.constant dense<0.000000e+00> : vector<16x8xf32>
    %11 = tpu.matmul %8, %9, %cst_5 {dimension_numbers = #tpu.dot_dimension_numbers<[1], [1], [0], [0], [0, 0, 1, 0], [], []>} : vector<16x8xbf16>, vector<8x8xbf16>, vector<16x8xf32> -> vector<16x8xf32>
    %cst_6 = arith.constant dense<0xFF800000> : vector<16xf32>
    %12 = vector.multi_reduction <maximumf>, %11, %cst_6 [1] : vector<16x8xf32> to vector<16xf32>
    %13 = vector.shape_cast %12 : vector<16xf32> to vector<16x1xf32>
    %14 = vector.broadcast %13 : vector<16x1xf32> to vector<16x8xf32>
    %15 = arith.subf %11, %14 : vector<16x8xf32>
    %16 = math.exp %15 : vector<16x8xf32>
    %cst_7 = arith.constant dense<0.000000e+00> : vector<16xf32>
    %17 = vector.multi_reduction <add>, %16, %cst_7 [1] : vector<16x8xf32> to vector<16xf32>
    %18 = vector.shape_cast %17 : vector<16xf32> to vector<16x1xf32>
    %19 = tpu.reciprocal %18 {approx = true} : vector<16x1xf32> -> vector<16x1xf32>
    %20 = vector.broadcast %19 : vector<16x1xf32> to vector<16x8xf32>
    %21 = arith.mulf %16, %20 : vector<16x8xf32>
    %22 = arith.truncf %21 : vector<16x8xf32> to vector<16x8xbf16>
    %cst_8 = arith.constant dense<0.000000e+00> : vector<16x8xf32>
    %23 = tpu.matmul %22, %10, %cst_8 {dimension_numbers = #tpu.dot_dimension_numbers<[1], [0], [0], [1], [0, 0, 1, 1], [], []>} : vector<16x8xbf16>, vector<8x8xbf16>, vector<16x8xf32> -> vector<16x8xf32>
    %24 = arith.truncf %23 : vector<16x8xf32> to vector<16x8xbf16>
    %c0_9 = arith.constant 0 : index
    %c0_10 = arith.constant 0 : index
    %c0_11 = arith.constant 0 : index
    %25 = vector.load %arg3[%c0_9, %c0_10, %c0_11] : memref<1x16x32xbf16, #tpu.memory_space<vmem>>, vector<1x16x8xbf16>
    %26 = vector.shape_cast %25 : vector<1x16x8xbf16> to vector<16x8xbf16>
    %27 = vector.shape_cast %24 : vector<16x8xbf16> to vector<1x16x8xbf16>
    tpu.vector_store %arg3[%c0_9, %c0_10, %c0_11], %27 {strides = array<i32>} : memref<1x16x32xbf16, #tpu.memory_space<vmem>>, vector<1x16x8xbf16>,
    %28 = vector.extract_strided_slice %3 {offsets = [0, 8], sizes = [16, 8], strides = [1, 1]} : vector<16x32xbf16> to vector<16x8xbf16>
    %29 = vector.extract_strided_slice %6 {offsets = [0, 8], sizes = [8, 8], strides = [1, 1]} : vector<8x32xbf16> to vector<8x8xbf16>
    %30 = vector.extract_strided_slice %7 {offsets = [0, 8], sizes = [8, 8], strides = [1, 1]} : vector<8x32xbf16> to vector<8x8xbf16>
    %cst_12 = arith.constant dense<0.000000e+00> : vector<16x8xf32>
    %31 = tpu.matmul %28, %29, %cst_12 {dimension_numbers = #tpu.dot_dimension_numbers<[1], [1], [0], [0], [0, 0, 1, 0], [], []>} : vector<16x8xbf16>, vector<8x8xbf16>, vector<16x8xf32> -> vector<16x8xf32>
    %cst_13 = arith.constant dense<0xFF800000> : vector<16xf32>
    %32 = vector.multi_reduction <maximumf>, %31, %cst_13 [1] : vector<16x8xf32> to vector<16xf32>
    %33 = vector.shape_cast %32 : vector<16xf32> to vector<16x1xf32>
    %34 = vector.broadcast %33 : vector<16x1xf32> to vector<16x8xf32>
    %35 = arith.subf %31, %34 : vector<16x8xf32>
    %36 = math.exp %35 : vector<16x8xf32>
    %cst_14 = arith.constant dense<0.000000e+00> : vector<16xf32>
    %37 = vector.multi_reduction <add>, %36, %cst_14 [1] : vector<16x8xf32> to vector<16xf32>
    %38 = vector.shape_cast %37 : vector<16xf32> to vector<16x1xf32>
    %39 = tpu.reciprocal %38 {approx = true} : vector<16x1xf32> -> vector<16x1xf32>
    %40 = vector.broadcast %39 : vector<16x1xf32> to vector<16x8xf32>
    %41 = arith.mulf %36, %40 : vector<16x8xf32>
    %42 = arith.truncf %41 : vector<16x8xf32> to vector<16x8xbf16>
    %cst_15 = arith.constant dense<0.000000e+00> : vector<16x8xf32>
    %43 = tpu.matmul %42, %30, %cst_15 {dimension_numbers = #tpu.dot_dimension_numbers<[1], [0], [0], [1], [0, 0, 1, 1], [], []>} : vector<16x8xbf16>, vector<8x8xbf16>, vector<16x8xf32> -> vector<16x8xf32>
    %44 = arith.truncf %43 : vector<16x8xf32> to vector<16x8xbf16>
    %c0_16 = arith.constant 0 : index
    %c0_17 = arith.constant 0 : index
    %c8 = arith.constant 8 : index
    %45 = vector.load %arg3[%c0_16, %c0_17, %c8] : memref<1x16x32xbf16, #tpu.memory_space<vmem>>, vector<1x16x8xbf16>
    %46 = vector.shape_cast %45 : vector<1x16x8xbf16> to vector<16x8xbf16>
    %47 = vector.shape_cast %44 : vector<16x8xbf16> to vector<1x16x8xbf16>
    tpu.vector_store %arg3[%c0_16, %c0_17, %c8], %47 {strides = array<i32>} : memref<1x16x32xbf16, #tpu.memory_space<vmem>>, vector<1x16x8xbf16>,
    %48 = vector.extract_strided_slice %3 {offsets = [0, 16], sizes = [16, 8], strides = [1, 1]} : vector<16x32xbf16> to vector<16x8xbf16>
    %49 = vector.extract_strided_slice %6 {offsets = [0, 16], sizes = [8, 8], strides = [1, 1]} : vector<8x32xbf16> to vector<8x8xbf16>
    %50 = vector.extract_strided_slice %7 {offsets = [0, 16], sizes = [8, 8], strides = [1, 1]} : vector<8x32xbf16> to vector<8x8xbf16>
    %cst_18 = arith.constant dense<0.000000e+00> : vector<16x8xf32>
    %51 = tpu.matmul %48, %49, %cst_18 {dimension_numbers = #tpu.dot_dimension_numbers<[1], [1], [0], [0], [0, 0, 1, 0], [], []>} : vector<16x8xbf16>, vector<8x8xbf16>, vector<16x8xf32> -> vector<16x8xf32>
    %cst_19 = arith.constant dense<0xFF800000> : vector<16xf32>
    %52 = vector.multi_reduction <maximumf>, %51, %cst_19 [1] : vector<16x8xf32> to vector<16xf32>
    %53 = vector.shape_cast %52 : vector<16xf32> to vector<16x1xf32>
    %54 = vector.broadcast %53 : vector<16x1xf32> to vector<16x8xf32>
    %55 = arith.subf %51, %54 : vector<16x8xf32>
    %56 = math.exp %55 : vector<16x8xf32>
    %cst_20 = arith.constant dense<0.000000e+00> : vector<16xf32>
    %57 = vector.multi_reduction <add>, %56, %cst_20 [1] : vector<16x8xf32> to vector<16xf32>
    %58 = vector.shape_cast %57 : vector<16xf32> to vector<16x1xf32>
    %59 = tpu.reciprocal %58 {approx = true} : vector<16x1xf32> -> vector<16x1xf32>
    %60 = vector.broadcast %59 : vector<16x1xf32> to vector<16x8xf32>
    %61 = arith.mulf %56, %60 : vector<16x8xf32>
    %62 = arith.truncf %61 : vector<16x8xf32> to vector<16x8xbf16>
    %cst_21 = arith.constant dense<0.000000e+00> : vector<16x8xf32>
    %63 = tpu.matmul %62, %50, %cst_21 {dimension_numbers = #tpu.dot_dimension_numbers<[1], [0], [0], [1], [0, 0, 1, 1], [], []>} : vector<16x8xbf16>, vector<8x8xbf16>, vector<16x8xf32> -> vector<16x8xf32>
    %64 = arith.truncf %63 : vector<16x8xf32> to vector<16x8xbf16>
    %c0_22 = arith.constant 0 : index
    %c0_23 = arith.constant 0 : index
    %c16 = arith.constant 16 : index
    %65 = vector.load %arg3[%c0_22, %c0_23, %c16] : memref<1x16x32xbf16, #tpu.memory_space<vmem>>, vector<1x16x8xbf16>
    %66 = vector.shape_cast %65 : vector<1x16x8xbf16> to vector<16x8xbf16>
    %67 = vector.shape_cast %64 : vector<16x8xbf16> to vector<1x16x8xbf16>
    tpu.vector_store %arg3[%c0_22, %c0_23, %c16], %67 {strides = array<i32>} : memref<1x16x32xbf16, #tpu.memory_space<vmem>>, vector<1x16x8xbf16>,
    %68 = vector.extract_strided_slice %3 {offsets = [0, 24], sizes = [16, 8], strides = [1, 1]} : vector<16x32xbf16> to vector<16x8xbf16>
    %69 = vector.extract_strided_slice %6 {offsets = [0, 24], sizes = [8, 8], strides = [1, 1]} : vector<8x32xbf16> to vector<8x8xbf16>
    %70 = vector.extract_strided_slice %7 {offsets = [0, 24], sizes = [8, 8], strides = [1, 1]} : vector<8x32xbf16> to vector<8x8xbf16>
    %cst_24 = arith.constant dense<0.000000e+00> : vector<16x8xf32>
    %71 = tpu.matmul %68, %69, %cst_24 {dimension_numbers = #tpu.dot_dimension_numbers<[1], [1], [0], [0], [0, 0, 1, 0], [], []>} : vector<16x8xbf16>, vector<8x8xbf16>, vector<16x8xf32> -> vector<16x8xf32>
    %cst_25 = arith.constant dense<0xFF800000> : vector<16xf32>
    %72 = vector.multi_reduction <maximumf>, %71, %cst_25 [1] : vector<16x8xf32> to vector<16xf32>
    %73 = vector.shape_cast %72 : vector<16xf32> to vector<16x1xf32>
    %74 = vector.broadcast %73 : vector<16x1xf32> to vector<16x8xf32>
    %75 = arith.subf %71, %74 : vector<16x8xf32>
    %76 = math.exp %75 : vector<16x8xf32>
    %cst_26 = arith.constant dense<0.000000e+00> : vector<16xf32>
    %77 = vector.multi_reduction <add>, %76, %cst_26 [1] : vector<16x8xf32> to vector<16xf32>
    %78 = vector.shape_cast %77 : vector<16xf32> to vector<16x1xf32>
    %79 = tpu.reciprocal %78 {approx = true} : vector<16x1xf32> -> vector<16x1xf32>
    %80 = vector.broadcast %79 : vector<16x1xf32> to vector<16x8xf32>
    %81 = arith.mulf %76, %80 : vector<16x8xf32>
    %82 = arith.truncf %81 : vector<16x8xf32> to vector<16x8xbf16>
    %cst_27 = arith.constant dense<0.000000e+00> : vector<16x8xf32>
    %83 = tpu.matmul %82, %70, %cst_27 {dimension_numbers = #tpu.dot_dimension_numbers<[1], [0], [0], [1], [0, 0, 1, 1], [], []>} : vector<16x8xbf16>, vector<8x8xbf16>, vector<16x8xf32> -> vector<16x8xf32>
    %84 = arith.truncf %83 : vector<16x8xf32> to vector<16x8xbf16>
    %c0_28 = arith.constant 0 : index
    %c0_29 = arith.constant 0 : index
    %c24 = arith.constant 24 : index
    %85 = vector.load %arg3[%c0_28, %c0_29, %c24] : memref<1x16x32xbf16, #tpu.memory_space<vmem>>, vector<1x16x8xbf16>
    %86 = vector.shape_cast %85 : vector<1x16x8xbf16> to vector<16x8xbf16>
    %87 = vector.shape_cast %84 : vector<16x8xbf16> to vector<1x16x8xbf16>
    tpu.vector_store %arg3[%c0_28, %c0_29, %c24], %87 {strides = array<i32>} : memref<1x16x32xbf16, #tpu.memory_space<vmem>>, vector<1x16x8xbf16>,
    return
  }
  func.func @transform_0(%arg0: i32) -> (i32, i32, i32) {
    %c0_i32 = arith.constant 0 : i32
    %c0_i32_0 = arith.constant 0 : i32
    %c0_i32_1 = arith.constant 0 : i32
    return %arg0, %c0_i32, %c0_i32_0 : i32, i32, i32
  }
  func.func @transform_1(%arg0: i32) -> (i32, i32, i32) {
    %c0_i32 = arith.constant 0 : i32
    %c0_i32_0 = arith.constant 0 : i32
    %c0_i32_1 = arith.constant 0 : i32
    return %arg0, %c0_i32, %c0_i32_0 : i32, i32, i32
  }
  func.func @transform_2(%arg0: i32) -> (i32, i32, i32) {
    %c0_i32 = arith.constant 0 : i32
    %c0_i32_0 = arith.constant 0 : i32
    %c0_i32_1 = arith.constant 0 : i32
    return %arg0, %c0_i32, %c0_i32_0 : i32, i32, i32
  }
}

module attributes {stable_mosaic.version = 11 : i64} {
  func.func @_fused_linear_kernel(%arg0: i32, %arg1: i32, %arg2: memref<16x48xbf16, #tpu.memory_space<vmem>>, %arg3: memref<48x32xbf16, #tpu.memory_space<vmem>>, %arg4: memref<1x32xf32, #tpu.memory_space<vmem>>, %arg5: memref<16x32xbf16, #tpu.memory_space<vmem>>) attributes {dimension_semantics = [#tpu.dimension_semantics<parallel>, #tpu.dimension_semantics<parallel>], iteration_bounds = array<i64: 1, 1>, scalar_prefetch = 0 : i64, scratch_operands = 0 : i64, tpu.core_type = #tpu.core_type<tc>, window_params = [{transform_indices = @transform_0, window_bounds = array<i64: 16, 48>}, {transform_indices = @transform_1, window_bounds = array<i64: 48, 32>}, {transform_indices = @transform_2, window_bounds = array<i64: 1, 32>}, {transform_indices = @transform_3, window_bounds = array<i64: 16, 32>}]} {
    %c0 = arith.constant 0 : index
    %c0_0 = arith.constant 0 : index
    %0 = vector.load %arg2[%c0, %c0_0] : memref<16x48xbf16, #tpu.memory_space<vmem>>, vector<16x48xbf16>
    %c0_1 = arith.constant 0 : index
    %c0_2 = arith.constant 0 : index
    %1 = vector.load %arg3[%c0_1, %c0_2] : memref<48x32xbf16, #tpu.memory_space<vmem>>, vector<48x32xbf16>
    %cst = arith.constant dense<0.000000e+00> : vector<16x32xf32>
    %2 = tpu.matmul %0, %1, %cst {dimension_numbers = #tpu.dot_dimension_numbers<[1], [0], [0], [1], [0, 0, 1, 1], [], []>} : vector<16x48xbf16>, vector<48x32xbf16>, vector<16x32xf32> -> vector<16x32xf32>
    %c0_3 = arith.constant 0 : index
    %c0_4 = arith.constant 0 : index
    %3 = vector.load %arg4[%c0_3, %c0_4] : memref<1x32xf32, #tpu.memory_space<vmem>>, vector<1x32xf32>
    %4 = vector.broadcast %3 : vector<1x32xf32> to vector<16x32xf32>
    %5 = arith.addf %2, %4 : vector<16x32xf32>
    %6 = arith.truncf %5 : vector<16x32xf32> to vector<16x32xbf16>
    %c0_5 = arith.constant 0 : index
    %c0_6 = arith.constant 0 : index
    %7 = vector.load %arg5[%c0_5, %c0_6] : memref<16x32xbf16, #tpu.memory_space<vmem>>, vector<16x32xbf16>
    tpu.vector_store %arg5[%c0_5, %c0_6], %6 {strides = array<i32>} : memref<16x32xbf16, #tpu.memory_space<vmem>>, vector<16x32xbf16>,
    return
  }
  func.func @transform_0(%arg0: i32, %arg1: i32) -> (i32, i32) {
    %c0_i32 = arith.constant 0 : i32
    %c0_i32_0 = arith.constant 0 : i32
    return %arg1, %c0_i32 : i32, i32
  }
  func.func @transform_1(%arg0: i32, %arg1: i32) -> (i32, i32) {
    %c0_i32 = arith.constant 0 : i32
    %c0_i32_0 = arith.constant 0 : i32
    return %c0_i32, %arg0 : i32, i32
  }
  func.func @transform_2(%arg0: i32, %arg1: i32) -> (i32, i32) {
    %c0_i32 = arith.constant 0 : i32
    %c0_i32_0 = arith.constant 0 : i32
    return %c0_i32, %arg0 : i32, i32
  }
  func.func @transform_3(%arg0: i32, %arg1: i32) -> (i32, i32) {
    %c0_i32 = arith.constant 0 : i32
    return %arg1, %arg0 : i32, i32
  }
}

module attributes {stable_mosaic.version = 11 : i64} {
  func.func @_ln_logits_ce_kernel(%arg0: i32, %arg1: memref<32x32xbf16, #tpu.memory_space<vmem>>, %arg2: memref<1x32xf32, #tpu.memory_space<vmem>>, %arg3: memref<1x32xf32, #tpu.memory_space<vmem>>, %arg4: memref<32x1024xbf16, #tpu.memory_space<vmem>>, %arg5: memref<1x1024xf32, #tpu.memory_space<vmem>>, %arg6: memref<32x1xi32, #tpu.memory_space<vmem>>, %arg7: memref<32x1024xf32, #tpu.memory_space<vmem>>, %arg8: memref<1x1xf32, #tpu.memory_space<vmem>>, %arg9: memref<1x1xf32, #tpu.memory_space<vmem>>) attributes {dimension_semantics = [#tpu.dimension_semantics<arbitrary>], iteration_bounds = array<i64: 1>, scalar_prefetch = 0 : i64, scratch_operands = 0 : i64, tpu.core_type = #tpu.core_type<tc>, window_params = [{transform_indices = @transform_0, window_bounds = array<i64: 32, 32>}, {pipeline_mode = #tpu.pipeline_mode<synchronous>, transform_indices = @transform_1, window_bounds = array<i64: 1, 32>}, {pipeline_mode = #tpu.pipeline_mode<synchronous>, transform_indices = @transform_2, window_bounds = array<i64: 1, 32>}, {pipeline_mode = #tpu.pipeline_mode<synchronous>, transform_indices = @transform_3, window_bounds = array<i64: 32, 1024>}, {pipeline_mode = #tpu.pipeline_mode<synchronous>, transform_indices = @transform_4, window_bounds = array<i64: 1, 1024>}, {transform_indices = @transform_5, window_bounds = array<i64: 32, 1>}, {transform_indices = @transform_6, window_bounds = array<i64: 32, 1024>}, {pipeline_mode = #tpu.pipeline_mode<synchronous>, transform_indices = @transform_7, window_bounds = array<i64: 1, 1>}, {pipeline_mode = #tpu.pipeline_mode<synchronous>, transform_indices = @transform_8, window_bounds = array<i64: 1, 1>}]} {
    %c0_i32 = arith.constant 0 : i32
    %0 = arith.cmpi eq, %arg0, %c0_i32 : i32
    %1 = arith.extui %0 : i1 to i32
    %c0_i32_0 = arith.constant 0 : i32
    %2 = arith.cmpi ne, %1, %c0_i32_0 : i32
    scf.if %2 {
      %cst_34 = arith.constant 0.000000e+00 : f32
      %76 = vector.broadcast %cst_34 : f32 to vector<1x1xf32>
      %c0_35 = arith.constant 0 : index
      %c0_36 = arith.constant 0 : index
      %77 = vector.load %arg8[%c0_35, %c0_36] : memref<1x1xf32, #tpu.memory_space<vmem>>, vector<1x1xf32>
      tpu.vector_store %arg8[%c0_35, %c0_36], %76 {strides = array<i32>} : memref<1x1xf32, #tpu.memory_space<vmem>>, vector<1x1xf32>,
      %cst_37 = arith.constant 0.000000e+00 : f32
      %78 = vector.broadcast %cst_37 : f32 to vector<1x1xf32>
      %c0_38 = arith.constant 0 : index
      %c0_39 = arith.constant 0 : index
      %79 = vector.load %arg9[%c0_38, %c0_39] : memref<1x1xf32, #tpu.memory_space<vmem>>, vector<1x1xf32>
      tpu.vector_store %arg9[%c0_38, %c0_39], %78 {strides = array<i32>} : memref<1x1xf32, #tpu.memory_space<vmem>>, vector<1x1xf32>,
    } else {
    }
    %c0 = arith.constant 0 : index
    %c0_1 = arith.constant 0 : index
    %3 = vector.load %arg1[%c0, %c0_1] : memref<32x32xbf16, #tpu.memory_space<vmem>>, vector<32x32xbf16>
    %4 = arith.extf %3 : vector<32x32xbf16> to vector<32x32xf32>
    %cst = arith.constant dense<0.000000e+00> : vector<32xf32>
    %5 = vector.multi_reduction <add>, %4, %cst [1] : vector<32x32xf32> to vector<32xf32>
    %6 = vector.shape_cast %5 : vector<32xf32> to vector<32x1xf32>
    %cst_2 = arith.constant 3.200000e+01 : f32
    %7 = vector.broadcast %cst_2 : f32 to vector<32x1xf32>
    %8 = arith.divf %6, %7 : vector<32x1xf32>
    %9 = vector.broadcast %8 : vector<32x1xf32> to vector<32x32xf32>
    %10 = arith.subf %4, %9 : vector<32x32xf32>
    %11 = arith.mulf %10, %10 : vector<32x32xf32>
    %cst_3 = arith.constant dense<0.000000e+00> : vector<32xf32>
    %12 = vector.multi_reduction <add>, %11, %cst_3 [1] : vector<32x32xf32> to vector<32xf32>
    %13 = vector.shape_cast %12 : vector<32xf32> to vector<32x1xf32>
    %cst_4 = arith.constant 3.200000e+01 : f32
    %14 = vector.broadcast %cst_4 : f32 to vector<32x1xf32>
    %15 = arith.divf %13, %14 : vector<32x1xf32>
    %16 = vector.broadcast %8 : vector<32x1xf32> to vector<32x32xf32>
    %17 = arith.subf %4, %16 : vector<32x32xf32>
    %cst_5 = arith.constant 9.99999974E-6 : f32
    %18 = vector.broadcast %cst_5 : f32 to vector<32x1xf32>
    %19 = arith.addf %15, %18 : vector<32x1xf32>
    %20 = math.rsqrt %19 : vector<32x1xf32>
    %21 = vector.broadcast %20 : vector<32x1xf32> to vector<32x32xf32>
    %22 = arith.mulf %17, %21 : vector<32x32xf32>
    %c0_6 = arith.constant 0 : index
    %c0_7 = arith.constant 0 : index
    %23 = vector.load %arg2[%c0_6, %c0_7] : memref<1x32xf32, #tpu.memory_space<vmem>>, vector<1x32xf32>
    %24 = vector.broadcast %23 : vector<1x32xf32> to vector<32x32xf32>
    %25 = arith.mulf %22, %24 : vector<32x32xf32>
    %c0_8 = arith.constant 0 : index
    %c0_9 = arith.constant 0 : index
    %26 = vector.load %arg3[%c0_8, %c0_9] : memref<1x32xf32, #tpu.memory_space<vmem>>, vector<1x32xf32>
    %27 = vector.broadcast %26 : vector<1x32xf32> to vector<32x32xf32>
    %28 = arith.addf %25, %27 : vector<32x32xf32>
    %29 = arith.truncf %28 : vector<32x32xf32> to vector<32x32xbf16>
    %c0_10 = arith.constant 0 : index
    %c0_11 = arith.constant 0 : index
    %30 = vector.load %arg4[%c0_10, %c0_11] : memref<32x1024xbf16, #tpu.memory_space<vmem>>, vector<32x1024xbf16>
    %cst_12 = arith.constant dense<0.000000e+00> : vector<32x1024xf32>
    %31 = tpu.matmul %29, %30, %cst_12 {dimension_numbers = #tpu.dot_dimension_numbers<[1], [0], [0], [1], [0, 0, 1, 1], [], []>} : vector<32x32xbf16>, vector<32x1024xbf16>, vector<32x1024xf32> -> vector<32x1024xf32>
    %c0_13 = arith.constant 0 : index
    %c0_14 = arith.constant 0 : index
    %32 = vector.load %arg5[%c0_13, %c0_14] : memref<1x1024xf32, #tpu.memory_space<vmem>>, vector<1x1024xf32>
    %33 = vector.broadcast %32 : vector<1x1024xf32> to vector<32x1024xf32>
    %34 = arith.addf %31, %33 : vector<32x1024xf32>
    %c0_15 = arith.constant 0 : index
    %c0_16 = arith.constant 0 : index
    %35 = vector.load %arg7[%c0_15, %c0_16] : memref<32x1024xf32, #tpu.memory_space<vmem>>, vector<32x1024xf32>
    tpu.vector_store %arg7[%c0_15, %c0_16], %34 {strides = array<i32>} : memref<32x1024xf32, #tpu.memory_space<vmem>>, vector<32x1024xf32>,
    %c0_17 = arith.constant 0 : index
    %c0_18 = arith.constant 0 : index
    %36 = vector.load %arg6[%c0_17, %c0_18] : memref<32x1xi32, #tpu.memory_space<vmem>>, vector<32x1xi32>
    %cst_19 = arith.constant dense<0xFF800000> : vector<32xf32>
    %37 = vector.multi_reduction <maximumf>, %34, %cst_19 [1] : vector<32x1024xf32> to vector<32xf32>
    %38 = vector.shape_cast %37 : vector<32xf32> to vector<32x1xf32>
    %39 = vector.broadcast %38 : vector<32x1xf32> to vector<32x1024xf32>
    %40 = arith.subf %34, %39 : vector<32x1024xf32>
    %41 = math.exp %40 : vector<32x1024xf32>
    %cst_20 = arith.constant dense<0.000000e+00> : vector<32xf32>
    %42 = vector.multi_reduction <add>, %41, %cst_20 [1] : vector<32x1024xf32> to vector<32xf32>
    %43 = vector.shape_cast %42 : vector<32xf32> to vector<32x1xf32>
    %44 = math.log %43 : vector<32x1xf32>
    %45 = arith.addf %44, %38 : vector<32x1xf32>
    %46 = tpu.iota {dimensions = array<i32: 1>} : vector<32x1024xi32>
    %47 = vector.broadcast %36 : vector<32x1xi32> to vector<32x1024xi32>
    %48 = arith.cmpi eq, %46, %47 : vector<32x1024xi32>
    %cst_21 = arith.constant 0.000000e+00 : f32
    %49 = vector.broadcast %cst_21 : f32 to vector<32x1024xf32>
    %50 = arith.select %48, %34, %49 : vector<32x1024xi1>, vector<32x1024xf32>
    %cst_22 = arith.constant dense<0.000000e+00> : vector<32xf32>
    %51 = vector.multi_reduction <add>, %50, %cst_22 [1] : vector<32x1024xf32> to vector<32xf32>
    %52 = vector.shape_cast %51 : vector<32xf32> to vector<32x1xf32>
    %c-1_i32 = arith.constant -1 : i32
    %53 = vector.broadcast %c-1_i32 : i32 to vector<32x1xi32>
    %54 = arith.cmpi ne, %36, %53 : vector<32x1xi32>
    %55 = arith.subf %45, %52 : vector<32x1xf32>
    %cst_23 = arith.constant 0.000000e+00 : f32
    %56 = vector.broadcast %cst_23 : f32 to vector<32x1xf32>
    %57 = arith.select %54, %55, %56 : vector<32x1xi1>, vector<32x1xf32>
    %c0_24 = arith.constant 0 : index
    %c0_25 = arith.constant 0 : index
    %58 = vector.load %arg8[%c0_24, %c0_25] : memref<1x1xf32, #tpu.memory_space<vmem>>, vector<1x1xf32>
    %59 = vector.shape_cast %57 : vector<32x1xf32> to vector<1x32x1xf32>
    %cst_26 = arith.constant dense<0.000000e+00> : vector<1xf32>
    %60 = vector.multi_reduction <add>, %59, %cst_26 [1, 2] : vector<1x32x1xf32> to vector<1xf32>
    %61 = vector.shape_cast %60 : vector<1xf32> to vector<1x1x1xf32>
    %62 = vector.extract %61[0, 0, 0] : f32 from vector<1x1x1xf32>
    %63 = vector.broadcast %62 : f32 to vector<1x1xf32>
    %64 = arith.addf %58, %63 : vector<1x1xf32>
    %c0_27 = arith.constant 0 : index
    %c0_28 = arith.constant 0 : index
    %65 = vector.load %arg8[%c0_27, %c0_28] : memref<1x1xf32, #tpu.memory_space<vmem>>, vector<1x1xf32>
    tpu.vector_store %arg8[%c0_27, %c0_28], %64 {strides = array<i32>} : memref<1x1xf32, #tpu.memory_space<vmem>>, vector<1x1xf32>,
    %c0_29 = arith.constant 0 : index
    %c0_30 = arith.constant 0 : index
    %66 = vector.load %arg9[%c0_29, %c0_30] : memref<1x1xf32, #tpu.memory_space<vmem>>, vector<1x1xf32>
    %67 = arith.extui %54 : vector<32x1xi1> to vector<32x1xi32>
    %68 = arith.sitofp %67 : vector<32x1xi32> to vector<32x1xf32>
    %69 = vector.shape_cast %68 : vector<32x1xf32> to vector<1x32x1xf32>
    %cst_31 = arith.constant dense<0.000000e+00> : vector<1xf32>
    %70 = vector.multi_reduction <add>, %69, %cst_31 [1, 2] : vector<1x32x1xf32> to vector<1xf32>
    %71 = vector.shape_cast %70 : vector<1xf32> to vector<1x1x1xf32>
    %72 = vector.extract %71[0, 0, 0] : f32 from vector<1x1x1xf32>
    %73 = vector.broadcast %72 : f32 to vector<1x1xf32>
    %74 = arith.addf %66, %73 : vector<1x1xf32>
    %c0_32 = arith.constant 0 : index
    %c0_33 = arith.constant 0 : index
    %75 = vector.load %arg9[%c0_32, %c0_33] : memref<1x1xf32, #tpu.memory_space<vmem>>, vector<1x1xf32>
    tpu.vector_store %arg9[%c0_32, %c0_33], %74 {strides = array<i32>} : memref<1x1xf32, #tpu.memory_space<vmem>>, vector<1x1xf32>,
    return
  }
  func.func @transform_0(%arg0: i32) -> (i32, i32) {
    %c0_i32 = arith.constant 0 : i32
    %c0_i32_0 = arith.constant 0 : i32
    return %arg0, %c0_i32 : i32, i32
  }
  func.func @transform_1(%arg0: i32) -> (i32, i32) {
    %c0_i32 = arith.constant 0 : i32
    %c0_i32_0 = arith.constant 0 : i32
    %c0_i32_1 = arith.constant 0 : i32
    return %c0_i32, %c0_i32_0 : i32, i32
  }
  func.func @transform_2(%arg0: i32) -> (i32, i32) {
    %c0_i32 = arith.constant 0 : i32
    %c0_i32_0 = arith.constant 0 : i32
    %c0_i32_1 = arith.constant 0 : i32
    return %c0_i32, %c0_i32_0 : i32, i32
  }
  func.func @transform_3(%arg0: i32) -> (i32, i32) {
    %c0_i32 = arith.constant 0 : i32
    %c0_i32_0 = arith.constant 0 : i32
    %c0_i32_1 = arith.constant 0 : i32
    return %c0_i32, %c0_i32_0 : i32, i32
  }
  func.func @transform_4(%arg0: i32) -> (i32, i32) {
    %c0_i32 = arith.constant 0 : i32
    %c0_i32_0 = arith.constant 0 : i32
    %c0_i32_1 = arith.constant 0 : i32
    return %c0_i32, %c0_i32_0 : i32, i32
  }
  func.func @transform_5(%arg0: i32) -> (i32, i32) {
    %c0_i32 = arith.constant 0 : i32
    %c0_i32_0 = arith.constant 0 : i32
    return %arg0, %c0_i32 : i32, i32
  }
  func.func @transform_6(%arg0: i32) -> (i32, i32) {
    %c0_i32 = arith.constant 0 : i32
    %c0_i32_0 = arith.constant 0 : i32
    return %arg0, %c0_i32 : i32, i32
  }
  func.func @transform_7(%arg0: i32) -> (i32, i32) {
    %c0_i32 = arith.constant 0 : i32
    %c0_i32_0 = arith.constant 0 : i32
    %c0_i32_1 = arith.constant 0 : i32
    return %c0_i32, %c0_i32_0 : i32, i32
  }
  func.func @transform_8(%arg0: i32) -> (i32, i32) {
    %c0_i32 = arith.constant 0 : i32
    %c0_i32_0 = arith.constant 0 : i32
    %c0_i32_1 = arith.constant 0 : i32
    return %c0_i32, %c0_i32_0 : i32, i32
  }
}

</mosaic_0001>

<llo_original>
// kernel: model_forward.20
$region0: #{model_forward.20}
  #allocation0 [shape = 'u32[]', space=smem, size = 0x4, offset = 0x4, fixed_abs, tag = 'smem constant byte address 0x4 - core index']
  #allocation1 [shape = 'u32[144,128]{1,0:T(1,128)}', space=vmem, size = 0x12000, scoped, tag = 'internal scratch']
  %s0 = inlined_call_operand.vmem [shape: bf16[32,32], index: 0, kind: input, shape index: {}]
  %s1 = inlined_call_operand.vmem [shape: bf16[32,32], index: 1, kind: input, shape index: {}]
  %s2 = inlined_call_operand.vmem [shape: f32[1,32], index: 2, kind: input, shape index: {}]
  %s3 = inlined_call_operand.vmem [shape: bf16[32,32], index: 3, kind: input, shape index: {}]
  %s4 = inlined_call_operand.vmem [shape: bf16[32,32], index: 4, kind: output, shape index: {}]
  %s5 = sld [smem:[#allocation0]]
  $region26: #{model_forward.20} parent=0
    _
  %s7 = ssub.s32 1, %s5
  %s8 = scalar_select 0, %s7, %s5
  // Predicated region
  $region2: #{model_forward.20} parent=0 // pred_check
    _
  $region3: #{model_forward.20} parent=0 // pred_check_branch
    %10 = sbr.rel (0) target = $region5
  $region4: #{model_forward.20} parent=0 // pred_region
    _
  $region5: #{model_forward.20} parent=0 // pred_fallthru
    _
  // Predicated region
  $region6: #{model_forward.20} parent=0 // pred_check
    _
  $region7: #{model_forward.20} parent=0 // pred_check_branch
    %12 = sbr.rel (0) target = $region9
  $region8: #{model_forward.20} parent=0 // pred_region
    _
  $region9: #{model_forward.20} parent=0 // pred_fallthru
    _
  // Predicated region
  $region10: #{model_forward.20} parent=0 // pred_check
    _
  $region11: #{model_forward.20} parent=0 // pred_check_branch
    %14 = sbr.rel (0) target = $region13
  $region12: #{model_forward.20} parent=0 // pred_region
    _
  $region13: #{model_forward.20} parent=0 // pred_fallthru
    _
  // Predicated region
  $region14: #{model_forward.20} parent=0 // pred_check
    _
  $region15: #{model_forward.20} parent=0 // pred_check_branch
    %16 = sbr.rel (0) target = $region17
  $region16: #{model_forward.20} parent=0 // pred_region
    _
  $region17: #{model_forward.20} parent=0 // pred_fallthru
    _
  %v18 = vld [vmem:[%s0] sm:$0xf]
  %v19 = vld [vmem:[%s0 + $0x4] sm:$0xf]
  %v20 = vld [vmem:[%s0 + $0x8] sm:$0xf]
  %v21 = vld [vmem:[%s0 + $0xc] sm:$0xf]
  %v22 = vld [vmem:[%s1] sm:$0xf]
  %v23 = vld [vmem:[%s1 + $0x4] sm:$0xf]
  %v24 = vld [vmem:[%s1 + $0x8] sm:$0xf]
  %v25 = vld [vmem:[%s1 + $0xc] sm:$0xf]
  %v26 = vld [vmem:[%s2] sm:$0x1]
  %v28 = vlaneseq
  %v29 = vshrl.u32 %v28, 7
  %v30 = vsub.s32 0, %v29
  %v31 = vrot.slane %v26, %v30
  %v37 = vunpack.c.l.b16 %v18
  %v38 = vunpack.c.l.b16 %v19
  %v39 = vunpack.c.l.b16 %v20
  %v40 = vunpack.c.l.b16 %v21
  %v41 = vpack.c.b16 %v38, %v37
  %v42 = vpack.c.b16 %v40, %v39
  %v47 = vunpack.c.l.b16 %v22
  %v48 = vunpack.c.l.b16 %v23
  %v49 = vunpack.c.l.b16 %v24
  %v50 = vunpack.c.l.b16 %v25
  %v51 = vpack.c.b16 %v48, %v47
  %v52 = vpack.c.b16 %v50, %v49
  %vm55 = vcmask 261120
  %v57 = vsel %vm55, %v41, 0
  %v60 = vsel %vm55, %v42, 0
  %62 = vmatprep.subr.bf16.mxu0 0
  %63 = vmatpush1.bf16.msra.mxu0 %v51
  %64 = vmatprep.subr.bf16.mxu0 0
  %65 = vmatpush1.bf16.msra.mxu0 %v52
  %66 = vmatprep.subr.bf16.mxu0 0
  %67 = vmatpush1.bf16.msra.mxu0 0
  %68 = vmatprep.subr.bf16.mxu0 0
  %69 = vmatpush1.bf16.msra.mxu0 0
  %70 = vmatprep.subr.bf16.mxu0 0
  %71 = vmatpush1.bf16.msra.mxu0 0
  %72 = vmatprep.subr.bf16.mxu0 0
  %73 = vmatpush1.bf16.msra.mxu0 0
  %74 = vmatprep.subr.bf16.mxu0 0
  %75 = vmatpush1.bf16.msra.mxu0 0
  %76 = vmatprep.subr.bf16.mxu0 0
  %77 = vmatpush1.bf16.msra.mxu0 0
  %78 = vmatprep.subr.bf16.mxu0 0
  %79 = vmatpush1.bf16.msra.mxu0 0
  %80 = vmatprep.subr.bf16.mxu0 0
  %81 = vmatpush1.bf16.msra.mxu0 0
  %82 = vmatprep.subr.bf16.mxu0 0
  %83 = vmatpush1.bf16.msra.mxu0 0
  %84 = vmatprep.subr.bf16.mxu0 0
  %85 = vmatpush1.bf16.msra.mxu0 0
  %86 = vmatprep.subr.bf16.mxu0 0
  %87 = vmatpush1.bf16.msra.mxu0 0
  %88 = vmatprep.subr.bf16.mxu0 0
  %89 = vmatpush1.bf16.msra.mxu0 0
  %90 = vmatprep.subr.bf16.mxu0 0
  %91 = vmatpush1.bf16.msra.mxu0 0
  %92 = vmatprep.subr.bf16.mxu0 0
  %93 = vmatpush1.bf16.msra.mxu0 0
  %94 = vmatprep.mubr.bf16.mxu0 0
  %95 = vmatmul.mubr.bf16.gmra.mrb[0].mxu0 %v57
  %v96 = vpop.f32.mrb[0].mxu0
  %v97 = vadd.f32 %v31, %v96
  %v98 = vpop.f32.mrb[0].mxu0
  %v99 = vpop.f32.mrb[0].mxu0
  %v100 = vadd.f32 %v31, %v99
  %v101 = vpop.f32.mrb[0].mxu0
  %102 = vmatprep.mubr.bf16.mxu0 0
  %103 = vmatmul.mubr.bf16.gmra.mrb[0].mxu0 %v60
  %v104 = vpop.f32.mrb[0].mxu0
  %v105 = vadd.f32 %v31, %v104
  %v106 = vpop.f32.mrb[0].mxu0
  %v107 = vpop.f32.mrb[0].mxu0
  %v108 = vadd.f32 %v31, %v107
  %v109 = vpop.f32.mrb[0].mxu0
  %110 = vdwg.mxu0
  %v111 = vld [vmem:[%s3] sm:$0xf]
  %v112 = vld [vmem:[%s3 + $0x4] sm:$0xf]
  %v113 = vld [vmem:[%s3 + $0x8] sm:$0xf]
  %v114 = vld [vmem:[%s3 + $0xc] sm:$0xf]
  %v115 = vunpack.c.l.bf16 %v111
  %v116 = vunpack.c.l.bf16 %v112
  %v117 = vunpack.c.l.bf16 %v113
  %v118 = vunpack.c.l.bf16 %v114
  %v119 = vadd.f32 %v97, %v115
  %v120 = vadd.f32 %v100, %v116
  %v121 = vadd.f32 %v105, %v117
  %v122 = vadd.f32 %v108, %v118
  %v123 = vpack.c.bf16 %v120, %v119
  %v124 = vpack.c.bf16 %v122, %v121
  %v127 = vunpack.c.l.b16 %v123
  %v128 = vunpack.c.h.b16 %v123
  %v129 = vunpack.c.l.b16 %v124
  %v130 = vunpack.c.h.b16 %v124
  %v131 = vpack.c.b16 %v127, %v127
  %v132 = vpack.c.b16 %v128, %v128
  %v133 = vpack.c.b16 %v129, %v129
  %v134 = vpack.c.b16 %v130, %v130
  %vm139 = vcmask 257024
  %140 = vst.msk [vmem:[%s4] sm:$0xf] %vm139, %v131
  %141 = vst.msk [vmem:[%s4 + $0x4] sm:$0xf] %vm139, %v132
  %142 = vst.msk [vmem:[%s4 + $0x8] sm:$0xf] %vm139, %v133
  %143 = vst.msk [vmem:[%s4 + $0xc] sm:$0xf] %vm139, %v134
  // Predicated region
  $region18: #{model_forward.20} parent=0 // pred_check
    _
  $region19: #{model_forward.20} parent=0 // pred_check_branch
    %145 = sbr.rel (0) target = $region21
  $region20: #{model_forward.20} parent=0 // pred_region
    _
  $region21: #{model_forward.20} parent=0 // pred_fallthru
    _
  // Predicated region
  $region22: #{model_forward.20} parent=0 // pred_check
    _
  $region23: #{model_forward.20} parent=0 // pred_check_branch
    %147 = sbr.rel (0) target = $region25
  $region24: #{model_forward.20} parent=0 // pred_region
    _
  $region25: #{model_forward.20} parent=0 // pred_fallthru
    _

// kernel: model_forward.18
$region0: #{model_forward.18}
  #allocation0 [shape = 'u32[]', space=smem, size = 0x4, offset = 0x4, fixed_abs, tag = 'smem constant byte address 0x4 - core index']
  #allocation1 [shape = 'u32[144,128]{1,0:T(1,128)}', space=vmem, size = 0x12000, scoped, tag = 'internal scratch']
  %s0 = inlined_call_operand.vmem [shape: bf16[32,32], index: 0, kind: input, shape index: {}]
  %s1 = inlined_call_operand.vmem [shape: f32[1,32], index: 1, kind: input, shape index: {}]
  %s2 = inlined_call_operand.vmem [shape: f32[1,32], index: 2, kind: input, shape index: {}]
  %s3 = inlined_call_operand.vmem [shape: bf16[32,96], index: 3, kind: input, shape index: {}]
  %s4 = inlined_call_operand.vmem [shape: f32[1,96], index: 4, kind: input, shape index: {}]
  %s5 = inlined_call_operand.vmem [shape: bf16[32,96], index: 5, kind: output, shape index: {}]
  %s6 = sld [smem:[#allocation0]]
  $region30: #{model_forward.18} parent=0
    _
  %s8 = ssub.s32 1, %s6
  %s9 = scalar_select 0, %s8, %s6
  // Predicated region
  $region2: #{model_forward.18} parent=0 // pred_check
    _
  $region3: #{model_forward.18} parent=0 // pred_check_branch
    %11 = sbr.rel (0) target = $region5
  $region4: #{model_forward.18} parent=0 // pred_region
    _
  $region5: #{model_forward.18} parent=0 // pred_fallthru
    _
  // Predicated region
  $region6: #{model_forward.18} parent=0 // pred_check
    _
  $region7: #{model_forward.18} parent=0 // pred_check_branch
    %13 = sbr.rel (0) target = $region9
  $region8: #{model_forward.18} parent=0 // pred_region
    _
  $region9: #{model_forward.18} parent=0 // pred_fallthru
    _
  // Predicated region
  $region10: #{model_forward.18} parent=0 // pred_check
    _
  $region11: #{model_forward.18} parent=0 // pred_check_branch
    %15 = sbr.rel (0) target = $region13
  $region12: #{model_forward.18} parent=0 // pred_region
    _
  $region13: #{model_forward.18} parent=0 // pred_fallthru
    _
  // Predicated region
  $region14: #{model_forward.18} parent=0 // pred_check
    _
  $region15: #{model_forward.18} parent=0 // pred_check_branch
    %17 = sbr.rel (0) target = $region17
  $region16: #{model_forward.18} parent=0 // pred_region
    _
  $region17: #{model_forward.18} parent=0 // pred_fallthru
    _
  // Predicated region
  $region18: #{model_forward.18} parent=0 // pred_check
    _
  $region19: #{model_forward.18} parent=0 // pred_check_branch
    %19 = sbr.rel (0) target = $region21
  $region20: #{model_forward.18} parent=0 // pred_region
    _
  $region21: #{model_forward.18} parent=0 // pred_fallthru
    _
  %v21 = vld [vmem:[%s0] sm:$0xf]
  %v22 = vld [vmem:[%s0 + $0x4] sm:$0xf]
  %v23 = vld [vmem:[%s0 + $0x8] sm:$0xf]
  %v24 = vld [vmem:[%s0 + $0xc] sm:$0xf]
  %v25 = vunpack.c.l.bf16 %v21
  %v26 = vunpack.c.l.bf16 %v22
  %v27 = vunpack.c.l.bf16 %v23
  %v28 = vunpack.c.l.bf16 %v24
  %vm29 = vcmask 261120
  %v30 = vsel %vm29, %v25, 0.0
  %31 = vadd.xlane.f32.xlu0 %v30
  %v32 = vpop.xlane.xlu0 %31
  %v33 = vsel %vm29, %v26, 0.0
  %34 = vadd.xlane.f32.xlu0 %v33
  %v35 = vpop.xlane.xlu0 %34
  %v36 = vsel %vm29, %v27, 0.0
  %37 = vadd.xlane.f32.xlu0 %v36
  %v38 = vpop.xlane.xlu0 %37
  %v39 = vsel %vm29, %v28, 0.0
  %40 = vadd.xlane.f32.xlu0 %v39
  %v41 = vpop.xlane.xlu0 %40
  %v42 = vrcp.pop 32.0
  %v43 = vmul.f32 %v32, %v42
  %v44 = vmul.f32 %v35, %v42
  %v45 = vmul.f32 %v38, %v42
  %v46 = vmul.f32 %v41, %v42
  %v47 = vsub.f32 %v25, %v43
  %v48 = vsub.f32 %v26, %v44
  %v49 = vsub.f32 %v27, %v45
  %v50 = vsub.f32 %v28, %v46
  %v51 = vmul.f32 %v47, %v47
  %v52 = vmul.f32 %v48, %v48
  %v53 = vmul.f32 %v49, %v49
  %v54 = vmul.f32 %v50, %v50
  %v55 = vsel %vm29, %v51, 0.0
  %56 = vadd.xlane.f32.xlu0 %v55
  %v57 = vpop.xlane.xlu0 %56
  %v58 = vsel %vm29, %v52, 0.0
  %59 = vadd.xlane.f32.xlu0 %v58
  %v60 = vpop.xlane.xlu0 %59
  %v61 = vsel %vm29, %v53, 0.0
  %62 = vadd.xlane.f32.xlu0 %v61
  %v63 = vpop.xlane.xlu0 %62
  %v64 = vsel %vm29, %v54, 0.0
  %65 = vadd.xlane.f32.xlu0 %v64
  %v66 = vpop.xlane.xlu0 %65
  %v67 = vmul.f32 %v57, %v42
  %v68 = vmul.f32 %v60, %v42
  %v69 = vmul.f32 %v63, %v42
  %v70 = vmul.f32 %v66, %v42
  %v71 = vadd.f32 %v67, 1e-05
  %v72 = vadd.f32 %v68, 1e-05
  %v73 = vadd.f32 %v69, 1e-05
  %v74 = vadd.f32 %v70, 1e-05
  %v75 = vrsqrt.pop %v71
  %v76 = vrsqrt.pop %v72
  %v77 = vrsqrt.pop %v73
  %v78 = vrsqrt.pop %v74
  %v79 = vmul.f32 %v47, %v75
  %v80 = vmul.f32 %v48, %v76
  %v81 = vmul.f32 %v49, %v77
  %v82 = vmul.f32 %v50, %v78
  %v83 = vld [vmem:[%s1] sm:$0x1]
  %v85 = vlaneseq
  %v86 = vshrl.u32 %v85, 7
  %v87 = vsub.s32 0, %v86
  %v88 = vrot.slane %v83, %v87
  %v90 = vmul.f32 %v79, %v88
  %v91 = vmul.f32 %v80, %v88
  %v92 = vmul.f32 %v81, %v88
  %v93 = vmul.f32 %v82, %v88
  %v94 = vld [vmem:[%s2] sm:$0x1]
  %v96 = vlaneseq
  %v97 = vshrl.u32 %v96, 7
  %v98 = vsub.s32 0, %v97
  %v99 = vrot.slane %v94, %v98
  %v101 = vadd.f32 %v90, %v99
  %v102 = vadd.f32 %v91, %v99
  %v103 = vadd.f32 %v92, %v99
  %v104 = vadd.f32 %v93, %v99
  %v105 = vpack.c.bf16 %v102, %v101
  %v106 = vpack.c.bf16 %v104, %v103
  %v107 = vld [vmem:[%s3] sm:$0xf]
  %v108 = vld [vmem:[%s3 + $0x4] sm:$0xf]
  %v109 = vld [vmem:[%s3 + $0x8] sm:$0xf]
  %v110 = vld [vmem:[%s3 + $0xc] sm:$0xf]
  %v111 = vld [vmem:[%s4] sm:$0x1]
  %v113 = vlaneseq
  %v114 = vshrl.u32 %v113, 7
  %v115 = vsub.s32 0, %v114
  %v116 = vrot.slane %v111, %v115
  %v122 = vunpack.c.l.b16 %v107
  %v123 = vunpack.c.l.b16 %v108
  %v124 = vunpack.c.l.b16 %v109
  %v125 = vunpack.c.l.b16 %v110
  %v126 = vpack.c.b16 %v123, %v122
  %v127 = vpack.c.b16 %v125, %v124
  %v131 = vsel %vm29, %v105, 0
  %v134 = vsel %vm29, %v106, 0
  %136 = vmatprep.subr.bf16.mxu0 0
  %137 = vmatpush1.bf16.msra.mxu0 %v126
  %138 = vmatprep.subr.bf16.mxu0 0
  %139 = vmatpush1.bf16.msra.mxu0 %v127
  %140 = vmatprep.subr.bf16.mxu0 0
  %141 = vmatpush1.bf16.msra.mxu0 0
  %142 = vmatprep.subr.bf16.mxu0 0
  %143 = vmatpush1.bf16.msra.mxu0 0
  %144 = vmatprep.subr.bf16.mxu0 0
  %145 = vmatpush1.bf16.msra.mxu0 0
  %146 = vmatprep.subr.bf16.mxu0 0
  %147 = vmatpush1.bf16.msra.mxu0 0
  %148 = vmatprep.subr.bf16.mxu0 0
  %149 = vmatpush1.bf16.msra.mxu0 0
  %150 = vmatprep.subr.bf16.mxu0 0
  %151 = vmatpush1.bf16.msra.mxu0 0
  %152 = vmatprep.subr.bf16.mxu0 0
  %153 = vmatpush1.bf16.msra.mxu0 0
  %154 = vmatprep.subr.bf16.mxu0 0
  %155 = vmatpush1.bf16.msra.mxu0 0
  %156 = vmatprep.subr.bf16.mxu0 0
  %157 = vmatpush1.bf16.msra.mxu0 0
  %158 = vmatprep.subr.bf16.mxu0 0
  %159 = vmatpush1.bf16.msra.mxu0 0
  %160 = vmatprep.subr.bf16.mxu0 0
  %161 = vmatpush1.bf16.msra.mxu0 0
  %162 = vmatprep.subr.bf16.mxu0 0
  %163 = vmatpush1.bf16.msra.mxu0 0
  %164 = vmatprep.subr.bf16.mxu0 0
  %165 = vmatpush1.bf16.msra.mxu0 0
  %166 = vmatprep.subr.bf16.mxu0 0
  %167 = vmatpush1.bf16.msra.mxu0 0
  %168 = vmatprep.mubr.bf16.mxu0 0
  %169 = vmatmul.mubr.bf16.gmra.mrb[0].mxu0 %v131
  %v170 = vpop.f32.mrb[0].mxu0
  %v171 = vadd.f32 %v116, %v170
  %v172 = vpop.f32.mrb[0].mxu0
  %v173 = vpop.f32.mrb[0].mxu0
  %v174 = vadd.f32 %v116, %v173
  %v175 = vpop.f32.mrb[0].mxu0
  %176 = vmatprep.mubr.bf16.mxu0 0
  %177 = vmatmul.mubr.bf16.gmra.mrb[0].mxu0 %v134
  %v178 = vpop.f32.mrb[0].mxu0
  %v179 = vadd.f32 %v116, %v178
  %v180 = vpop.f32.mrb[0].mxu0
  %v181 = vpop.f32.mrb[0].mxu0
  %v182 = vadd.f32 %v116, %v181
  %v183 = vpop.f32.mrb[0].mxu0
  %184 = vdwg.mxu0
  %v185 = vpack.c.bf16 %v174, %v171
  %v186 = vpack.c.bf16 %v182, %v179
  %v189 = vunpack.c.l.b16 %v185
  %v190 = vunpack.c.h.b16 %v185
  %v191 = vunpack.c.l.b16 %v186
  %v192 = vunpack.c.h.b16 %v186
  %v193 = vpack.c.b16 %v189, %v189
  %v194 = vpack.c.b16 %v190, %v190
  %v195 = vpack.c.b16 %v191, %v191
  %v196 = vpack.c.b16 %v192, %v192
  %vm201 = vcmask 781312
  %202 = vst.msk [vmem:[%s5] sm:$0xf] %vm201, %v193
  %203 = vst.msk [vmem:[%s5 + $0x4] sm:$0xf] %vm201, %v194
  %204 = vst.msk [vmem:[%s5 + $0x8] sm:$0xf] %vm201, %v195
  %205 = vst.msk [vmem:[%s5 + $0xc] sm:$0xf] %vm201, %v196
  // Predicated region
  $region22: #{model_forward.18} parent=0 // pred_check
    _
  $region23: #{model_forward.18} parent=0 // pred_check_branch
    %207 = sbr.rel (0) target = $region25
  $region24: #{model_forward.18} parent=0 // pred_region
    _
  $region25: #{model_forward.18} parent=0 // pred_fallthru
    _
  // Predicated region
  $region26: #{model_forward.18} parent=0 // pred_check
    _
  $region27: #{model_forward.18} parent=0 // pred_check_branch
    %209 = sbr.rel (0) target = $region29
  $region28: #{model_forward.18} parent=0 // pred_region
    _
  $region29: #{model_forward.18} parent=0 // pred_fallthru
    _

// kernel: model_forward.19
$region0: #{model_forward.19}
  #allocation0 [shape = 'u32[]', space=smem, size = 0x4, offset = 0x4, fixed_abs, tag = 'smem constant byte address 0x4 - core index']
  #allocation1 [shape = 'u32[144,128]{1,0:T(1,128)}', space=vmem, size = 0x12000, scoped, tag = 'internal scratch']
  %s0 = inlined_call_operand.vmem [shape: bf16[2,16,96], index: 0, kind: input, shape index: {}]
  %s1 = inlined_call_operand.vmem [shape: bf16[2,16,32], index: 1, kind: output, shape index: {}]
  %s2 = sld [smem:[#allocation0]]
  $region37: #{model_forward.19} parent=0
    _
  %s4 = ssub.s32 1, %s2
  %s5 = scalar_select 0, %s4, %s2
  loop: start=0, step=1, limit=4
  $region2: #{model_forward.19} parent=0 // loop_pre_header
    _
  $region3: #{model_forward.19} parent=0 // loop_header
    %s7 = sphi 0, %s11
    %p8 = scmp.ge.s32.totalorder %s7, 4
    %s17 = sphi 0, %s19
    %s20 = sphi 0, %s17
    %s21 = sphi 0, %s20
    %s37 = sphi 0, %s21
    %s43 = sphi 0, %s45
    %s46 = sphi 0, %s43
    %s47 = sphi 0, %s46
    %s63 = sphi 0, %s47
  $region4: #{model_forward.19} parent=0 // loop_header_branch
    %10 = sbr.rel (%p8) target = $region8
  $region5: #{model_forward.19} parent=0 // loop_body
    %s12 = ssub.s32 %s7, 1
    %s13 = ssub.s32 %s7, 2
    %s14 = sadd.s32 %s7, 1
    %s15 = ssub.s32 %s7, %s14
    %p16 = scmp.eq.s32.totalorder %s15, 0
    %s18 = sadd.s32 %s17, 1
    %s19 = scalar_select %p16, %s17, %s18
    %p22 = pneg %p16
    %p23 = scmp.eq.s32.totalorder %s7, 1
    %p24 = por %p22, %p23
    %p25 = scmp.ne.s32.totalorder %s17, %s20
    %p26 = scmp.eq.s32.totalorder %s7, 0
    %p27 = por %p25, %p26
    %p28 = scmp.ne.s32.totalorder %s17, %s20
    %p29 = scmp.eq.s32.totalorder %s12, 1
    %p30 = por %p28, %p29
    %p31 = scmp.ne.s32.totalorder %s20, %s21
    %p32 = scmp.eq.s32.totalorder %s12, 0
    %p33 = por %p31, %p32
    %p34 = scmp.ne.s32.totalorder %s20, %s21
    %p35 = scmp.eq.s32.totalorder %s13, 1
    %p36 = por %p34, %p35
    %p38 = scmp.ne.s32.totalorder %s21, %s37
    %p39 = scmp.eq.s32.totalorder %s13, 0
    %p40 = por %p38, %p39
    %s41 = ssub.s32 %s7, %s14
    %p42 = scmp.eq.s32.totalorder %s41, 0
    %s44 = sadd.s32 %s43, 1
    %s45 = scalar_select %p42, %s43, %s44
    %p48 = pneg %p42
    %p49 = scmp.eq.s32.totalorder %s7, 1
    %p50 = por %p48, %p49
    %p51 = scmp.ne.s32.totalorder %s43, %s46
    %p52 = scmp.eq.s32.totalorder %s7, 0
    %p53 = por %p51, %p52
    %p54 = scmp.ne.s32.totalorder %s43, %s46
    %p55 = scmp.eq.s32.totalorder %s12, 1
    %p56 = por %p54, %p55
    %p57 = scmp.ne.s32.totalorder %s46, %s47
    %p58 = scmp.eq.s32.totalorder %s12, 0
    %p59 = por %p57, %p58
    %p60 = scmp.ne.s32.totalorder %s46, %s47
    %p61 = scmp.eq.s32.totalorder %s13, 1
    %p62 = por %p60, %p61
    %p64 = scmp.ne.s32.totalorder %s47, %s63
    %p65 = scmp.eq.s32.totalorder %s13, 0
    %p66 = por %p64, %p65
    %p67 = scmp.le.s32.totalorder 1, %s7
    %p68 = scmp.lt.s32.totalorder %s7, 3
    %p69 = pnand %p67, %p68
    %p70 = pneg %p69
    // Predicated region
    $region9: #{model_forward.19} parent=5 // pred_check
      _
    $region10: #{model_forward.19} parent=5 // pred_check_branch
      %72 = sbr.rel (%p69) target = $region12
    $region11: #{model_forward.19} parent=5 // pred_region
      %s73 = ssub.s32 %s7, 1
    $region12: #{model_forward.19} parent=5 // pred_fallthru
      _
    %p74 = scmp.lt.s32.totalorder %s7, 2
    // Predicated region
    $region13: #{model_forward.19} parent=5 // pred_check
      %p75 = pneg %p74
    $region14: #{model_forward.19} parent=5 // pred_check_branch
      %77 = sbr.rel (%p75) target = $region16
    $region15: #{model_forward.19} parent=5 // pred_region
      // Predicated region
      $region17: #{model_forward.19} parent=15 // pred_check
        %p78 = pneg %p27
      $region18: #{model_forward.19} parent=15 // pred_check_branch
        %80 = sbr.rel (%p78) target = $region20
      $region19: #{model_forward.19} parent=15 // pred_region
        %p81 = scmp.lt.s32.totalorder %s7, 1
        %s82 = scalar_select %p81, %s7, 1
        %s83 = smul.addr %s82, 2
        %s84 = smul.addr %s83, 4
        %s85 = scalar_lea.vmem %s0, %s84
      $region20: #{model_forward.19} parent=15 // pred_fallthru
        _
    $region16: #{model_forward.19} parent=5 // pred_fallthru
      _
    %p86 = scmp.le.s32.totalorder 1, %s7
    %p87 = scmp.lt.s32.totalorder %s7, 3
    %p88 = pnand %p86, %p87
    %p89 = pneg %p88
    // Predicated region
    $region21: #{model_forward.19} parent=5 // pred_check
      _
    $region22: #{model_forward.19} parent=5 // pred_check_branch
      %91 = sbr.rel (%p88) target = $region24
    $region23: #{model_forward.19} parent=5 // pred_region
      %s92 = ssub.s32 %s7, 1
      %p93 = scmp.lt.s32.totalorder %s12, 1
      %s94 = scalar_select %p93, %s12, 1
      %s95 = smul.addr %s94, 2
      %s96 = smul.addr %s95, 4
      %s97 = scalar_lea.vmem %s0, %s96
      %p98 = pneg %p33
      %p99 = pneg %p30
      %p100 = pneg %p59
      %p101 = pneg %p56
      %p102 = scmp.lt.s32.totalorder %s12, 1
      %s103 = scalar_select %p102, %s12, 1
      %s104 = smul.addr %s103, 2
      %s105 = smul.addr %s104, 4
      %s106 = scalar_lea.vmem %s1, %s105
      %p107 = scmp.lt.s32.totalorder %s12, 1
      %s108 = scalar_select %p107, %s12, 1
      %s109 = smul.addr %s108, 2
      %s110 = smul.addr %s109, 4
      %s111 = scalar_lea.vmem %s0, %s110
      %p112 = scmp.lt.s32.totalorder %s12, 1
      %s113 = scalar_select %p112, %s12, 1
      %s114 = smul.addr %s113, 2
      %s115 = smul.addr %s114, 4
      %s116 = scalar_lea.vmem %s1, %s115
      %v119 = vld [vmem:[%s111] sm:$0xf]
      %v120 = vld [vmem:[%s111 + $0x4] sm:$0xf]
      %v121 = vmul.bf16 %v119, 1052065461
      %v122 = vmul.bf16 %v120, 1052065461
      %v125 = vunpack.c.l.b16 %v121
      %v126 = vunpack.c.l.b16 %v122
      %v127 = vpack.c.b16 %v126, %v125
      %v130 = vunpack.c.l.b16 %v119
      %v131 = vunpack.c.l.b16 %v120
      %v132 = vpack.c.b16 %v131, %v130
      %133 = vrot.lane.b32.xlu0 %v132, 96
      %v134 = vpop.permute.xlu0 %133
      %vm135 = vcmask 64512
      %v137 = vsel %vm135, %v127, 0
      %v140 = vsel %vm135, %v134, 0
      %142 = vmatprep.subr.bf16.mxu0 0
      %143 = vmatpush1.bf16.xpose.msra.mxu0 %v140
      %144 = vmatprep.subr.bf16.mxu0 0
      %145 = vmatpush1.bf16.xpose.msra.mxu0 0
      %146 = vmatprep.subr.bf16.mxu0 0
      %147 = vmatpush1.bf16.xpose.msra.mxu0 0
      %148 = vmatprep.subr.bf16.mxu0 0
      %149 = vmatpush1.bf16.xpose.msra.mxu0 0
      %150 = vmatprep.subr.bf16.mxu0 0
      %151 = vmatpush1.bf16.xpose.msra.mxu0 0
      %152 = vmatprep.subr.bf16.mxu0 0
      %153 = vmatpush1.bf16.xpose.msra.mxu0 0
      %154 = vmatprep.subr.bf16.mxu0 0
      %155 = vmatpush1.bf16.xpose.msra.mxu0 0
      %156 = vmatprep.subr.bf16.mxu0 0
      %157 = vmatpush1.bf16.xpose.msra.mxu0 0
      %158 = vmatprep.subr.bf16.mxu0 0
      %159 = vmatpush1.bf16.xpose.msra.mxu0 0
      %160 = vmatprep.subr.bf16.mxu0 0
      %161 = vmatpush1.bf16.xpose.msra.mxu0 0
      %162 = vmatprep.subr.bf16.mxu0 0
      %163 = vmatpush1.bf16.xpose.msra.mxu0 0
      %164 = vmatprep.subr.bf16.mxu0 0
      %165 = vmatpush1.bf16.xpose.msra.mxu0 0
      %166 = vmatprep.subr.bf16.mxu0 0
      %167 = vmatpush1.bf16.xpose.msra.mxu0 0
      %168 = vmatprep.subr.bf16.mxu0 0
      %169 = vmatpush1.bf16.xpose.msra.mxu0 0
      %170 = vmatprep.subr.bf16.mxu0 0
      %171 = vmatpush1.bf16.xpose.msra.mxu0 0
      %172 = vmatprep.subr.bf16.mxu0 0
      %173 = vmatpush1.bf16.xpose.msra.mxu0 0
      %174 = vmatprep.mubr.bf16.mxu0 0
      %175 = vmatmul.mubr.bf16.gmra.mrb[0].mxu0 %v137
      %v176 = vpop.f32.mrb[0].mxu0
      %v177 = vadd.f32 0.0, %v176
      %v178 = vpop.f32.mrb[0].mxu0
      %v179 = vpop.f32.mrb[0].mxu0
      %v180 = vadd.f32 0.0, %v179
      %v181 = vpop.f32.mrb[0].mxu0
      %182 = vdwg.mxu0
      %vm183 = vcmask 130048
      %v184 = vsel %vm183, %v177, -inf
      %185 = vmax.xlane.f32.xlu0 %v184
      %v186 = vpop.xlane.xlu0 %185
      %v187 = vsel %vm183, %v180, -inf
      %188 = vmax.xlane.f32.xlu0 %v187
      %v189 = vpop.xlane.xlu0 %188
      %v190 = vsub.f32 %v177, %v186
      %v191 = vsub.f32 %v180, %v189
      %v192 = vmul.f32 %v190, 1.442695
      %v193 = vpow.pop %v192
      %v194 = vmul.f32 %v191, 1.442695
      %v195 = vpow.pop %v194
      %v196 = vsel %vm183, %v193, 0.0
      %197 = vadd.xlane.f32.xlu0 %v196
      %v198 = vpop.xlane.xlu0 %197
      %v199 = vsel %vm183, %v195, 0.0
      %200 = vadd.xlane.f32.xlu0 %v199
      %v201 = vpop.xlane.xlu0 %200
      %v202 = vrcp.pop %v198
      %v203 = vrcp.pop %v201
      %v204 = vmul.f32 %v193, %v202
      %v205 = vmul.f32 %v195, %v203
      %v206 = vpack.c.bf16 %v205, %v204
      %207 = vrot.lane.b32.xlu0 %v132, 64
      %v208 = vpop.permute.xlu0 %207
      %v211 = vsel %vm183, %v206, 0
      %213 = vmatprep.subr.bf16.mxu0 0
      %214 = vmatpush1.bf16.msra.mxu0 %v208
      %215 = vmatprep.subr.bf16.mxu0 0
      %216 = vmatpush1.bf16.msra.mxu0 0
      %217 = vmatprep.subr.bf16.mxu0 0
      %218 = vmatpush1.bf16.msra.mxu0 0
      %219 = vmatprep.subr.bf16.mxu0 0
      %220 = vmatpush1.bf16.msra.mxu0 0
      %221 = vmatprep.subr.bf16.mxu0 0
      %222 = vmatpush1.bf16.msra.mxu0 0
      %223 = vmatprep.subr.bf16.mxu0 0
      %224 = vmatpush1.bf16.msra.mxu0 0
      %225 = vmatprep.subr.bf16.mxu0 0
      %226 = vmatpush1.bf16.msra.mxu0 0
      %227 = vmatprep.subr.bf16.mxu0 0
      %228 = vmatpush1.bf16.msra.mxu0 0
      %229 = vmatprep.subr.bf16.mxu0 0
      %230 = vmatpush1.bf16.msra.mxu0 0
      %231 = vmatprep.subr.bf16.mxu0 0
      %232 = vmatpush1.bf16.msra.mxu0 0
      %233 = vmatprep.subr.bf16.mxu0 0
      %234 = vmatpush1.bf16.msra.mxu0 0
      %235 = vmatprep.subr.bf16.mxu0 0
      %236 = vmatpush1.bf16.msra.mxu0 0
      %237 = vmatprep.subr.bf16.mxu0 0
      %238 = vmatpush1.bf16.msra.mxu0 0
      %239 = vmatprep.subr.bf16.mxu0 0
      %240 = vmatpush1.bf16.msra.mxu0 0
      %241 = vmatprep.subr.bf16.mxu0 0
      %242 = vmatpush1.bf16.msra.mxu0 0
      %243 = vmatprep.subr.bf16.mxu0 0
      %244 = vmatpush1.bf16.msra.mxu0 0
      %245 = vmatprep.mubr.bf16.mxu0 0
      %246 = vmatmul.mubr.bf16.gmra.mrb[0].mxu0 %v211
      %v247 = vpop.f32.mrb[0].mxu0
      %v248 = vadd.f32 0.0, %v247
      %v249 = vpop.f32.mrb[0].mxu0
      %v250 = vpop.f32.mrb[0].mxu0
      %v251 = vadd.f32 0.0, %v250
      %v252 = vpop.f32.mrb[0].mxu0
      %253 = vdwg.mxu0
      %v254 = vpack.c.bf16 %v251, %v248
      %v256 = vunpack.c.l.b16 %v254
      %v257 = vunpack.c.h.b16 %v254
      %v258 = vpack.c.b16 %v256, %v256
      %v259 = vpack.c.b16 %v257, %v257
      %vm262 = vcmask 60416
      %263 = vst.msk [vmem:[%s116] sm:$0xf] %vm262, %v258
      %264 = vst.msk [vmem:[%s116 + $0x4] sm:$0xf] %vm262, %v259
      %265 = vrot.lane.b32.xlu0 %v127, 120
      %v266 = vpop.permute.xlu0 %265
      %267 = vrot.lane.b32.xlu0 %v132, 88
      %v268 = vpop.permute.xlu0 %267
      %v270 = vsel %vm135, %v266, 0
      %v273 = vsel %vm135, %v268, 0
      %275 = vmatprep.subr.bf16.mxu0 0
      %276 = vmatpush1.bf16.xpose.msra.mxu0 %v273
      %277 = vmatprep.subr.bf16.mxu0 0
      %278 = vmatpush1.bf16.xpose.msra.mxu0 0
      %279 = vmatprep.subr.bf16.mxu0 0
      %280 = vmatpush1.bf16.xpose.msra.mxu0 0
      %281 = vmatprep.subr.bf16.mxu0 0
      %282 = vmatpush1.bf16.xpose.msra.mxu0 0
      %283 = vmatprep.subr.bf16.mxu0 0
      %284 = vmatpush1.bf16.xpose.msra.mxu0 0
      %285 = vmatprep.subr.bf16.mxu0 0
      %286 = vmatpush1.bf16.xpose.msra.mxu0 0
      %287 = vmatprep.subr.bf16.mxu0 0
      %288 = vmatpush1.bf16.xpose.msra.mxu0 0
      %289 = vmatprep.subr.bf16.mxu0 0
      %290 = vmatpush1.bf16.xpose.msra.mxu0 0
      %291 = vmatprep.subr.bf16.mxu0 0
      %292 = vmatpush1.bf16.xpose.msra.mxu0 0
      %293 = vmatprep.subr.bf16.mxu0 0
      %294 = vmatpush1.bf16.xpose.msra.mxu0 0
      %295 = vmatprep.subr.bf16.mxu0 0
      %296 = vmatpush1.bf16.xpose.msra.mxu0 0
      %297 = vmatprep.subr.bf16.mxu0 0
      %298 = vmatpush1.bf16.xpose.msra.mxu0 0
      %299 = vmatprep.subr.bf16.mxu0 0
      %300 = vmatpush1.bf16.xpose.msra.mxu0 0
      %301 = vmatprep.subr.bf16.mxu0 0
      %302 = vmatpush1.bf16.xpose.msra.mxu0 0
      %303 = vmatprep.subr.bf16.mxu0 0
      %304 = vmatpush1.bf16.xpose.msra.mxu0 0
      %305 = vmatprep.subr.bf16.mxu0 0
      %306 = vmatpush1.bf16.xpose.msra.mxu0 0
      %307 = vmatprep.mubr.bf16.mxu0 0
      %308 = vmatmul.mubr.bf16.gmra.mrb[0].mxu0 %v270
      %v309 = vpop.f32.mrb[0].mxu0
      %v310 = vadd.f32 0.0, %v309
      %v311 = vpop.f32.mrb[0].mxu0
      %v312 = vpop.f32.mrb[0].mxu0
      %v313 = vadd.f32 0.0, %v312
      %v314 = vpop.f32.mrb[0].mxu0
      %315 = vdwg.mxu0
      %v316 = vsel %vm183, %v310, -inf
      %317 = vmax.xlane.f32.xlu0 %v316
      %v318 = vpop.xlane.xlu0 %317
      %v319 = vsel %vm183, %v313, -inf
      %320 = vmax.xlane.f32.xlu0 %v319
      %v321 = vpop.xlane.xlu0 %320
      %v322 = vsub.f32 %v310, %v318
      %v323 = vsub.f32 %v313, %v321
      %v324 = vmul.f32 %v322, 1.442695
      %v325 = vpow.pop %v324
      %v326 = vmul.f32 %v323, 1.442695
      %v327 = vpow.pop %v326
      %v328 = vsel %vm183, %v325, 0.0
      %329 = vadd.xlane.f32.xlu0 %v328
      %v330 = vpop.xlane.xlu0 %329
      %v331 = vsel %vm183, %v327, 0.0
      %332 = vadd.xlane.f32.xlu0 %v331
      %v333 = vpop.xlane.xlu0 %332
      %v334 = vrcp.pop %v330
      %v335 = vrcp.pop %v333
      %v336 = vmul.f32 %v325, %v334
      %v337 = vmul.f32 %v327, %v335
      %v338 = vpack.c.bf16 %v337, %v336
      %339 = vrot.lane.b32.xlu0 %v132, 56
      %v340 = vpop.permute.xlu0 %339
      %v343 = vsel %vm183, %v338, 0
      %345 = vmatprep.subr.bf16.mxu0 0
      %346 = vmatpush1.bf16.msra.mxu0 %v340
      %347 = vmatprep.subr.bf16.mxu0 0
      %348 = vmatpush1.bf16.msra.mxu0 0
      %349 = vmatprep.subr.bf16.mxu0 0
      %350 = vmatpush1.bf16.msra.mxu0 0
      %351 = vmatprep.subr.bf16.mxu0 0
      %352 = vmatpush1.bf16.msra.mxu0 0
      %353 = vmatprep.subr.bf16.mxu0 0
      %354 = vmatpush1.bf16.msra.mxu0 0
      %355 = vmatprep.subr.bf16.mxu0 0
      %356 = vmatpush1.bf16.msra.mxu0 0
      %357 = vmatprep.subr.bf16.mxu0 0
      %358 = vmatpush1.bf16.msra.mxu0 0
      %359 = vmatprep.subr.bf16.mxu0 0
      %360 = vmatpush1.bf16.msra.mxu0 0
      %361 = vmatprep.subr.bf16.mxu0 0
      %362 = vmatpush1.bf16.msra.mxu0 0
      %363 = vmatprep.subr.bf16.mxu0 0
      %364 = vmatpush1.bf16.msra.mxu0 0
      %365 = vmatprep.subr.bf16.mxu0 0
      %366 = vmatpush1.bf16.msra.mxu0 0
      %367 = vmatprep.subr.bf16.mxu0 0
      %368 = vmatpush1.bf16.msra.mxu0 0
      %369 = vmatprep.subr.bf16.mxu0 0
      %370 = vmatpush1.bf16.msra.mxu0 0
      %371 = vmatprep.subr.bf16.mxu0 0
      %372 = vmatpush1.bf16.msra.mxu0 0
      %373 = vmatprep.subr.bf16.mxu0 0
      %374 = vmatpush1.bf16.msra.mxu0 0
      %375 = vmatprep.subr.bf16.mxu0 0
      %376 = vmatpush1.bf16.msra.mxu0 0
      %377 = vmatprep.mubr.bf16.mxu0 0
      %378 = vmatmul.mubr.bf16.gmra.mrb[0].mxu0 %v343
      %v379 = vpop.f32.mrb[0].mxu0
      %v380 = vadd.f32 0.0, %v379
      %v381 = vpop.f32.mrb[0].mxu0
      %v382 = vpop.f32.mrb[0].mxu0
      %v383 = vadd.f32 0.0, %v382
      %v384 = vpop.f32.mrb[0].mxu0
      %385 = vdwg.mxu0
      %v386 = vpack.c.bf16 %v383, %v380
      %v388 = vunpack.c.l.b16 %v386
      %v389 = vunpack.c.h.b16 %v386
      %v390 = vpack.c.b16 %v388, %v388
      %v391 = vpack.c.b16 %v389, %v389
      %392 = vrot.lane.b32.xlu0 %v390, 8
      %v393 = vpop.permute.xlu0 %392
      %394 = vrot.lane.b32.xlu0 %v391, 8
      %v395 = vpop.permute.xlu0 %394
      %vm398 = vcmask 126016
      %399 = vst.msk [vmem:[%s116] sm:$0xf] %vm398, %v393
      %400 = vst.msk [vmem:[%s116 + $0x4] sm:$0xf] %vm398, %v395
      %401 = vrot.lane.b32.xlu0 %v127, 112
      %v402 = vpop.permute.xlu0 %401
      %403 = vrot.lane.b32.xlu0 %v132, 80
      %v404 = vpop.permute.xlu0 %403
      %v406 = vsel %vm135, %v402, 0
      %v409 = vsel %vm135, %v404, 0
      %411 = vmatprep.subr.bf16.mxu0 0
      %412 = vmatpush1.bf16.xpose.msra.mxu0 %v409
      %413 = vmatprep.subr.bf16.mxu0 0
      %414 = vmatpush1.bf16.xpose.msra.mxu0 0
      %415 = vmatprep.subr.bf16.mxu0 0
      %416 = vmatpush1.bf16.xpose.msra.mxu0 0
      %417 = vmatprep.subr.bf16.mxu0 0
      %418 = vmatpush1.bf16.xpose.msra.mxu0 0
      %419 = vmatprep.subr.bf16.mxu0 0
      %420 = vmatpush1.bf16.xpose.msra.mxu0 0
      %421 = vmatprep.subr.bf16.mxu0 0
      %422 = vmatpush1.bf16.xpose.msra.mxu0 0
      %423 = vmatprep.subr.bf16.mxu0 0
      %424 = vmatpush1.bf16.xpose.msra.mxu0 0
      %425 = vmatprep.subr.bf16.mxu0 0
      %426 = vmatpush1.bf16.xpose.msra.mxu0 0
      %427 = vmatprep.subr.bf16.mxu0 0
      %428 = vmatpush1.bf16.xpose.msra.mxu0 0
      %429 = vmatprep.subr.bf16.mxu0 0
      %430 = vmatpush1.bf16.xpose.msra.mxu0 0
      %431 = vmatprep.subr.bf16.mxu0 0
      %432 = vmatpush1.bf16.xpose.msra.mxu0 0
      %433 = vmatprep.subr.bf16.mxu0 0
      %434 = vmatpush1.bf16.xpose.msra.mxu0 0
      %435 = vmatprep.subr.bf16.mxu0 0
      %436 = vmatpush1.bf16.xpose.msra.mxu0 0
      %437 = vmatprep.subr.bf16.mxu0 0
      %438 = vmatpush1.bf16.xpose.msra.mxu0 0
      %439 = vmatprep.subr.bf16.mxu0 0
      %440 = vmatpush1.bf16.xpose.msra.mxu0 0
      %441 = vmatprep.subr.bf16.mxu0 0
      %442 = vmatpush1.bf16.xpose.msra.mxu0 0
      %443 = vmatprep.mubr.bf16.mxu0 0
      %444 = vmatmul.mubr.bf16.gmra.mrb[0].mxu0 %v406
      %v445 = vpop.f32.mrb[0].mxu0
      %v446 = vadd.f32 0.0, %v445
      %v447 = vpop.f32.mrb[0].mxu0
      %v448 = vpop.f32.mrb[0].mxu0
      %v449 = vadd.f32 0.0, %v448
      %v450 = vpop.f32.mrb[0].mxu0
      %451 = vdwg.mxu0
      %v452 = vsel %vm183, %v446, -inf
      %453 = vmax.xlane.f32.xlu0 %v452
      %v454 = vpop.xlane.xlu0 %453
      %v455 = vsel %vm183, %v449, -inf
      %456 = vmax.xlane.f32.xlu0 %v455
      %v457 = vpop.xlane.xlu0 %456
      %v458 = vsub.f32 %v446, %v454
      %v459 = vsub.f32 %v449, %v457
      %v460 = vmul.f32 %v458, 1.442695
      %v461 = vpow.pop %v460
      %v462 = vmul.f32 %v459, 1.442695
      %v463 = vpow.pop %v462
      %v464 = vsel %vm183, %v461, 0.0
      %465 = vadd.xlane.f32.xlu0 %v464
      %v466 = vpop.xlane.xlu0 %465
      %v467 = vsel %vm183, %v463, 0.0
      %468 = vadd.xlane.f32.xlu0 %v467
      %v469 = vpop.xlane.xlu0 %468
      %v470 = vrcp.pop %v466
      %v471 = vrcp.pop %v469
      %v472 = vmul.f32 %v461, %v470
      %v473 = vmul.f32 %v463, %v471
      %v474 = vpack.c.bf16 %v473, %v472
      %475 = vrot.lane.b32.xlu0 %v132, 48
      %v476 = vpop.permute.xlu0 %475
      %v479 = vsel %vm183, %v474, 0
      %481 = vmatprep.subr.bf16.mxu0 0
      %482 = vmatpush1.bf16.msra.mxu0 %v476
      %483 = vmatprep.subr.bf16.mxu0 0
      %484 = vmatpush1.bf16.msra.mxu0 0
      %485 = vmatprep.subr.bf16.mxu0 0
      %486 = vmatpush1.bf16.msra.mxu0 0
      %487 = vmatprep.subr.bf16.mxu0 0
      %488 = vmatpush1.bf16.msra.mxu0 0
      %489 = vmatprep.subr.bf16.mxu0 0
      %490 = vmatpush1.bf16.msra.mxu0 0
      %491 = vmatprep.subr.bf16.mxu0 0
      %492 = vmatpush1.bf16.msra.mxu0 0
      %493 = vmatprep.subr.bf16.mxu0 0
      %494 = vmatpush1.bf16.msra.mxu0 0
      %495 = vmatprep.subr.bf16.mxu0 0
      %496 = vmatpush1.bf16.msra.mxu0 0
      %497 = vmatprep.subr.bf16.mxu0 0
      %498 = vmatpush1.bf16.msra.mxu0 0
      %499 = vmatprep.subr.bf16.mxu0 0
      %500 = vmatpush1.bf16.msra.mxu0 0
      %501 = vmatprep.subr.bf16.mxu0 0
      %502 = vmatpush1.bf16.msra.mxu0 0
      %503 = vmatprep.subr.bf16.mxu0 0
      %504 = vmatpush1.bf16.msra.mxu0 0
      %505 = vmatprep.subr.bf16.mxu0 0
      %506 = vmatpush1.bf16.msra.mxu0 0
      %507 = vmatprep.subr.bf16.mxu0 0
      %508 = vmatpush1.bf16.msra.mxu0 0
      %509 = vmatprep.subr.bf16.mxu0 0
      %510 = vmatpush1.bf16.msra.mxu0 0
      %511 = vmatprep.subr.bf16.mxu0 0
      %512 = vmatpush1.bf16.msra.mxu0 0
      %513 = vmatprep.mubr.bf16.mxu0 0
      %514 = vmatmul.mubr.bf16.gmra.mrb[0].mxu0 %v479
      %v515 = vpop.f32.mrb[0].mxu0
      %v516 = vadd.f32 0.0, %v515
      %v517 = vpop.f32.mrb[0].mxu0
      %v518 = vpop.f32.mrb[0].mxu0
      %v519 = vadd.f32 0.0, %v518
      %v520 = vpop.f32.mrb[0].mxu0
      %521 = vdwg.mxu0
      %v522 = vpack.c.bf16 %v519, %v516
      %v524 = vunpack.c.l.b16 %v522
      %v525 = vunpack.c.h.b16 %v522
      %v526 = vpack.c.b16 %v524, %v524
      %v527 = vpack.c.b16 %v525, %v525
      %528 = vrot.lane.b32.xlu0 %v526, 16
      %v529 = vpop.permute.xlu0 %528
      %530 = vrot.lane.b32.xlu0 %v527, 16
      %v531 = vpop.permute.xlu0 %530
      %vm534 = vcmask 191616
      %535 = vst.msk [vmem:[%s116] sm:$0xf] %vm534, %v529
      %536 = vst.msk [vmem:[%s116 + $0x4] sm:$0xf] %vm534, %v531
      %537 = vrot.lane.b32.xlu0 %v127, 104
      %v538 = vpop.permute.xlu0 %537
      %539 = vrot.lane.b32.xlu0 %v132, 72
      %v540 = vpop.permute.xlu0 %539
      %v542 = vsel %vm135, %v538, 0
      %v545 = vsel %vm135, %v540, 0
      %547 = vmatprep.subr.bf16.mxu0 0
      %548 = vmatpush1.bf16.xpose.msra.mxu0 %v545
      %549 = vmatprep.subr.bf16.mxu0 0
      %550 = vmatpush1.bf16.xpose.msra.mxu0 0
      %551 = vmatprep.subr.bf16.mxu0 0
      %552 = vmatpush1.bf16.xpose.msra.mxu0 0
      %553 = vmatprep.subr.bf16.mxu0 0
      %554 = vmatpush1.bf16.xpose.msra.mxu0 0
      %555 = vmatprep.subr.bf16.mxu0 0
      %556 = vmatpush1.bf16.xpose.msra.mxu0 0
      %557 = vmatprep.subr.bf16.mxu0 0
      %558 = vmatpush1.bf16.xpose.msra.mxu0 0
      %559 = vmatprep.subr.bf16.mxu0 0
      %560 = vmatpush1.bf16.xpose.msra.mxu0 0
      %561 = vmatprep.subr.bf16.mxu0 0
      %562 = vmatpush1.bf16.xpose.msra.mxu0 0
      %563 = vmatprep.subr.bf16.mxu0 0
      %564 = vmatpush1.bf16.xpose.msra.mxu0 0
      %565 = vmatprep.subr.bf16.mxu0 0
      %566 = vmatpush1.bf16.xpose.msra.mxu0 0
      %567 = vmatprep.subr.bf16.mxu0 0
      %568 = vmatpush1.bf16.xpose.msra.mxu0 0
      %569 = vmatprep.subr.bf16.mxu0 0
      %570 = vmatpush1.bf16.xpose.msra.mxu0 0
      %571 = vmatprep.subr.bf16.mxu0 0
      %572 = vmatpush1.bf16.xpose.msra.mxu0 0
      %573 = vmatprep.subr.bf16.mxu0 0
      %574 = vmatpush1.bf16.xpose.msra.mxu0 0
      %575 = vmatprep.subr.bf16.mxu0 0
      %576 = vmatpush1.bf16.xpose.msra.mxu0 0
      %577 = vmatprep.subr.bf16.mxu0 0
      %578 = vmatpush1.bf16.xpose.msra.mxu0 0
      %579 = vmatprep.mubr.bf16.mxu0 0
      %580 = vmatmul.mubr.bf16.gmra.mrb[0].mxu0 %v542
      %v581 = vpop.f32.mrb[0].mxu0
      %v582 = vadd.f32 0.0, %v581
      %v583 = vpop.f32.mrb[0].mxu0
      %v584 = vpop.f32.mrb[0].mxu0
      %v585 = vadd.f32 0.0, %v584
      %v586 = vpop.f32.mrb[0].mxu0
      %587 = vdwg.mxu0
      %v588 = vsel %vm183, %v582, -inf
      %589 = vmax.xlane.f32.xlu0 %v588
      %v590 = vpop.xlane.xlu0 %589
      %v591 = vsel %vm183, %v585, -inf
      %592 = vmax.xlane.f32.xlu0 %v591
      %v593 = vpop.xlane.xlu0 %592
      %v594 = vsub.f32 %v582, %v590
      %v595 = vsub.f32 %v585, %v593
      %v596 = vmul.f32 %v594, 1.442695
      %v597 = vpow.pop %v596
      %v598 = vmul.f32 %v595, 1.442695
      %v599 = vpow.pop %v598
      %v600 = vsel %vm183, %v597, 0.0
      %601 = vadd.xlane.f32.xlu0 %v600
      %v602 = vpop.xlane.xlu0 %601
      %v603 = vsel %vm183, %v599, 0.0
      %604 = vadd.xlane.f32.xlu0 %v603
      %v605 = vpop.xlane.xlu0 %604
      %v606 = vrcp.pop %v602
      %v607 = vrcp.pop %v605
      %v608 = vmul.f32 %v597, %v606
      %v609 = vmul.f32 %v599, %v607
      %v610 = vpack.c.bf16 %v609, %v608
      %611 = vrot.lane.b32.xlu0 %v132, 40
      %v612 = vpop.permute.xlu0 %611
      %v615 = vsel %vm183, %v610, 0
      %617 = vmatprep.subr.bf16.mxu0 0
      %618 = vmatpush1.bf16.msra.mxu0 %v612
      %619 = vmatprep.subr.bf16.mxu0 0
      %620 = vmatpush1.bf16.msra.mxu0 0
      %621 = vmatprep.subr.bf16.mxu0 0
      %622 = vmatpush1.bf16.msra.mxu0 0
      %623 = vmatprep.subr.bf16.mxu0 0
      %624 = vmatpush1.bf16.msra.mxu0 0
      %625 = vmatprep.subr.bf16.mxu0 0
      %626 = vmatpush1.bf16.msra.mxu0 0
      %627 = vmatprep.subr.bf16.mxu0 0
      %628 = vmatpush1.bf16.msra.mxu0 0
      %629 = vmatprep.subr.bf16.mxu0 0
      %630 = vmatpush1.bf16.msra.mxu0 0
      %631 = vmatprep.subr.bf16.mxu0 0
      %632 = vmatpush1.bf16.msra.mxu0 0
      %633 = vmatprep.subr.bf16.mxu0 0
      %634 = vmatpush1.bf16.msra.mxu0 0
      %635 = vmatprep.subr.bf16.mxu0 0
      %636 = vmatpush1.bf16.msra.mxu0 0
      %637 = vmatprep.subr.bf16.mxu0 0
      %638 = vmatpush1.bf16.msra.mxu0 0
      %639 = vmatprep.subr.bf16.mxu0 0
      %640 = vmatpush1.bf16.msra.mxu0 0
      %641 = vmatprep.subr.bf16.mxu0 0
      %642 = vmatpush1.bf16.msra.mxu0 0
      %643 = vmatprep.subr.bf16.mxu0 0
      %644 = vmatpush1.bf16.msra.mxu0 0
      %645 = vmatprep.subr.bf16.mxu0 0
      %646 = vmatpush1.bf16.msra.mxu0 0
      %647 = vmatprep.subr.bf16.mxu0 0
      %648 = vmatpush1.bf16.msra.mxu0 0
      %649 = vmatprep.mubr.bf16.mxu0 0
      %650 = vmatmul.mubr.bf16.gmra.mrb[0].mxu0 %v615
      %v651 = vpop.f32.mrb[0].mxu0
      %v652 = vadd.f32 0.0, %v651
      %v653 = vpop.f32.mrb[0].mxu0
      %v654 = vpop.f32.mrb[0].mxu0
      %v655 = vadd.f32 0.0, %v654
      %v656 = vpop.f32.mrb[0].mxu0
      %657 = vdwg.mxu0
      %v658 = vpack.c.bf16 %v655, %v652
      %v660 = vunpack.c.l.b16 %v658
      %v661 = vunpack.c.h.b16 %v658
      %v662 = vpack.c.b16 %v660, %v660
      %v663 = vpack.c.b16 %v661, %v661
      %664 = vrot.lane.b32.xlu0 %v662, 24
      %v665 = vpop.permute.xlu0 %664
      %666 = vrot.lane.b32.xlu0 %v663, 24
      %v667 = vpop.permute.xlu0 %666
      %vm670 = vcmask 257216
      %671 = vst.msk [vmem:[%s116] sm:$0xf] %vm670, %v665
      %672 = vst.msk [vmem:[%s116 + $0x4] sm:$0xf] %vm670, %v667
      %p673 = scmp.lt.s32.totalorder %s12, 1
      %s674 = scalar_select %p673, %s12, 1
      %s675 = smul.addr %s674, 2
      %s676 = smul.addr %s675, 4
      %s677 = scalar_lea.vmem %s1, %s676
      // Predicated region
      $region25: #{model_forward.19} parent=23 // pred_check
        %p678 = pneg %p56
      $region26: #{model_forward.19} parent=23 // pred_check_branch
        %680 = sbr.rel (%p678) target = $region28
      $region27: #{model_forward.19} parent=23 // pred_region
        _
      $region28: #{model_forward.19} parent=23 // pred_fallthru
        _
    $region24: #{model_forward.19} parent=5 // pred_fallthru
      _
    %p681 = scmp.le.s32.totalorder 2, %s7
    // Predicated region
    $region29: #{model_forward.19} parent=5 // pred_check
      %p682 = pneg %p681
    $region30: #{model_forward.19} parent=5 // pred_check_branch
      %684 = sbr.rel (%p682) target = $region32
    $region31: #{model_forward.19} parent=5 // pred_region
      %s685 = ssub.s32 %s7, 2
      // Predicated region
      $region33: #{model_forward.19} parent=31 // pred_check
        %p686 = pneg %p62
      $region34: #{model_forward.19} parent=31 // pred_check_branch
        %688 = sbr.rel (%p686) target = $region36
      $region35: #{model_forward.19} parent=31 // pred_region
        %p689 = scmp.lt.s32.totalorder %s13, 1
        %s690 = scalar_select %p689, %s13, 1
        %s691 = smul.addr %s690, 2
        %s692 = smul.addr %s691, 4
        %s693 = scalar_lea.vmem %s1, %s692
      $region36: #{model_forward.19} parent=31 // pred_fallthru
        _
    $region32: #{model_forward.19} parent=5 // pred_fallthru
      _
  $region6: #{model_forward.19} parent=0 // loop_footer
    %s11 = sadd.s32 1, %s7
  $region7: #{model_forward.19} parent=0 // loop_footer_branch
    %6 = sbr.rel target = $region3
  $region8: #{model_forward.19} parent=0 // loop_exit
    _

// kernel: model_forward.21
$region0: #{model_forward.21}
  #allocation0 [shape = 'u32[]', space=smem, size = 0x4, offset = 0x4, fixed_abs, tag = 'smem constant byte address 0x4 - core index']
  #allocation1 [shape = 'u32[144,128]{1,0:T(1,128)}', space=vmem, size = 0x12000, scoped, tag = 'internal scratch']
  %s0 = inlined_call_operand.vmem [shape: bf16[32,32], index: 0, kind: input, shape index: {}]
  %s1 = inlined_call_operand.vmem [shape: f32[1,32], index: 1, kind: input, shape index: {}]
  %s2 = inlined_call_operand.vmem [shape: f32[1,32], index: 2, kind: input, shape index: {}]
  %s3 = inlined_call_operand.vmem [shape: bf16[32,32], index: 3, kind: input, shape index: {}]
  %s4 = inlined_call_operand.vmem [shape: f32[1,32], index: 4, kind: input, shape index: {}]
  %s5 = inlined_call_operand.vmem [shape: bf16[32,32], index: 5, kind: output, shape index: {}]
  %s6 = sld [smem:[#allocation0]]
  $region30: #{model_forward.21} parent=0
    _
  %s8 = ssub.s32 1, %s6
  %s9 = scalar_select 0, %s8, %s6
  // Predicated region
  $region2: #{model_forward.21} parent=0 // pred_check
    _
  $region3: #{model_forward.21} parent=0 // pred_check_branch
    %11 = sbr.rel (0) target = $region5
  $region4: #{model_forward.21} parent=0 // pred_region
    _
  $region5: #{model_forward.21} parent=0 // pred_fallthru
    _
  // Predicated region
  $region6: #{model_forward.21} parent=0 // pred_check
    _
  $region7: #{model_forward.21} parent=0 // pred_check_branch
    %13 = sbr.rel (0) target = $region9
  $region8: #{model_forward.21} parent=0 // pred_region
    _
  $region9: #{model_forward.21} parent=0 // pred_fallthru
    _
  // Predicated region
  $region10: #{model_forward.21} parent=0 // pred_check
    _
  $region11: #{model_forward.21} parent=0 // pred_check_branch
    %15 = sbr.rel (0) target = $region13
  $region12: #{model_forward.21} parent=0 // pred_region
    _
  $region13: #{model_forward.21} parent=0 // pred_fallthru
    _
  // Predicated region
  $region14: #{model_forward.21} parent=0 // pred_check
    _
  $region15: #{model_forward.21} parent=0 // pred_check_branch
    %17 = sbr.rel (0) target = $region17
  $region16: #{model_forward.21} parent=0 // pred_region
    _
  $region17: #{model_forward.21} parent=0 // pred_fallthru
    _
  // Predicated region
  $region18: #{model_forward.21} parent=0 // pred_check
    _
  $region19: #{model_forward.21} parent=0 // pred_check_branch
    %19 = sbr.rel (0) target = $region21
  $region20: #{model_forward.21} parent=0 // pred_region
    _
  $region21: #{model_forward.21} parent=0 // pred_fallthru
    _
  %v21 = vld [vmem:[%s0] sm:$0xf]
  %v22 = vld [vmem:[%s0 + $0x4] sm:$0xf]
  %v23 = vld [vmem:[%s0 + $0x8] sm:$0xf]
  %v24 = vld [vmem:[%s0 + $0xc] sm:$0xf]
  %v25 = vunpack.c.l.bf16 %v21
  %v26 = vunpack.c.l.bf16 %v22
  %v27 = vunpack.c.l.bf16 %v23
  %v28 = vunpack.c.l.bf16 %v24
  %vm29 = vcmask 261120
  %v30 = vsel %vm29, %v25, 0.0
  %31 = vadd.xlane.f32.xlu0 %v30
  %v32 = vpop.xlane.xlu0 %31
  %v33 = vsel %vm29, %v26, 0.0
  %34 = vadd.xlane.f32.xlu0 %v33
  %v35 = vpop.xlane.xlu0 %34
  %v36 = vsel %vm29, %v27, 0.0
  %37 = vadd.xlane.f32.xlu0 %v36
  %v38 = vpop.xlane.xlu0 %37
  %v39 = vsel %vm29, %v28, 0.0
  %40 = vadd.xlane.f32.xlu0 %v39
  %v41 = vpop.xlane.xlu0 %40
  %v42 = vrcp.pop 32.0
  %v43 = vmul.f32 %v32, %v42
  %v44 = vmul.f32 %v35, %v42
  %v45 = vmul.f32 %v38, %v42
  %v46 = vmul.f32 %v41, %v42
  %v47 = vsub.f32 %v25, %v43
  %v48 = vsub.f32 %v26, %v44
  %v49 = vsub.f32 %v27, %v45
  %v50 = vsub.f32 %v28, %v46
  %v51 = vmul.f32 %v47, %v47
  %v52 = vmul.f32 %v48, %v48
  %v53 = vmul.f32 %v49, %v49
  %v54 = vmul.f32 %v50, %v50
  %v55 = vsel %vm29, %v51, 0.0
  %56 = vadd.xlane.f32.xlu0 %v55
  %v57 = vpop.xlane.xlu0 %56
  %v58 = vsel %vm29, %v52, 0.0
  %59 = vadd.xlane.f32.xlu0 %v58
  %v60 = vpop.xlane.xlu0 %59
  %v61 = vsel %vm29, %v53, 0.0
  %62 = vadd.xlane.f32.xlu0 %v61
  %v63 = vpop.xlane.xlu0 %62
  %v64 = vsel %vm29, %v54, 0.0
  %65 = vadd.xlane.f32.xlu0 %v64
  %v66 = vpop.xlane.xlu0 %65
  %v67 = vmul.f32 %v57, %v42
  %v68 = vmul.f32 %v60, %v42
  %v69 = vmul.f32 %v63, %v42
  %v70 = vmul.f32 %v66, %v42
  %v71 = vadd.f32 %v67, 1e-05
  %v72 = vadd.f32 %v68, 1e-05
  %v73 = vadd.f32 %v69, 1e-05
  %v74 = vadd.f32 %v70, 1e-05
  %v75 = vrsqrt.pop %v71
  %v76 = vrsqrt.pop %v72
  %v77 = vrsqrt.pop %v73
  %v78 = vrsqrt.pop %v74
  %v79 = vmul.f32 %v47, %v75
  %v80 = vmul.f32 %v48, %v76
  %v81 = vmul.f32 %v49, %v77
  %v82 = vmul.f32 %v50, %v78
  %v83 = vld [vmem:[%s1] sm:$0x1]
  %v85 = vlaneseq
  %v86 = vshrl.u32 %v85, 7
  %v87 = vsub.s32 0, %v86
  %v88 = vrot.slane %v83, %v87
  %v90 = vmul.f32 %v79, %v88
  %v91 = vmul.f32 %v80, %v88
  %v92 = vmul.f32 %v81, %v88
  %v93 = vmul.f32 %v82, %v88
  %v94 = vld [vmem:[%s2] sm:$0x1]
  %v96 = vlaneseq
  %v97 = vshrl.u32 %v96, 7
  %v98 = vsub.s32 0, %v97
  %v99 = vrot.slane %v94, %v98
  %v101 = vadd.f32 %v90, %v99
  %v102 = vadd.f32 %v91, %v99
  %v103 = vadd.f32 %v92, %v99
  %v104 = vadd.f32 %v93, %v99
  %v105 = vpack.c.bf16 %v102, %v101
  %v106 = vpack.c.bf16 %v104, %v103
  %v107 = vld [vmem:[%s3] sm:$0xf]
  %v108 = vld [vmem:[%s3 + $0x4] sm:$0xf]
  %v109 = vld [vmem:[%s3 + $0x8] sm:$0xf]
  %v110 = vld [vmem:[%s3 + $0xc] sm:$0xf]
  %v111 = vld [vmem:[%s4] sm:$0x1]
  %v113 = vlaneseq
  %v114 = vshrl.u32 %v113, 7
  %v115 = vsub.s32 0, %v114
  %v116 = vrot.slane %v111, %v115
  %v122 = vunpack.c.l.b16 %v107
  %v123 = vunpack.c.l.b16 %v108
  %v124 = vunpack.c.l.b16 %v109
  %v125 = vunpack.c.l.b16 %v110
  %v126 = vpack.c.b16 %v123, %v122
  %v127 = vpack.c.b16 %v125, %v124
  %v131 = vsel %vm29, %v105, 0
  %v134 = vsel %vm29, %v106, 0
  %136 = vmatprep.subr.bf16.mxu0 0
  %137 = vmatpush1.bf16.msra.mxu0 %v126
  %138 = vmatprep.subr.bf16.mxu0 0
  %139 = vmatpush1.bf16.msra.mxu0 %v127
  %140 = vmatprep.subr.bf16.mxu0 0
  %141 = vmatpush1.bf16.msra.mxu0 0
  %142 = vmatprep.subr.bf16.mxu0 0
  %143 = vmatpush1.bf16.msra.mxu0 0
  %144 = vmatprep.subr.bf16.mxu0 0
  %145 = vmatpush1.bf16.msra.mxu0 0
  %146 = vmatprep.subr.bf16.mxu0 0
  %147 = vmatpush1.bf16.msra.mxu0 0
  %148 = vmatprep.subr.bf16.mxu0 0
  %149 = vmatpush1.bf16.msra.mxu0 0
  %150 = vmatprep.subr.bf16.mxu0 0
  %151 = vmatpush1.bf16.msra.mxu0 0
  %152 = vmatprep.subr.bf16.mxu0 0
  %153 = vmatpush1.bf16.msra.mxu0 0
  %154 = vmatprep.subr.bf16.mxu0 0
  %155 = vmatpush1.bf16.msra.mxu0 0
  %156 = vmatprep.subr.bf16.mxu0 0
  %157 = vmatpush1.bf16.msra.mxu0 0
  %158 = vmatprep.subr.bf16.mxu0 0
  %159 = vmatpush1.bf16.msra.mxu0 0
  %160 = vmatprep.subr.bf16.mxu0 0
  %161 = vmatpush1.bf16.msra.mxu0 0
  %162 = vmatprep.subr.bf16.mxu0 0
  %163 = vmatpush1.bf16.msra.mxu0 0
  %164 = vmatprep.subr.bf16.mxu0 0
  %165 = vmatpush1.bf16.msra.mxu0 0
  %166 = vmatprep.subr.bf16.mxu0 0
  %167 = vmatpush1.bf16.msra.mxu0 0
  %168 = vmatprep.mubr.bf16.mxu0 0
  %169 = vmatmul.mubr.bf16.gmra.mrb[0].mxu0 %v131
  %v170 = vpop.f32.mrb[0].mxu0
  %v171 = vadd.f32 %v116, %v170
  %v172 = vpop.f32.mrb[0].mxu0
  %v173 = vpop.f32.mrb[0].mxu0
  %v174 = vadd.f32 %v116, %v173
  %v175 = vpop.f32.mrb[0].mxu0
  %176 = vmatprep.mubr.bf16.mxu0 0
  %177 = vmatmul.mubr.bf16.gmra.mrb[0].mxu0 %v134
  %v178 = vpop.f32.mrb[0].mxu0
  %v179 = vadd.f32 %v116, %v178
  %v180 = vpop.f32.mrb[0].mxu0
  %v181 = vpop.f32.mrb[0].mxu0
  %v182 = vadd.f32 %v116, %v181
  %v183 = vpop.f32.mrb[0].mxu0
  %184 = vdwg.mxu0
  %v185 = vpack.c.bf16 %v174, %v171
  %v186 = vpack.c.bf16 %v182, %v179
  %v189 = vunpack.c.l.b16 %v185
  %v190 = vunpack.c.h.b16 %v185
  %v191 = vunpack.c.l.b16 %v186
  %v192 = vunpack.c.h.b16 %v186
  %v193 = vpack.c.b16 %v189, %v189
  %v194 = vpack.c.b16 %v190, %v190
  %v195 = vpack.c.b16 %v191, %v191
  %v196 = vpack.c.b16 %v192, %v192
  %vm201 = vcmask 257024
  %202 = vst.msk [vmem:[%s5] sm:$0xf] %vm201, %v193
  %203 = vst.msk [vmem:[%s5 + $0x4] sm:$0xf] %vm201, %v194
  %204 = vst.msk [vmem:[%s5 + $0x8] sm:$0xf] %vm201, %v195
  %205 = vst.msk [vmem:[%s5 + $0xc] sm:$0xf] %vm201, %v196
  // Predicated region
  $region22: #{model_forward.21} parent=0 // pred_check
    _
  $region23: #{model_forward.21} parent=0 // pred_check_branch
    %207 = sbr.rel (0) target = $region25
  $region24: #{model_forward.21} parent=0 // pred_region
    _
  $region25: #{model_forward.21} parent=0 // pred_fallthru
    _
  // Predicated region
  $region26: #{model_forward.21} parent=0 // pred_check
    _
  $region27: #{model_forward.21} parent=0 // pred_check_branch
    %209 = sbr.rel (0) target = $region29
  $region28: #{model_forward.21} parent=0 // pred_region
    _
  $region29: #{model_forward.21} parent=0 // pred_fallthru
    _

// kernel: model_forward.23
$region0: #{model_forward.23}
  #allocation0 [shape = 'u32[]', space=smem, size = 0x4, offset = 0x4, fixed_abs, tag = 'smem constant byte address 0x4 - core index']
  #allocation1 [shape = 'u32[144,128]{1,0:T(1,128)}', space=vmem, size = 0x12000, scoped, tag = 'internal scratch']
  %s0 = inlined_call_operand.vmem [shape: bf16[16,32], index: 0, kind: input, shape index: {}]
  %s1 = inlined_call_operand.vmem [shape: bf16[32,64], index: 1, kind: input, shape index: {}]
  %s2 = inlined_call_operand.vmem [shape: f32[1,64], index: 2, kind: input, shape index: {}]
  %s3 = inlined_call_operand.vmem [shape: bf16[16,64], index: 3, kind: output, shape index: {}]
  %s4 = sld [smem:[#allocation0]]
  $region22: #{model_forward.23} parent=0
    _
  %s6 = ssub.s32 1, %s4
  %s7 = scalar_select 0, %s6, %s4
  // Predicated region
  $region2: #{model_forward.23} parent=0 // pred_check
    _
  $region3: #{model_forward.23} parent=0 // pred_check_branch
    %9 = sbr.rel (0) target = $region5
  $region4: #{model_forward.23} parent=0 // pred_region
    _
  $region5: #{model_forward.23} parent=0 // pred_fallthru
    _
  // Predicated region
  $region6: #{model_forward.23} parent=0 // pred_check
    _
  $region7: #{model_forward.23} parent=0 // pred_check_branch
    %11 = sbr.rel (0) target = $region9
  $region8: #{model_forward.23} parent=0 // pred_region
    _
  $region9: #{model_forward.23} parent=0 // pred_fallthru
    _
  // Predicated region
  $region10: #{model_forward.23} parent=0 // pred_check
    _
  $region11: #{model_forward.23} parent=0 // pred_check_branch
    %13 = sbr.rel (0) target = $region13
  $region12: #{model_forward.23} parent=0 // pred_region
    _
  $region13: #{model_forward.23} parent=0 // pred_fallthru
    _
  %v15 = vld [vmem:[%s0] sm:$0xf]
  %v16 = vld [vmem:[%s0 + $0x4] sm:$0xf]
  %v17 = vld [vmem:[%s1] sm:$0xf]
  %v18 = vld [vmem:[%s1 + $0x4] sm:$0xf]
  %v19 = vld [vmem:[%s1 + $0x8] sm:$0xf]
  %v20 = vld [vmem:[%s1 + $0xc] sm:$0xf]
  %v21 = vld [vmem:[%s2] sm:$0x1]
  %v23 = vlaneseq
  %v24 = vshrl.u32 %v23, 7
  %v25 = vsub.s32 0, %v24
  %v26 = vrot.slane %v21, %v25
  %v30 = vunpack.c.l.b16 %v15
  %v31 = vunpack.c.l.b16 %v16
  %v32 = vpack.c.b16 %v31, %v30
  %v37 = vunpack.c.l.b16 %v17
  %v38 = vunpack.c.l.b16 %v18
  %v39 = vunpack.c.l.b16 %v19
  %v40 = vunpack.c.l.b16 %v20
  %v41 = vpack.c.b16 %v38, %v37
  %v42 = vpack.c.b16 %v40, %v39
  %vm45 = vcmask 261120
  %v47 = vsel %vm45, %v32, 0
  %49 = vmatprep.subr.bf16.mxu0 0
  %50 = vmatpush1.bf16.msra.mxu0 %v41
  %51 = vmatprep.subr.bf16.mxu0 0
  %52 = vmatpush1.bf16.msra.mxu0 %v42
  %53 = vmatprep.subr.bf16.mxu0 0
  %54 = vmatpush1.bf16.msra.mxu0 0
  %55 = vmatprep.subr.bf16.mxu0 0
  %56 = vmatpush1.bf16.msra.mxu0 0
  %57 = vmatprep.subr.bf16.mxu0 0
  %58 = vmatpush1.bf16.msra.mxu0 0
  %59 = vmatprep.subr.bf16.mxu0 0
  %60 = vmatpush1.bf16.msra.mxu0 0
  %61 = vmatprep.subr.bf16.mxu0 0
  %62 = vmatpush1.bf16.msra.mxu0 0
  %63 = vmatprep.subr.bf16.mxu0 0
  %64 = vmatpush1.bf16.msra.mxu0 0
  %65 = vmatprep.subr.bf16.mxu0 0
  %66 = vmatpush1.bf16.msra.mxu0 0
  %67 = vmatprep.subr.bf16.mxu0 0
  %68 = vmatpush1.bf16.msra.mxu0 0
  %69 = vmatprep.subr.bf16.mxu0 0
  %70 = vmatpush1.bf16.msra.mxu0 0
  %71 = vmatprep.subr.bf16.mxu0 0
  %72 = vmatpush1.bf16.msra.mxu0 0
  %73 = vmatprep.subr.bf16.mxu0 0
  %74 = vmatpush1.bf16.msra.mxu0 0
  %75 = vmatprep.subr.bf16.mxu0 0
  %76 = vmatpush1.bf16.msra.mxu0 0
  %77 = vmatprep.subr.bf16.mxu0 0
  %78 = vmatpush1.bf16.msra.mxu0 0
  %79 = vmatprep.subr.bf16.mxu0 0
  %80 = vmatpush1.bf16.msra.mxu0 0
  %81 = vmatprep.mubr.bf16.mxu0 0
  %82 = vmatmul.mubr.bf16.gmra.mrb[0].mxu0 %v47
  %v83 = vpop.f32.mrb[0].mxu0
  %v84 = vadd.f32 %v26, %v83
  %v85 = vpop.f32.mrb[0].mxu0
  %v86 = vpop.f32.mrb[0].mxu0
  %v87 = vadd.f32 %v26, %v86
  %v88 = vpop.f32.mrb[0].mxu0
  %89 = vdwg.mxu0
  %v90 = vpack.c.bf16 %v87, %v84
  %v92 = vunpack.c.l.b16 %v90
  %v93 = vunpack.c.h.b16 %v90
  %v94 = vpack.c.b16 %v92, %v92
  %v95 = vpack.c.b16 %v93, %v93
  %vm98 = vcmask 519168
  %99 = vst.msk [vmem:[%s3] sm:$0xf] %vm98, %v94
  %100 = vst.msk [vmem:[%s3 + $0x4] sm:$0xf] %vm98, %v95
  // Predicated region
  $region14: #{model_forward.23} parent=0 // pred_check
    _
  $region15: #{model_forward.23} parent=0 // pred_check_branch
    %102 = sbr.rel (0) target = $region17
  $region16: #{model_forward.23} parent=0 // pred_region
    _
  $region17: #{model_forward.23} parent=0 // pred_fallthru
    _
  // Predicated region
  $region18: #{model_forward.23} parent=0 // pred_check
    _
  $region19: #{model_forward.23} parent=0 // pred_check_branch
    %104 = sbr.rel (0) target = $region21
  $region20: #{model_forward.23} parent=0 // pred_region
    _
  $region21: #{model_forward.23} parent=0 // pred_fallthru
    _

// kernel: model_forward.22
$region0: #{model_forward.22}
  #allocation0 [shape = 'u32[]', space=smem, size = 0x4, offset = 0x4, fixed_abs, tag = 'smem constant byte address 0x4 - core index']
  #allocation1 [shape = 'u32[144,128]{1,0:T(1,128)}', space=vmem, size = 0x12000, scoped, tag = 'internal scratch']
  %s0 = inlined_call_operand.vmem [shape: bf16[16,48], index: 0, kind: input, shape index: {}]
  %s1 = inlined_call_operand.vmem [shape: bf16[48,32], index: 1, kind: input, shape index: {}]
  %s2 = inlined_call_operand.vmem [shape: f32[1,32], index: 2, kind: input, shape index: {}]
  %s3 = inlined_call_operand.vmem [shape: bf16[16,32], index: 3, kind: output, shape index: {}]
  %s4 = sld [smem:[#allocation0]]
  $region22: #{model_forward.22} parent=0
    _
  %s6 = ssub.s32 1, %s4
  %s7 = scalar_select 0, %s6, %s4
  // Predicated region
  $region2: #{model_forward.22} parent=0 // pred_check
    _
  $region3: #{model_forward.22} parent=0 // pred_check_branch
    %9 = sbr.rel (0) target = $region5
  $region4: #{model_forward.22} parent=0 // pred_region
    _
  $region5: #{model_forward.22} parent=0 // pred_fallthru
    _
  // Predicated region
  $region6: #{model_forward.22} parent=0 // pred_check
    _
  $region7: #{model_forward.22} parent=0 // pred_check_branch
    %11 = sbr.rel (0) target = $region9
  $region8: #{model_forward.22} parent=0 // pred_region
    _
  $region9: #{model_forward.22} parent=0 // pred_fallthru
    _
  // Predicated region
  $region10: #{model_forward.22} parent=0 // pred_check
    _
  $region11: #{model_forward.22} parent=0 // pred_check_branch
    %13 = sbr.rel (0) target = $region13
  $region12: #{model_forward.22} parent=0 // pred_region
    _
  $region13: #{model_forward.22} parent=0 // pred_fallthru
    _
  %v15 = vld [vmem:[%s0] sm:$0xf]
  %v16 = vld [vmem:[%s0 + $0x4] sm:$0xf]
  %v17 = vld [vmem:[%s1] sm:$0xf]
  %v18 = vld [vmem:[%s1 + $0x4] sm:$0xf]
  %v19 = vld [vmem:[%s1 + $0x8] sm:$0xf]
  %v20 = vld [vmem:[%s1 + $0xc] sm:$0xf]
  %v21 = vld [vmem:[%s1 + $0x10] sm:$0xf]
  %v22 = vld [vmem:[%s1 + $0x14] sm:$0xf]
  %v23 = vld [vmem:[%s2] sm:$0x1]
  %v25 = vlaneseq
  %v26 = vshrl.u32 %v25, 7
  %v27 = vsub.s32 0, %v26
  %v28 = vrot.slane %v23, %v27
  %v32 = vunpack.c.l.b16 %v15
  %v33 = vunpack.c.l.b16 %v16
  %v34 = vpack.c.b16 %v33, %v32
  %v41 = vunpack.c.l.b16 %v17
  %v42 = vunpack.c.l.b16 %v18
  %v43 = vunpack.c.l.b16 %v19
  %v44 = vunpack.c.l.b16 %v20
  %v45 = vunpack.c.l.b16 %v21
  %v46 = vunpack.c.l.b16 %v22
  %v47 = vpack.c.b16 %v42, %v41
  %v48 = vpack.c.b16 %v44, %v43
  %v49 = vpack.c.b16 %v46, %v45
  %vm53 = vcmask 392192
  %v55 = vsel %vm53, %v34, 0
  %57 = vmatprep.subr.bf16.mxu0 0
  %58 = vmatpush1.bf16.msra.mxu0 %v47
  %59 = vmatprep.subr.bf16.mxu0 0
  %60 = vmatpush1.bf16.msra.mxu0 %v48
  %61 = vmatprep.subr.bf16.mxu0 0
  %62 = vmatpush1.bf16.msra.mxu0 %v49
  %63 = vmatprep.subr.bf16.mxu0 0
  %64 = vmatpush1.bf16.msra.mxu0 0
  %65 = vmatprep.subr.bf16.mxu0 0
  %66 = vmatpush1.bf16.msra.mxu0 0
  %67 = vmatprep.subr.bf16.mxu0 0
  %68 = vmatpush1.bf16.msra.mxu0 0
  %69 = vmatprep.subr.bf16.mxu0 0
  %70 = vmatpush1.bf16.msra.mxu0 0
  %71 = vmatprep.subr.bf16.mxu0 0
  %72 = vmatpush1.bf16.msra.mxu0 0
  %73 = vmatprep.subr.bf16.mxu0 0
  %74 = vmatpush1.bf16.msra.mxu0 0
  %75 = vmatprep.subr.bf16.mxu0 0
  %76 = vmatpush1.bf16.msra.mxu0 0
  %77 = vmatprep.subr.bf16.mxu0 0
  %78 = vmatpush1.bf16.msra.mxu0 0
  %79 = vmatprep.subr.bf16.mxu0 0
  %80 = vmatpush1.bf16.msra.mxu0 0
  %81 = vmatprep.subr.bf16.mxu0 0
  %82 = vmatpush1.bf16.msra.mxu0 0
  %83 = vmatprep.subr.bf16.mxu0 0
  %84 = vmatpush1.bf16.msra.mxu0 0
  %85 = vmatprep.subr.bf16.mxu0 0
  %86 = vmatpush1.bf16.msra.mxu0 0
  %87 = vmatprep.subr.bf16.mxu0 0
  %88 = vmatpush1.bf16.msra.mxu0 0
  %89 = vmatprep.mubr.bf16.mxu0 0
  %90 = vmatmul.mubr.bf16.gmra.mrb[0].mxu0 %v55
  %v91 = vpop.f32.mrb[0].mxu0
  %v92 = vadd.f32 %v28, %v91
  %v93 = vpop.f32.mrb[0].mxu0
  %v94 = vpop.f32.mrb[0].mxu0
  %v95 = vadd.f32 %v28, %v94
  %v96 = vpop.f32.mrb[0].mxu0
  %97 = vdwg.mxu0
  %v98 = vpack.c.bf16 %v95, %v92
  %v100 = vunpack.c.l.b16 %v98
  %v101 = vunpack.c.h.b16 %v98
  %v102 = vpack.c.b16 %v100, %v100
  %v103 = vpack.c.b16 %v101, %v101
  %vm106 = vcmask 257024
  %107 = vst.msk [vmem:[%s3] sm:$0xf] %vm106, %v102
  %108 = vst.msk [vmem:[%s3 + $0x4] sm:$0xf] %vm106, %v103
  // Predicated region
  $region14: #{model_forward.22} parent=0 // pred_check
    _
  $region15: #{model_forward.22} parent=0 // pred_check_branch
    %110 = sbr.rel (0) target = $region17
  $region16: #{model_forward.22} parent=0 // pred_region
    _
  $region17: #{model_forward.22} parent=0 // pred_fallthru
    _
  // Predicated region
  $region18: #{model_forward.22} parent=0 // pred_check
    _
  $region19: #{model_forward.22} parent=0 // pred_check_branch
    %112 = sbr.rel (0) target = $region21
  $region20: #{model_forward.22} parent=0 // pred_region
    _
  $region21: #{model_forward.22} parent=0 // pred_fallthru
    _

// kernel: model_forward.26
$region0: #{model_forward.26}
  #allocation0 [shape = 'u32[]', space=smem, size = 0x4, offset = 0x4, fixed_abs, tag = 'smem constant byte address 0x4 - core index']
  #allocation1 [shape = 'u32[144,128]{1,0:T(1,128)}', space=vmem, size = 0x12000, scoped, tag = 'internal scratch']
  #allocation2 [shape = 'f32[32,32]{1,0:T(8,128)}', space=vmem, size = 0x4000, scoped, tag = 'scratch operand']
  %s0 = inlined_call_operand.vmem [shape: bf16[32,32], index: 0, kind: input, shape index: {}, may-alias: {0,7}]
  %s1 = inlined_call_operand.vmem [shape: f32[1,32], index: 1, kind: input, shape index: {}]
  %s2 = inlined_call_operand.vmem [shape: f32[1,32], index: 2, kind: input, shape index: {}]
  %s3 = inlined_call_operand.vmem [shape: bf16[32,128], index: 3, kind: input, shape index: {}]
  %s4 = inlined_call_operand.vmem [shape: f32[1,128], index: 4, kind: input, shape index: {}]
  %s5 = inlined_call_operand.vmem [shape: bf16[128,32], index: 5, kind: input, shape index: {}]
  %s6 = inlined_call_operand.vmem [shape: f32[1,32], index: 6, kind: input, shape index: {}]
  %s7 = inlined_call_operand.vmem [shape: bf16[32,32], index: 7, kind: input, shape index: {}, may-alias: {0,7}]
  %s8 = inlined_call_operand.vmem [shape: bf16[32,32], index: 8, kind: output, shape index: {}]
  %s9 = sld [smem:[#allocation0]]
  $region50: #{model_forward.26} parent=0
    _
  %s11 = ssub.s32 1, %s9
  %s12 = scalar_select 0, %s11, %s9
  // Predicated region
  $region2: #{model_forward.26} parent=0 // pred_check
    _
  $region3: #{model_forward.26} parent=0 // pred_check_branch
    %14 = sbr.rel (0) target = $region5
  $region4: #{model_forward.26} parent=0 // pred_region
    _
  $region5: #{model_forward.26} parent=0 // pred_fallthru
    _
  // Predicated region
  $region6: #{model_forward.26} parent=0 // pred_check
    _
  $region7: #{model_forward.26} parent=0 // pred_check_branch
    %16 = sbr.rel (0) target = $region9
  $region8: #{model_forward.26} parent=0 // pred_region
    _
  $region9: #{model_forward.26} parent=0 // pred_fallthru
    _
  // Predicated region
  $region10: #{model_forward.26} parent=0 // pred_check
    _
  $region11: #{model_forward.26} parent=0 // pred_check_branch
    %18 = sbr.rel (0) target = $region13
  $region12: #{model_forward.26} parent=0 // pred_region
    _
  $region13: #{model_forward.26} parent=0 // pred_fallthru
    _
  // Predicated region
  $region14: #{model_forward.26} parent=0 // pred_check
    _
  $region15: #{model_forward.26} parent=0 // pred_check_branch
    %20 = sbr.rel (0) target = $region17
  $region16: #{model_forward.26} parent=0 // pred_region
    _
  $region17: #{model_forward.26} parent=0 // pred_fallthru
    _
  // Predicated region
  $region18: #{model_forward.26} parent=0 // pred_check
    _
  $region19: #{model_forward.26} parent=0 // pred_check_branch
    %22 = sbr.rel (0) target = $region21
  $region20: #{model_forward.26} parent=0 // pred_region
    _
  $region21: #{model_forward.26} parent=0 // pred_fallthru
    _
  // Predicated region
  $region22: #{model_forward.26} parent=0 // pred_check
    _
  $region23: #{model_forward.26} parent=0 // pred_check_branch
    %24 = sbr.rel (0) target = $region25
  $region24: #{model_forward.26} parent=0 // pred_region
    _
  $region25: #{model_forward.26} parent=0 // pred_fallthru
    _
  // Predicated region
  $region26: #{model_forward.26} parent=0 // pred_check
    _
  $region27: #{model_forward.26} parent=0 // pred_check_branch
    %26 = sbr.rel (0) target = $region29
  $region28: #{model_forward.26} parent=0 // pred_region
    _
  $region29: #{model_forward.26} parent=0 // pred_fallthru
    _
  // Predicated region
  $region30: #{model_forward.26} parent=0 // pred_check
    _
  $region31: #{model_forward.26} parent=0 // pred_check_branch
    %28 = sbr.rel (0) target = $region33
  $region32: #{model_forward.26} parent=0 // pred_region
    _
  $region33: #{model_forward.26} parent=0 // pred_fallthru
    _
  %p30 = scmp.eq.s32.totalorder 0, 0
  // Predicated region
  $region34: #{model_forward.26} parent=0 // pred_check
    %p31 = pneg %p30
  $region35: #{model_forward.26} parent=0 // pred_check_branch
    %33 = sbr.rel (%p31) target = $region37
  $region36: #{model_forward.26} parent=0 // pred_region
    %vm34 = vcmask 261120
    %35 = vst.msk [vmem:[#allocation2] sm:$0xff] %vm34, 0.0
    %36 = vst.msk [vmem:[#allocation2 + $0x8] sm:$0xff] %vm34, 0.0
    %37 = vst.msk [vmem:[#allocation2 + $0x10] sm:$0xff] %vm34, 0.0
    %38 = vst.msk [vmem:[#allocation2 + $0x18] sm:$0xff] %vm34, 0.0
  $region37: #{model_forward.26} parent=0 // pred_fallthru
    _
  %v39 = vld [vmem:[%s0] sm:$0xf]
  %v40 = vld [vmem:[%s0 + $0x4] sm:$0xf]
  %v41 = vld [vmem:[%s0 + $0x8] sm:$0xf]
  %v42 = vld [vmem:[%s0 + $0xc] sm:$0xf]
  %v43 = vunpack.c.l.bf16 %v39
  %v44 = vunpack.c.l.bf16 %v40
  %v45 = vunpack.c.l.bf16 %v41
  %v46 = vunpack.c.l.bf16 %v42
  %vm47 = vcmask 261120
  %v48 = vsel %vm47, %v43, 0.0
  %49 = vadd.xlane.f32.xlu0 %v48
  %v50 = vpop.xlane.xlu0 %49
  %v51 = vsel %vm47, %v44, 0.0
  %52 = vadd.xlane.f32.xlu0 %v51
  %v53 = vpop.xlane.xlu0 %52
  %v54 = vsel %vm47, %v45, 0.0
  %55 = vadd.xlane.f32.xlu0 %v54
  %v56 = vpop.xlane.xlu0 %55
  %v57 = vsel %vm47, %v46, 0.0
  %58 = vadd.xlane.f32.xlu0 %v57
  %v59 = vpop.xlane.xlu0 %58
  %v60 = vrcp.pop 32.0
  %v61 = vmul.f32 %v50, %v60
  %v62 = vmul.f32 %v53, %v60
  %v63 = vmul.f32 %v56, %v60
  %v64 = vmul.f32 %v59, %v60
  %v65 = vsub.f32 %v43, %v61
  %v66 = vsub.f32 %v44, %v62
  %v67 = vsub.f32 %v45, %v63
  %v68 = vsub.f32 %v46, %v64
  %v69 = vmul.f32 %v65, %v65
  %v70 = vmul.f32 %v66, %v66
  %v71 = vmul.f32 %v67, %v67
  %v72 = vmul.f32 %v68, %v68
  %v73 = vsel %vm47, %v69, 0.0
  %74 = vadd.xlane.f32.xlu0 %v73
  %v75 = vpop.xlane.xlu0 %74
  %v76 = vsel %vm47, %v70, 0.0
  %77 = vadd.xlane.f32.xlu0 %v76
  %v78 = vpop.xlane.xlu0 %77
  %v79 = vsel %vm47, %v71, 0.0
  %80 = vadd.xlane.f32.xlu0 %v79
  %v81 = vpop.xlane.xlu0 %80
  %v82 = vsel %vm47, %v72, 0.0
  %83 = vadd.xlane.f32.xlu0 %v82
  %v84 = vpop.xlane.xlu0 %83
  %v85 = vmul.f32 %v75, %v60
  %v86 = vmul.f32 %v78, %v60
  %v87 = vmul.f32 %v81, %v60
  %v88 = vmul.f32 %v84, %v60
  %v89 = vadd.f32 %v85, 1e-05
  %v90 = vadd.f32 %v86, 1e-05
  %v91 = vadd.f32 %v87, 1e-05
  %v92 = vadd.f32 %v88, 1e-05
  %v93 = vrsqrt.pop %v89
  %v94 = vrsqrt.pop %v90
  %v95 = vrsqrt.pop %v91
  %v96 = vrsqrt.pop %v92
  %v97 = vmul.f32 %v65, %v93
  %v98 = vmul.f32 %v66, %v94
  %v99 = vmul.f32 %v67, %v95
  %v100 = vmul.f32 %v68, %v96
  %v101 = vld [vmem:[%s1] sm:$0x1]
  %v103 = vlaneseq
  %v104 = vshrl.u32 %v103, 7
  %v105 = vsub.s32 0, %v104
  %v106 = vrot.slane %v101, %v105
  %v108 = vmul.f32 %v97, %v106
  %v109 = vmul.f32 %v98, %v106
  %v110 = vmul.f32 %v99, %v106
  %v111 = vmul.f32 %v100, %v106
  %v112 = vld [vmem:[%s2] sm:$0x1]
  %v114 = vlaneseq
  %v115 = vshrl.u32 %v114, 7
  %v116 = vsub.s32 0, %v115
  %v117 = vrot.slane %v112, %v116
  %v119 = vadd.f32 %v108, %v117
  %v120 = vadd.f32 %v109, %v117
  %v121 = vadd.f32 %v110, %v117
  %v122 = vadd.f32 %v111, %v117
  %v123 = vpack.c.bf16 %v120, %v119
  %v124 = vpack.c.bf16 %v122, %v121
  %v125 = vld [vmem:[%s3] sm:$0xf]
  %v126 = vld [vmem:[%s3 + $0x4] sm:$0xf]
  %v127 = vld [vmem:[%s3 + $0x8] sm:$0xf]
  %v128 = vld [vmem:[%s3 + $0xc] sm:$0xf]
  %v129 = vld [vmem:[%s4] sm:$0x1]
  %v131 = vlaneseq
  %v132 = vshrl.u32 %v131, 7
  %v133 = vsub.s32 0, %v132
  %v134 = vrot.slane %v129, %v133
  %v140 = vunpack.c.l.b16 %v125
  %v141 = vunpack.c.l.b16 %v126
  %v142 = vunpack.c.l.b16 %v127
  %v143 = vunpack.c.l.b16 %v128
  %v144 = vpack.c.b16 %v141, %v140
  %v145 = vpack.c.b16 %v143, %v142
  %v149 = vsel %vm47, %v123, 0
  %v152 = vsel %vm47, %v124, 0
  %154 = vmatprep.subr.bf16.mxu0 0
  %155 = vmatpush1.bf16.msra.mxu0 %v144
  %156 = vmatprep.subr.bf16.mxu0 0
  %157 = vmatpush1.bf16.msra.mxu0 %v145
  %158 = vmatprep.subr.bf16.mxu0 0
  %159 = vmatpush1.bf16.msra.mxu0 0
  %160 = vmatprep.subr.bf16.mxu0 0
  %161 = vmatpush1.bf16.msra.mxu0 0
  %162 = vmatprep.subr.bf16.mxu0 0
  %163 = vmatpush1.bf16.msra.mxu0 0
  %164 = vmatprep.subr.bf16.mxu0 0
  %165 = vmatpush1.bf16.msra.mxu0 0
  %166 = vmatprep.subr.bf16.mxu0 0
  %167 = vmatpush1.bf16.msra.mxu0 0
  %168 = vmatprep.subr.bf16.mxu0 0
  %169 = vmatpush1.bf16.msra.mxu0 0
  %170 = vmatprep.subr.bf16.mxu0 0
  %171 = vmatpush1.bf16.msra.mxu0 0
  %172 = vmatprep.subr.bf16.mxu0 0
  %173 = vmatpush1.bf16.msra.mxu0 0
  %174 = vmatprep.subr.bf16.mxu0 0
  %175 = vmatpush1.bf16.msra.mxu0 0
  %176 = vmatprep.subr.bf16.mxu0 0
  %177 = vmatpush1.bf16.msra.mxu0 0
  %178 = vmatprep.subr.bf16.mxu0 0
  %179 = vmatpush1.bf16.msra.mxu0 0
  %180 = vmatprep.subr.bf16.mxu0 0
  %181 = vmatpush1.bf16.msra.mxu0 0
  %182 = vmatprep.subr.bf16.mxu0 0
  %183 = vmatpush1.bf16.msra.mxu0 0
  %184 = vmatprep.subr.bf16.mxu0 0
  %185 = vmatpush1.bf16.msra.mxu0 0
  %186 = vmatprep.mubr.bf16.mxu0 0
  %187 = vmatmul.mubr.bf16.gmra.mrb[0].mxu0 %v149
  %v188 = vpop.f32.mrb[0].mxu0
  %v189 = vadd.f32 %v134, %v188
  %v190 = vpop.f32.mrb[0].mxu0
  %v191 = vpop.f32.mrb[0].mxu0
  %v192 = vadd.f32 %v134, %v191
  %v193 = vpop.f32.mrb[0].mxu0
  %194 = vmatprep.mubr.bf16.mxu0 0
  %195 = vmatmul.mubr.bf16.gmra.mrb[0].mxu0 %v152
  %v196 = vpop.f32.mrb[0].mxu0
  %v197 = vadd.f32 %v134, %v196
  %v198 = vpop.f32.mrb[0].mxu0
  %v199 = vpop.f32.mrb[0].mxu0
  %v200 = vadd.f32 %v134, %v199
  %v201 = vpop.f32.mrb[0].mxu0
  %202 = vdwg.mxu0
  %v203 = vmul.f32 %v189, %v189
  %v204 = vmul.f32 %v192, %v192
  %v205 = vmul.f32 %v197, %v197
  %v206 = vmul.f32 %v200, %v200
  %v207 = vmul.f32 %v189, %v203
  %v208 = vmul.f32 %v192, %v204
  %v209 = vmul.f32 %v197, %v205
  %v210 = vmul.f32 %v200, %v206
  %v211 = vmul.f32 %v207, 0.044715
  %v212 = vmul.f32 %v208, 0.044715
  %v213 = vmul.f32 %v209, 0.044715
  %v214 = vmul.f32 %v210, 0.044715
  %v215 = vadd.f32 %v189, %v211
  %v216 = vadd.f32 %v192, %v212
  %v217 = vadd.f32 %v197, %v213
  %v218 = vadd.f32 %v200, %v214
  %v219 = vmul.f32 %v215, 0.7978846
  %v220 = vmul.f32 %v216, 0.7978846
  %v221 = vmul.f32 %v217, 0.7978846
  %v222 = vmul.f32 %v218, 0.7978846
  %v223 = vtanh.pop %v219
  %v224 = vtanh.pop %v220
  %v225 = vtanh.pop %v221
  %v226 = vtanh.pop %v222
  %v227 = vadd.f32 %v223, 1.0
  %v228 = vadd.f32 %v224, 1.0
  %v229 = vadd.f32 %v225, 1.0
  %v230 = vadd.f32 %v226, 1.0
  %v231 = vmul.f32 %v227, 0.5
  %v232 = vmul.f32 %v228, 0.5
  %v233 = vmul.f32 %v229, 0.5
  %v234 = vmul.f32 %v230, 0.5
  %v235 = vmul.f32 %v189, %v231
  %v236 = vmul.f32 %v192, %v232
  %v237 = vmul.f32 %v197, %v233
  %v238 = vmul.f32 %v200, %v234
  %v239 = vld [vmem:[#allocation2] sm:$0xff]
  %v240 = vld [vmem:[#allocation2 + $0x8] sm:$0xff]
  %v241 = vld [vmem:[#allocation2 + $0x10] sm:$0xff]
  %v242 = vld [vmem:[#allocation2 + $0x18] sm:$0xff]
  %v243 = vpack.c.bf16 %v236, %v235
  %v244 = vpack.c.bf16 %v238, %v237
  %v245 = vld [vmem:[%s5] sm:$0xf]
  %v246 = vld [vmem:[%s5 + $0x4] sm:$0xf]
  %v247 = vld [vmem:[%s5 + $0x8] sm:$0xf]
  %v248 = vld [vmem:[%s5 + $0xc] sm:$0xf]
  %v249 = vld [vmem:[%s5 + $0x10] sm:$0xf]
  %v250 = vld [vmem:[%s5 + $0x14] sm:$0xf]
  %v251 = vld [vmem:[%s5 + $0x18] sm:$0xf]
  %v252 = vld [vmem:[%s5 + $0x1c] sm:$0xf]
  %v253 = vld [vmem:[%s5 + $0x20] sm:$0xf]
  %v254 = vld [vmem:[%s5 + $0x24] sm:$0xf]
  %v255 = vld [vmem:[%s5 + $0x28] sm:$0xf]
  %v256 = vld [vmem:[%s5 + $0x2c] sm:$0xf]
  %v257 = vld [vmem:[%s5 + $0x30] sm:$0xf]
  %v258 = vld [vmem:[%s5 + $0x34] sm:$0xf]
  %v259 = vld [vmem:[%s5 + $0x38] sm:$0xf]
  %v260 = vld [vmem:[%s5 + $0x3c] sm:$0xf]
  %v277 = vunpack.c.l.b16 %v245
  %v278 = vunpack.c.l.b16 %v246
  %v279 = vunpack.c.l.b16 %v247
  %v280 = vunpack.c.l.b16 %v248
  %v281 = vunpack.c.l.b16 %v249
  %v282 = vunpack.c.l.b16 %v250
  %v283 = vunpack.c.l.b16 %v251
  %v284 = vunpack.c.l.b16 %v252
  %v285 = vunpack.c.l.b16 %v253
  %v286 = vunpack.c.l.b16 %v254
  %v287 = vunpack.c.l.b16 %v255
  %v288 = vunpack.c.l.b16 %v256
  %v289 = vunpack.c.l.b16 %v257
  %v290 = vunpack.c.l.b16 %v258
  %v291 = vunpack.c.l.b16 %v259
  %v292 = vunpack.c.l.b16 %v260
  %v293 = vpack.c.b16 %v278, %v277
  %v294 = vpack.c.b16 %v280, %v279
  %v295 = vpack.c.b16 %v282, %v281
  %v296 = vpack.c.b16 %v284, %v283
  %v297 = vpack.c.b16 %v286, %v285
  %v298 = vpack.c.b16 %v288, %v287
  %v299 = vpack.c.b16 %v290, %v289
  %v300 = vpack.c.b16 %v292, %v291
  %309 = vmatprep.subr.bf16.mxu0 0
  %310 = vmatpush1.bf16.msra.mxu0 %v293
  %311 = vmatprep.subr.bf16.mxu0 0
  %312 = vmatpush1.bf16.msra.mxu0 %v294
  %313 = vmatprep.subr.bf16.mxu0 0
  %314 = vmatpush1.bf16.msra.mxu0 %v295
  %315 = vmatprep.subr.bf16.mxu0 0
  %316 = vmatpush1.bf16.msra.mxu0 %v296
  %317 = vmatprep.subr.bf16.mxu0 0
  %318 = vmatpush1.bf16.msra.mxu0 %v297
  %319 = vmatprep.subr.bf16.mxu0 0
  %320 = vmatpush1.bf16.msra.mxu0 %v298
  %321 = vmatprep.subr.bf16.mxu0 0
  %322 = vmatpush1.bf16.msra.mxu0 %v299
  %323 = vmatprep.subr.bf16.mxu0 0
  %324 = vmatpush1.bf16.msra.mxu0 %v300
  %325 = vmatprep.subr.bf16.mxu0 0
  %326 = vmatpush1.bf16.msra.mxu0 0
  %327 = vmatprep.subr.bf16.mxu0 0
  %328 = vmatpush1.bf16.msra.mxu0 0
  %329 = vmatprep.subr.bf16.mxu0 0
  %330 = vmatpush1.bf16.msra.mxu0 0
  %331 = vmatprep.subr.bf16.mxu0 0
  %332 = vmatpush1.bf16.msra.mxu0 0
  %333 = vmatprep.subr.bf16.mxu0 0
  %334 = vmatpush1.bf16.msra.mxu0 0
  %335 = vmatprep.subr.bf16.mxu0 0
  %336 = vmatpush1.bf16.msra.mxu0 0
  %337 = vmatprep.subr.bf16.mxu0 0
  %338 = vmatpush1.bf16.msra.mxu0 0
  %339 = vmatprep.subr.bf16.mxu0 0
  %340 = vmatpush1.bf16.msra.mxu0 0
  %341 = vmatprep.mubr.bf16.mxu0 0
  %342 = vmatmul.mubr.bf16.gmra.mrb[0].mxu0 %v243
  %v343 = vpop.f32.mrb[0].mxu0
  %v344 = vadd.f32 0.0, %v343
  %v345 = vpop.f32.mrb[0].mxu0
  %v346 = vpop.f32.mrb[0].mxu0
  %v347 = vadd.f32 0.0, %v346
  %v348 = vpop.f32.mrb[0].mxu0
  %349 = vmatprep.mubr.bf16.mxu0 0
  %350 = vmatmul.mubr.bf16.gmra.mrb[0].mxu0 %v244
  %v351 = vpop.f32.mrb[0].mxu0
  %v352 = vadd.f32 0.0, %v351
  %v353 = vpop.f32.mrb[0].mxu0
  %v354 = vpop.f32.mrb[0].mxu0
  %v355 = vadd.f32 0.0, %v354
  %v356 = vpop.f32.mrb[0].mxu0
  %357 = vdwg.mxu0
  %v358 = vadd.f32 %v239, %v344
  %v359 = vadd.f32 %v240, %v347
  %v360 = vadd.f32 %v241, %v352
  %v361 = vadd.f32 %v242, %v355
  %362 = vst.msk [vmem:[#allocation2] sm:$0xff] %vm47, %v358
  %363 = vst.msk [vmem:[#allocation2 + $0x8] sm:$0xff] %vm47, %v359
  %364 = vst.msk [vmem:[#allocation2 + $0x10] sm:$0xff] %vm47, %v360
  %365 = vst.msk [vmem:[#allocation2 + $0x18] sm:$0xff] %vm47, %v361
  // Predicated region
  $region38: #{model_forward.26} parent=0 // pred_check
    %p366 = pneg %p30
  $region39: #{model_forward.26} parent=0 // pred_check_branch
    %368 = sbr.rel (%p366) target = $region41
  $region40: #{model_forward.26} parent=0 // pred_region
    %v369 = vld [vmem:[#allocation2] sm:$0xff]
    %v370 = vld [vmem:[#allocation2 + $0x8] sm:$0xff]
    %v371 = vld [vmem:[#allocation2 + $0x10] sm:$0xff]
    %v372 = vld [vmem:[#allocation2 + $0x18] sm:$0xff]
    %v373 = vld [vmem:[%s6] sm:$0x1]
    %v375 = vlaneseq
    %v376 = vshrl.u32 %v375, 7
    %v377 = vsub.s32 0, %v376
    %v378 = vrot.slane %v373, %v377
    %v380 = vadd.f32 %v369, %v378
    %v381 = vadd.f32 %v370, %v378
    %v382 = vadd.f32 %v371, %v378
    %v383 = vadd.f32 %v372, %v378
    %v384 = vld [vmem:[%s7] sm:$0xf]
    %v385 = vld [vmem:[%s7 + $0x4] sm:$0xf]
    %v386 = vld [vmem:[%s7 + $0x8] sm:$0xf]
    %v387 = vld [vmem:[%s7 + $0xc] sm:$0xf]
    %v388 = vunpack.c.l.bf16 %v384
    %v389 = vunpack.c.l.bf16 %v385
    %v390 = vunpack.c.l.bf16 %v386
    %v391 = vunpack.c.l.bf16 %v387
    %v392 = vadd.f32 %v380, %v388
    %v393 = vadd.f32 %v381, %v389
    %v394 = vadd.f32 %v382, %v390
    %v395 = vadd.f32 %v383, %v391
    %v396 = vpack.c.bf16 %v393, %v392
    %v397 = vpack.c.bf16 %v395, %v394
    %v400 = vunpack.c.l.b16 %v396
    %v401 = vunpack.c.h.b16 %v396
    %v402 = vunpack.c.l.b16 %v397
    %v403 = vunpack.c.h.b16 %v397
    %v404 = vpack.c.b16 %v400, %v400
    %v405 = vpack.c.b16 %v401, %v401
    %v406 = vpack.c.b16 %v402, %v402
    %v407 = vpack.c.b16 %v403, %v403
    %vm412 = vcmask 257024
    %413 = vst.msk [vmem:[%s8] sm:$0xf] %vm412, %v404
    %414 = vst.msk [vmem:[%s8 + $0x4] sm:$0xf] %vm412, %v405
    %415 = vst.msk [vmem:[%s8 + $0x8] sm:$0xf] %vm412, %v406
    %416 = vst.msk [vmem:[%s8 + $0xc] sm:$0xf] %vm412, %v407
  $region41: #{model_forward.26} parent=0 // pred_fallthru
    _
  // Predicated region
  $region42: #{model_forward.26} parent=0 // pred_check
    _
  $region43: #{model_forward.26} parent=0 // pred_check_branch
    %418 = sbr.rel (0) target = $region45
  $region44: #{model_forward.26} parent=0 // pred_region
    _
  $region45: #{model_forward.26} parent=0 // pred_fallthru
    _
  // Predicated region
  $region46: #{model_forward.26} parent=0 // pred_check
    _
  $region47: #{model_forward.26} parent=0 // pred_check_branch
    %420 = sbr.rel (0) target = $region49
  $region48: #{model_forward.26} parent=0 // pred_region
    _
  $region49: #{model_forward.26} parent=0 // pred_fallthru
    _

// kernel: model_forward.24
$region0: #{model_forward.24}
  #allocation0 [shape = 'u32[]', space=smem, size = 0x4, offset = 0x4, fixed_abs, tag = 'smem constant byte address 0x4 - core index']
  #allocation1 [shape = 'u32[144,128]{1,0:T(1,128)}', space=vmem, size = 0x12000, scoped, tag = 'internal scratch']
  %s0 = inlined_call_operand.vmem [shape: bf16[2,16,32], index: 0, kind: input, shape index: {}]
  %s1 = inlined_call_operand.vmem [shape: bf16[2,8,64], index: 1, kind: input, shape index: {}]
  %s2 = inlined_call_operand.vmem [shape: bf16[2,16,32], index: 2, kind: output, shape index: {}]
  %s3 = sld [smem:[#allocation0]]
  $region41: #{model_forward.24} parent=0
    _
  %s5 = ssub.s32 1, %s3
  %s6 = scalar_select 0, %s5, %s3
  loop: start=0, step=1, limit=4
  $region2: #{model_forward.24} parent=0 // loop_pre_header
    _
  $region3: #{model_forward.24} parent=0 // loop_header
    %s8 = sphi 0, %s12
    %p9 = scmp.ge.s32.totalorder %s8, 4
    %s18 = sphi 0, %s20
    %s21 = sphi 0, %s18
    %s22 = sphi 0, %s21
    %s38 = sphi 0, %s22
    %s44 = sphi 0, %s46
    %s47 = sphi 0, %s44
    %s48 = sphi 0, %s47
    %s64 = sphi 0, %s48
    %s70 = sphi 0, %s72
    %s73 = sphi 0, %s70
    %s74 = sphi 0, %s73
    %s90 = sphi 0, %s74
  $region4: #{model_forward.24} parent=0 // loop_header_branch
    %11 = sbr.rel (%p9) target = $region8
  $region5: #{model_forward.24} parent=0 // loop_body
    %s13 = ssub.s32 %s8, 1
    %s14 = ssub.s32 %s8, 2
    %s15 = sadd.s32 %s8, 1
    %s16 = ssub.s32 %s8, %s15
    %p17 = scmp.eq.s32.totalorder %s16, 0
    %s19 = sadd.s32 %s18, 1
    %s20 = scalar_select %p17, %s18, %s19
    %p23 = pneg %p17
    %p24 = scmp.eq.s32.totalorder %s8, 1
    %p25 = por %p23, %p24
    %p26 = scmp.ne.s32.totalorder %s18, %s21
    %p27 = scmp.eq.s32.totalorder %s8, 0
    %p28 = por %p26, %p27
    %p29 = scmp.ne.s32.totalorder %s18, %s21
    %p30 = scmp.eq.s32.totalorder %s13, 1
    %p31 = por %p29, %p30
    %p32 = scmp.ne.s32.totalorder %s21, %s22
    %p33 = scmp.eq.s32.totalorder %s13, 0
    %p34 = por %p32, %p33
    %p35 = scmp.ne.s32.totalorder %s21, %s22
    %p36 = scmp.eq.s32.totalorder %s14, 1
    %p37 = por %p35, %p36
    %p39 = scmp.ne.s32.totalorder %s22, %s38
    %p40 = scmp.eq.s32.totalorder %s14, 0
    %p41 = por %p39, %p40
    %s42 = ssub.s32 %s8, %s15
    %p43 = scmp.eq.s32.totalorder %s42, 0
    %s45 = sadd.s32 %s44, 1
    %s46 = scalar_select %p43, %s44, %s45
    %p49 = pneg %p43
    %p50 = scmp.eq.s32.totalorder %s8, 1
    %p51 = por %p49, %p50
    %p52 = scmp.ne.s32.totalorder %s44, %s47
    %p53 = scmp.eq.s32.totalorder %s8, 0
    %p54 = por %p52, %p53
    %p55 = scmp.ne.s32.totalorder %s44, %s47
    %p56 = scmp.eq.s32.totalorder %s13, 1
    %p57 = por %p55, %p56
    %p58 = scmp.ne.s32.totalorder %s47, %s48
    %p59 = scmp.eq.s32.totalorder %s13, 0
    %p60 = por %p58, %p59
    %p61 = scmp.ne.s32.totalorder %s47, %s48
    %p62 = scmp.eq.s32.totalorder %s14, 1
    %p63 = por %p61, %p62
    %p65 = scmp.ne.s32.totalorder %s48, %s64
    %p66 = scmp.eq.s32.totalorder %s14, 0
    %p67 = por %p65, %p66
    %s68 = ssub.s32 %s8, %s15
    %p69 = scmp.eq.s32.totalorder %s68, 0
    %s71 = sadd.s32 %s70, 1
    %s72 = scalar_select %p69, %s70, %s71
    %p75 = pneg %p69
    %p76 = scmp.eq.s32.totalorder %s8, 1
    %p77 = por %p75, %p76
    %p78 = scmp.ne.s32.totalorder %s70, %s73
    %p79 = scmp.eq.s32.totalorder %s8, 0
    %p80 = por %p78, %p79
    %p81 = scmp.ne.s32.totalorder %s70, %s73
    %p82 = scmp.eq.s32.totalorder %s13, 1
    %p83 = por %p81, %p82
    %p84 = scmp.ne.s32.totalorder %s73, %s74
    %p85 = scmp.eq.s32.totalorder %s13, 0
    %p86 = por %p84, %p85
    %p87 = scmp.ne.s32.totalorder %s73, %s74
    %p88 = scmp.eq.s32.totalorder %s14, 1
    %p89 = por %p87, %p88
    %p91 = scmp.ne.s32.totalorder %s74, %s90
    %p92 = scmp.eq.s32.totalorder %s14, 0
    %p93 = por %p91, %p92
    %p94 = scmp.le.s32.totalorder 1, %s8
    %p95 = scmp.lt.s32.totalorder %s8, 3
    %p96 = pnand %p94, %p95
    %p97 = pneg %p96
    // Predicated region
    $region9: #{model_forward.24} parent=5 // pred_check
      _
    $region10: #{model_forward.24} parent=5 // pred_check_branch
      %99 = sbr.rel (%p96) target = $region12
    $region11: #{model_forward.24} parent=5 // pred_region
      %s100 = ssub.s32 %s8, 1
    $region12: #{model_forward.24} parent=5 // pred_fallthru
      _
    %p101 = scmp.lt.s32.totalorder %s8, 2
    // Predicated region
    $region13: #{model_forward.24} parent=5 // pred_check
      %p102 = pneg %p101
    $region14: #{model_forward.24} parent=5 // pred_check_branch
      %104 = sbr.rel (%p102) target = $region16
    $region15: #{model_forward.24} parent=5 // pred_region
      // Predicated region
      $region17: #{model_forward.24} parent=15 // pred_check
        %p105 = pneg %p28
      $region18: #{model_forward.24} parent=15 // pred_check_branch
        %107 = sbr.rel (%p105) target = $region20
      $region19: #{model_forward.24} parent=15 // pred_region
        %p108 = scmp.lt.s32.totalorder %s8, 1
        %s109 = scalar_select %p108, %s8, 1
        %s110 = smul.addr %s109, 2
        %s111 = smul.addr %s110, 4
        %s112 = scalar_lea.vmem %s0, %s111
      $region20: #{model_forward.24} parent=15 // pred_fallthru
        _
      // Predicated region
      $region21: #{model_forward.24} parent=15 // pred_check
        %p113 = pneg %p54
      $region22: #{model_forward.24} parent=15 // pred_check_branch
        %115 = sbr.rel (%p113) target = $region24
      $region23: #{model_forward.24} parent=15 // pred_region
        %p116 = scmp.lt.s32.totalorder %s8, 1
        %s117 = scalar_select %p116, %s8, 1
        %s118 = smul.addr %s117, 4
        %s119 = scalar_lea.vmem %s1, %s118
      $region24: #{model_forward.24} parent=15 // pred_fallthru
        _
    $region16: #{model_forward.24} parent=5 // pred_fallthru
      _
    %p120 = scmp.le.s32.totalorder 1, %s8
    %p121 = scmp.lt.s32.totalorder %s8, 3
    %p122 = pnand %p120, %p121
    %p123 = pneg %p122
    // Predicated region
    $region25: #{model_forward.24} parent=5 // pred_check
      _
    $region26: #{model_forward.24} parent=5 // pred_check_branch
      %125 = sbr.rel (%p122) target = $region28
    $region27: #{model_forward.24} parent=5 // pred_region
      %s126 = ssub.s32 %s8, 1
      %p127 = scmp.lt.s32.totalorder %s13, 1
      %s128 = scalar_select %p127, %s13, 1
      %s129 = smul.addr %s128, 2
      %s130 = smul.addr %s129, 4
      %s131 = scalar_lea.vmem %s0, %s130
      %p132 = pneg %p34
      %p133 = pneg %p31
      %p134 = scmp.lt.s32.totalorder %s13, 1
      %s135 = scalar_select %p134, %s13, 1
      %s136 = smul.addr %s135, 4
      %s137 = scalar_lea.vmem %s1, %s136
      %p138 = pneg %p60
      %p139 = pneg %p57
      %p140 = pneg %p86
      %p141 = pneg %p83
      %p142 = scmp.lt.s32.totalorder %s13, 1
      %s143 = scalar_select %p142, %s13, 1
      %s144 = smul.addr %s143, 2
      %s145 = smul.addr %s144, 4
      %s146 = scalar_lea.vmem %s2, %s145
      %p147 = scmp.lt.s32.totalorder %s13, 1
      %s148 = scalar_select %p147, %s13, 1
      %s149 = smul.addr %s148, 2
      %s150 = smul.addr %s149, 4
      %s151 = scalar_lea.vmem %s0, %s150
      %p152 = scmp.lt.s32.totalorder %s13, 1
      %s153 = scalar_select %p152, %s13, 1
      %s154 = smul.addr %s153, 4
      %s155 = scalar_lea.vmem %s1, %s154
      %p156 = scmp.lt.s32.totalorder %s13, 1
      %s157 = scalar_select %p156, %s13, 1
      %s158 = smul.addr %s157, 2
      %s159 = smul.addr %s158, 4
      %s160 = scalar_lea.vmem %s2, %s159
      %v163 = vld [vmem:[%s151] sm:$0xf]
      %v164 = vld [vmem:[%s151 + $0x4] sm:$0xf]
      %v165 = vmul.bf16 %v163, 1052065461
      %v166 = vmul.bf16 %v164, 1052065461
      %v167 = vld [vmem:[%s155] sm:$0xf]
      %v170 = vunpack.c.l.b16 %v165
      %v171 = vunpack.c.l.b16 %v166
      %v172 = vpack.c.b16 %v171, %v170
      %vm173 = vcmask 64512
      %v175 = vsel %vm173, %v172, 0
      %v178 = vsel %vm173, %v167, 0
      %180 = vmatprep.subr.bf16.mxu0 0
      %181 = vmatpush1.bf16.xpose.msra.mxu0 %v178
      %182 = vmatprep.subr.bf16.mxu0 0
      %183 = vmatpush1.bf16.xpose.msra.mxu0 0
      %184 = vmatprep.subr.bf16.mxu0 0
      %185 = vmatpush1.bf16.xpose.msra.mxu0 0
      %186 = vmatprep.subr.bf16.mxu0 0
      %187 = vmatpush1.bf16.xpose.msra.mxu0 0
      %188 = vmatprep.subr.bf16.mxu0 0
      %189 = vmatpush1.bf16.xpose.msra.mxu0 0
      %190 = vmatprep.subr.bf16.mxu0 0
      %191 = vmatpush1.bf16.xpose.msra.mxu0 0
      %192 = vmatprep.subr.bf16.mxu0 0
      %193 = vmatpush1.bf16.xpose.msra.mxu0 0
      %194 = vmatprep.subr.bf16.mxu0 0
      %195 = vmatpush1.bf16.xpose.msra.mxu0 0
      %196 = vmatprep.subr.bf16.mxu0 0
      %197 = vmatpush1.bf16.xpose.msra.mxu0 0
      %198 = vmatprep.subr.bf16.mxu0 0
      %199 = vmatpush1.bf16.xpose.msra.mxu0 0
      %200 = vmatprep.subr.bf16.mxu0 0
      %201 = vmatpush1.bf16.xpose.msra.mxu0 0
      %202 = vmatprep.subr.bf16.mxu0 0
      %203 = vmatpush1.bf16.xpose.msra.mxu0 0
      %204 = vmatprep.subr.bf16.mxu0 0
      %205 = vmatpush1.bf16.xpose.msra.mxu0 0
      %206 = vmatprep.subr.bf16.mxu0 0
      %207 = vmatpush1.bf16.xpose.msra.mxu0 0
      %208 = vmatprep.subr.bf16.mxu0 0
      %209 = vmatpush1.bf16.xpose.msra.mxu0 0
      %210 = vmatprep.subr.bf16.mxu0 0
      %211 = vmatpush1.bf16.xpose.msra.mxu0 0
      %212 = vmatprep.mubr.bf16.mxu0 0
      %213 = vmatmul.mubr.bf16.gmra.mrb[0].mxu0 %v175
      %v214 = vpop.f32.mrb[0].mxu0
      %v215 = vadd.f32 0.0, %v214
      %v216 = vpop.f32.mrb[0].mxu0
      %v217 = vpop.f32.mrb[0].mxu0
      %v218 = vadd.f32 0.0, %v217
      %v219 = vpop.f32.mrb[0].mxu0
      %220 = vdwg.mxu0
      %v221 = vsel %vm173, %v215, -inf
      %222 = vmax.xlane.f32.xlu0 %v221
      %v223 = vpop.xlane.xlu0 %222
      %v224 = vsel %vm173, %v218, -inf
      %225 = vmax.xlane.f32.xlu0 %v224
      %v226 = vpop.xlane.xlu0 %225
      %v227 = vsub.f32 %v215, %v223
      %v228 = vsub.f32 %v218, %v226
      %v229 = vmul.f32 %v227, 1.442695
      %v230 = vpow.pop %v229
      %v231 = vmul.f32 %v228, 1.442695
      %v232 = vpow.pop %v231
      %v233 = vsel %vm173, %v230, 0.0
      %234 = vadd.xlane.f32.xlu0 %v233
      %v235 = vpop.xlane.xlu0 %234
      %v236 = vsel %vm173, %v232, 0.0
      %237 = vadd.xlane.f32.xlu0 %v236
      %v238 = vpop.xlane.xlu0 %237
      %v239 = vrcp.pop %v235
      %v240 = vrcp.pop %v238
      %v241 = vmul.f32 %v230, %v239
      %v242 = vmul.f32 %v232, %v240
      %v243 = vpack.c.bf16 %v242, %v241
      %v245 = vunpack.c.l.b16 %v167
      %v246 = vpack.c.b16 %v245, %v245
      %247 = vrot.lane.b32.xlu0 %v246, 96
      %v248 = vpop.permute.xlu0 %247
      %v250 = vsel %vm173, %v243, 0
      %vm252 = vcmask 1043456
      %v254 = vsel %vm252, %v248, 0
      %256 = vmatprep.subr.bf16.mxu0 0
      %257 = vmatpush1.bf16.msra.mxu0 %v254
      %258 = vmatprep.subr.bf16.mxu0 0
      %259 = vmatpush1.bf16.msra.mxu0 0
      %260 = vmatprep.subr.bf16.mxu0 0
      %261 = vmatpush1.bf16.msra.mxu0 0
      %262 = vmatprep.subr.bf16.mxu0 0
      %263 = vmatpush1.bf16.msra.mxu0 0
      %264 = vmatprep.subr.bf16.mxu0 0
      %265 = vmatpush1.bf16.msra.mxu0 0
      %266 = vmatprep.subr.bf16.mxu0 0
      %267 = vmatpush1.bf16.msra.mxu0 0
      %268 = vmatprep.subr.bf16.mxu0 0
      %269 = vmatpush1.bf16.msra.mxu0 0
      %270 = vmatprep.subr.bf16.mxu0 0
      %271 = vmatpush1.bf16.msra.mxu0 0
      %272 = vmatprep.subr.bf16.mxu0 0
      %273 = vmatpush1.bf16.msra.mxu0 0
      %274 = vmatprep.subr.bf16.mxu0 0
      %275 = vmatpush1.bf16.msra.mxu0 0
      %276 = vmatprep.subr.bf16.mxu0 0
      %277 = vmatpush1.bf16.msra.mxu0 0
      %278 = vmatprep.subr.bf16.mxu0 0
      %279 = vmatpush1.bf16.msra.mxu0 0
      %280 = vmatprep.subr.bf16.mxu0 0
      %281 = vmatpush1.bf16.msra.mxu0 0
      %282 = vmatprep.subr.bf16.mxu0 0
      %283 = vmatpush1.bf16.msra.mxu0 0
      %284 = vmatprep.subr.bf16.mxu0 0
      %285 = vmatpush1.bf16.msra.mxu0 0
      %286 = vmatprep.subr.bf16.mxu0 0
      %287 = vmatpush1.bf16.msra.mxu0 0
      %288 = vmatprep.mubr.bf16.mxu0 0
      %289 = vmatmul.mubr.bf16.gmra.mrb[0].mxu0 %v250
      %v290 = vpop.f32.mrb[0].mxu0
      %v291 = vadd.f32 0.0, %v290
      %v292 = vpop.f32.mrb[0].mxu0
      %v293 = vpop.f32.mrb[0].mxu0
      %v294 = vadd.f32 0.0, %v293
      %v295 = vpop.f32.mrb[0].mxu0
      %296 = vdwg.mxu0
      %v297 = vpack.c.bf16 %v294, %v291
      %v299 = vunpack.c.l.b16 %v297
      %v300 = vunpack.c.h.b16 %v297
      %v301 = vpack.c.b16 %v299, %v299
      %v302 = vpack.c.b16 %v300, %v300
      %vm305 = vcmask 60416
      %306 = vst.msk [vmem:[%s160] sm:$0xf] %vm305, %v301
      %307 = vst.msk [vmem:[%s160 + $0x4] sm:$0xf] %vm305, %v302
      %308 = vrot.lane.b32.xlu0 %v172, 120
      %v309 = vpop.permute.xlu0 %308
      %310 = vrot.lane.b32.xlu0 %v246, 120
      %v311 = vpop.permute.xlu0 %310
      %v313 = vsel %vm173, %v309, 0
      %v316 = vsel %vm173, %v311, 0
      %318 = vmatprep.subr.bf16.mxu0 0
      %319 = vmatpush1.bf16.xpose.msra.mxu0 %v316
      %320 = vmatprep.subr.bf16.mxu0 0
      %321 = vmatpush1.bf16.xpose.msra.mxu0 0
      %322 = vmatprep.subr.bf16.mxu0 0
      %323 = vmatpush1.bf16.xpose.msra.mxu0 0
      %324 = vmatprep.subr.bf16.mxu0 0
      %325 = vmatpush1.bf16.xpose.msra.mxu0 0
      %326 = vmatprep.subr.bf16.mxu0 0
      %327 = vmatpush1.bf16.xpose.msra.mxu0 0
      %328 = vmatprep.subr.bf16.mxu0 0
      %329 = vmatpush1.bf16.xpose.msra.mxu0 0
      %330 = vmatprep.subr.bf16.mxu0 0
      %331 = vmatpush1.bf16.xpose.msra.mxu0 0
      %332 = vmatprep.subr.bf16.mxu0 0
      %333 = vmatpush1.bf16.xpose.msra.mxu0 0
      %334 = vmatprep.subr.bf16.mxu0 0
      %335 = vmatpush1.bf16.xpose.msra.mxu0 0
      %336 = vmatprep.subr.bf16.mxu0 0
      %337 = vmatpush1.bf16.xpose.msra.mxu0 0
      %338 = vmatprep.subr.bf16.mxu0 0
      %339 = vmatpush1.bf16.xpose.msra.mxu0 0
      %340 = vmatprep.subr.bf16.mxu0 0
      %341 = vmatpush1.bf16.xpose.msra.mxu0 0
      %342 = vmatprep.subr.bf16.mxu0 0
      %343 = vmatpush1.bf16.xpose.msra.mxu0 0
      %344 = vmatprep.subr.bf16.mxu0 0
      %345 = vmatpush1.bf16.xpose.msra.mxu0 0
      %346 = vmatprep.subr.bf16.mxu0 0
      %347 = vmatpush1.bf16.xpose.msra.mxu0 0
      %348 = vmatprep.subr.bf16.mxu0 0
      %349 = vmatpush1.bf16.xpose.msra.mxu0 0
      %350 = vmatprep.mubr.bf16.mxu0 0
      %351 = vmatmul.mubr.bf16.gmra.mrb[0].mxu0 %v313
      %v352 = vpop.f32.mrb[0].mxu0
      %v353 = vadd.f32 0.0, %v352
      %v354 = vpop.f32.mrb[0].mxu0
      %v355 = vpop.f32.mrb[0].mxu0
      %v356 = vadd.f32 0.0, %v355
      %v357 = vpop.f32.mrb[0].mxu0
      %358 = vdwg.mxu0
      %v359 = vsel %vm173, %v353, -inf
      %360 = vmax.xlane.f32.xlu0 %v359
      %v361 = vpop.xlane.xlu0 %360
      %v362 = vsel %vm173, %v356, -inf
      %363 = vmax.xlane.f32.xlu0 %v362
      %v364 = vpop.xlane.xlu0 %363
      %v365 = vsub.f32 %v353, %v361
      %v366 = vsub.f32 %v356, %v364
      %v367 = vmul.f32 %v365, 1.442695
      %v368 = vpow.pop %v367
      %v369 = vmul.f32 %v366, 1.442695
      %v370 = vpow.pop %v369
      %v371 = vsel %vm173, %v368, 0.0
      %372 = vadd.xlane.f32.xlu0 %v371
      %v373 = vpop.xlane.xlu0 %372
      %v374 = vsel %vm173, %v370, 0.0
      %375 = vadd.xlane.f32.xlu0 %v374
      %v376 = vpop.xlane.xlu0 %375
      %v377 = vrcp.pop %v373
      %v378 = vrcp.pop %v376
      %v379 = vmul.f32 %v368, %v377
      %v380 = vmul.f32 %v370, %v378
      %v381 = vpack.c.bf16 %v380, %v379
      %382 = vrot.lane.b32.xlu0 %v246, 88
      %v383 = vpop.permute.xlu0 %382
      %v385 = vsel %vm173, %v381, 0
      %v388 = vsel %vm252, %v383, 0
      %390 = vmatprep.subr.bf16.mxu0 0
      %391 = vmatpush1.bf16.msra.mxu0 %v388
      %392 = vmatprep.subr.bf16.mxu0 0
      %393 = vmatpush1.bf16.msra.mxu0 0
      %394 = vmatprep.subr.bf16.mxu0 0
      %395 = vmatpush1.bf16.msra.mxu0 0
      %396 = vmatprep.subr.bf16.mxu0 0
      %397 = vmatpush1.bf16.msra.mxu0 0
      %398 = vmatprep.subr.bf16.mxu0 0
      %399 = vmatpush1.bf16.msra.mxu0 0
      %400 = vmatprep.subr.bf16.mxu0 0
      %401 = vmatpush1.bf16.msra.mxu0 0
      %402 = vmatprep.subr.bf16.mxu0 0
      %403 = vmatpush1.bf16.msra.mxu0 0
      %404 = vmatprep.subr.bf16.mxu0 0
      %405 = vmatpush1.bf16.msra.mxu0 0
      %406 = vmatprep.subr.bf16.mxu0 0
      %407 = vmatpush1.bf16.msra.mxu0 0
      %408 = vmatprep.subr.bf16.mxu0 0
      %409 = vmatpush1.bf16.msra.mxu0 0
      %410 = vmatprep.subr.bf16.mxu0 0
      %411 = vmatpush1.bf16.msra.mxu0 0
      %412 = vmatprep.subr.bf16.mxu0 0
      %413 = vmatpush1.bf16.msra.mxu0 0
      %414 = vmatprep.subr.bf16.mxu0 0
      %415 = vmatpush1.bf16.msra.mxu0 0
      %416 = vmatprep.subr.bf16.mxu0 0
      %417 = vmatpush1.bf16.msra.mxu0 0
      %418 = vmatprep.subr.bf16.mxu0 0
      %419 = vmatpush1.bf16.msra.mxu0 0
      %420 = vmatprep.subr.bf16.mxu0 0
      %421 = vmatpush1.bf16.msra.mxu0 0
      %422 = vmatprep.mubr.bf16.mxu0 0
      %423 = vmatmul.mubr.bf16.gmra.mrb[0].mxu0 %v385
      %v424 = vpop.f32.mrb[0].mxu0
      %v425 = vadd.f32 0.0, %v424
      %v426 = vpop.f32.mrb[0].mxu0
      %v427 = vpop.f32.mrb[0].mxu0
      %v428 = vadd.f32 0.0, %v427
      %v429 = vpop.f32.mrb[0].mxu0
      %430 = vdwg.mxu0
      %v431 = vpack.c.bf16 %v428, %v425
      %v433 = vunpack.c.l.b16 %v431
      %v434 = vunpack.c.h.b16 %v431
      %v435 = vpack.c.b16 %v433, %v433
      %v436 = vpack.c.b16 %v434, %v434
      %437 = vrot.lane.b32.xlu0 %v435, 8
      %v438 = vpop.permute.xlu0 %437
      %439 = vrot.lane.b32.xlu0 %v436, 8
      %v440 = vpop.permute.xlu0 %439
      %vm443 = vcmask 126016
      %444 = vst.msk [vmem:[%s160] sm:$0xf] %vm443, %v438
      %445 = vst.msk [vmem:[%s160 + $0x4] sm:$0xf] %vm443, %v440
      %446 = vrot.lane.b32.xlu0 %v172, 112
      %v447 = vpop.permute.xlu0 %446
      %448 = vrot.lane.b32.xlu0 %v246, 112
      %v449 = vpop.permute.xlu0 %448
      %v451 = vsel %vm173, %v447, 0
      %v454 = vsel %vm173, %v449, 0
      %456 = vmatprep.subr.bf16.mxu0 0
      %457 = vmatpush1.bf16.xpose.msra.mxu0 %v454
      %458 = vmatprep.subr.bf16.mxu0 0
      %459 = vmatpush1.bf16.xpose.msra.mxu0 0
      %460 = vmatprep.subr.bf16.mxu0 0
      %461 = vmatpush1.bf16.xpose.msra.mxu0 0
      %462 = vmatprep.subr.bf16.mxu0 0
      %463 = vmatpush1.bf16.xpose.msra.mxu0 0
      %464 = vmatprep.subr.bf16.mxu0 0
      %465 = vmatpush1.bf16.xpose.msra.mxu0 0
      %466 = vmatprep.subr.bf16.mxu0 0
      %467 = vmatpush1.bf16.xpose.msra.mxu0 0
      %468 = vmatprep.subr.bf16.mxu0 0
      %469 = vmatpush1.bf16.xpose.msra.mxu0 0
      %470 = vmatprep.subr.bf16.mxu0 0
      %471 = vmatpush1.bf16.xpose.msra.mxu0 0
      %472 = vmatprep.subr.bf16.mxu0 0
      %473 = vmatpush1.bf16.xpose.msra.mxu0 0
      %474 = vmatprep.subr.bf16.mxu0 0
      %475 = vmatpush1.bf16.xpose.msra.mxu0 0
      %476 = vmatprep.subr.bf16.mxu0 0
      %477 = vmatpush1.bf16.xpose.msra.mxu0 0
      %478 = vmatprep.subr.bf16.mxu0 0
      %479 = vmatpush1.bf16.xpose.msra.mxu0 0
      %480 = vmatprep.subr.bf16.mxu0 0
      %481 = vmatpush1.bf16.xpose.msra.mxu0 0
      %482 = vmatprep.subr.bf16.mxu0 0
      %483 = vmatpush1.bf16.xpose.msra.mxu0 0
      %484 = vmatprep.subr.bf16.mxu0 0
      %485 = vmatpush1.bf16.xpose.msra.mxu0 0
      %486 = vmatprep.subr.bf16.mxu0 0
      %487 = vmatpush1.bf16.xpose.msra.mxu0 0
      %488 = vmatprep.mubr.bf16.mxu0 0
      %489 = vmatmul.mubr.bf16.gmra.mrb[0].mxu0 %v451
      %v490 = vpop.f32.mrb[0].mxu0
      %v491 = vadd.f32 0.0, %v490
      %v492 = vpop.f32.mrb[0].mxu0
      %v493 = vpop.f32.mrb[0].mxu0
      %v494 = vadd.f32 0.0, %v493
      %v495 = vpop.f32.mrb[0].mxu0
      %496 = vdwg.mxu0
      %v497 = vsel %vm173, %v491, -inf
      %498 = vmax.xlane.f32.xlu0 %v497
      %v499 = vpop.xlane.xlu0 %498
      %v500 = vsel %vm173, %v494, -inf
      %501 = vmax.xlane.f32.xlu0 %v500
      %v502 = vpop.xlane.xlu0 %501
      %v503 = vsub.f32 %v491, %v499
      %v504 = vsub.f32 %v494, %v502
      %v505 = vmul.f32 %v503, 1.442695
      %v506 = vpow.pop %v505
      %v507 = vmul.f32 %v504, 1.442695
      %v508 = vpow.pop %v507
      %v509 = vsel %vm173, %v506, 0.0
      %510 = vadd.xlane.f32.xlu0 %v509
      %v511 = vpop.xlane.xlu0 %510
      %v512 = vsel %vm173, %v508, 0.0
      %513 = vadd.xlane.f32.xlu0 %v512
      %v514 = vpop.xlane.xlu0 %513
      %v515 = vrcp.pop %v511
      %v516 = vrcp.pop %v514
      %v517 = vmul.f32 %v506, %v515
      %v518 = vmul.f32 %v508, %v516
      %v519 = vpack.c.bf16 %v518, %v517
      %520 = vrot.lane.b32.xlu0 %v246, 80
      %v521 = vpop.permute.xlu0 %520
      %v523 = vsel %vm173, %v519, 0
      %v526 = vsel %vm252, %v521, 0
      %528 = vmatprep.subr.bf16.mxu0 0
      %529 = vmatpush1.bf16.msra.mxu0 %v526
      %530 = vmatprep.subr.bf16.mxu0 0
      %531 = vmatpush1.bf16.msra.mxu0 0
      %532 = vmatprep.subr.bf16.mxu0 0
      %533 = vmatpush1.bf16.msra.mxu0 0
      %534 = vmatprep.subr.bf16.mxu0 0
      %535 = vmatpush1.bf16.msra.mxu0 0
      %536 = vmatprep.subr.bf16.mxu0 0
      %537 = vmatpush1.bf16.msra.mxu0 0
      %538 = vmatprep.subr.bf16.mxu0 0
      %539 = vmatpush1.bf16.msra.mxu0 0
      %540 = vmatprep.subr.bf16.mxu0 0
      %541 = vmatpush1.bf16.msra.mxu0 0
      %542 = vmatprep.subr.bf16.mxu0 0
      %543 = vmatpush1.bf16.msra.mxu0 0
      %544 = vmatprep.subr.bf16.mxu0 0
      %545 = vmatpush1.bf16.msra.mxu0 0
      %546 = vmatprep.subr.bf16.mxu0 0
      %547 = vmatpush1.bf16.msra.mxu0 0
      %548 = vmatprep.subr.bf16.mxu0 0
      %549 = vmatpush1.bf16.msra.mxu0 0
      %550 = vmatprep.subr.bf16.mxu0 0
      %551 = vmatpush1.bf16.msra.mxu0 0
      %552 = vmatprep.subr.bf16.mxu0 0
      %553 = vmatpush1.bf16.msra.mxu0 0
      %554 = vmatprep.subr.bf16.mxu0 0
      %555 = vmatpush1.bf16.msra.mxu0 0
      %556 = vmatprep.subr.bf16.mxu0 0
      %557 = vmatpush1.bf16.msra.mxu0 0
      %558 = vmatprep.subr.bf16.mxu0 0
      %559 = vmatpush1.bf16.msra.mxu0 0
      %560 = vmatprep.mubr.bf16.mxu0 0
      %561 = vmatmul.mubr.bf16.gmra.mrb[0].mxu0 %v523
      %v562 = vpop.f32.mrb[0].mxu0
      %v563 = vadd.f32 0.0, %v562
      %v564 = vpop.f32.mrb[0].mxu0
      %v565 = vpop.f32.mrb[0].mxu0
      %v566 = vadd.f32 0.0, %v565
      %v567 = vpop.f32.mrb[0].mxu0
      %568 = vdwg.mxu0
      %v569 = vpack.c.bf16 %v566, %v563
      %v571 = vunpack.c.l.b16 %v569
      %v572 = vunpack.c.h.b16 %v569
      %v573 = vpack.c.b16 %v571, %v571
      %v574 = vpack.c.b16 %v572, %v572
      %575 = vrot.lane.b32.xlu0 %v573, 16
      %v576 = vpop.permute.xlu0 %575
      %577 = vrot.lane.b32.xlu0 %v574, 16
      %v578 = vpop.permute.xlu0 %577
      %vm581 = vcmask 191616
      %582 = vst.msk [vmem:[%s160] sm:$0xf] %vm581, %v576
      %583 = vst.msk [vmem:[%s160 + $0x4] sm:$0xf] %vm581, %v578
      %584 = vrot.lane.b32.xlu0 %v172, 104
      %v585 = vpop.permute.xlu0 %584
      %586 = vrot.lane.b32.xlu0 %v246, 104
      %v587 = vpop.permute.xlu0 %586
      %v589 = vsel %vm173, %v585, 0
      %v592 = vsel %vm173, %v587, 0
      %594 = vmatprep.subr.bf16.mxu0 0
      %595 = vmatpush1.bf16.xpose.msra.mxu0 %v592
      %596 = vmatprep.subr.bf16.mxu0 0
      %597 = vmatpush1.bf16.xpose.msra.mxu0 0
      %598 = vmatprep.subr.bf16.mxu0 0
      %599 = vmatpush1.bf16.xpose.msra.mxu0 0
      %600 = vmatprep.subr.bf16.mxu0 0
      %601 = vmatpush1.bf16.xpose.msra.mxu0 0
      %602 = vmatprep.subr.bf16.mxu0 0
      %603 = vmatpush1.bf16.xpose.msra.mxu0 0
      %604 = vmatprep.subr.bf16.mxu0 0
      %605 = vmatpush1.bf16.xpose.msra.mxu0 0
      %606 = vmatprep.subr.bf16.mxu0 0
      %607 = vmatpush1.bf16.xpose.msra.mxu0 0
      %608 = vmatprep.subr.bf16.mxu0 0
      %609 = vmatpush1.bf16.xpose.msra.mxu0 0
      %610 = vmatprep.subr.bf16.mxu0 0
      %611 = vmatpush1.bf16.xpose.msra.mxu0 0
      %612 = vmatprep.subr.bf16.mxu0 0
      %613 = vmatpush1.bf16.xpose.msra.mxu0 0
      %614 = vmatprep.subr.bf16.mxu0 0
      %615 = vmatpush1.bf16.xpose.msra.mxu0 0
      %616 = vmatprep.subr.bf16.mxu0 0
      %617 = vmatpush1.bf16.xpose.msra.mxu0 0
      %618 = vmatprep.subr.bf16.mxu0 0
      %619 = vmatpush1.bf16.xpose.msra.mxu0 0
      %620 = vmatprep.subr.bf16.mxu0 0
      %621 = vmatpush1.bf16.xpose.msra.mxu0 0
      %622 = vmatprep.subr.bf16.mxu0 0
      %623 = vmatpush1.bf16.xpose.msra.mxu0 0
      %624 = vmatprep.subr.bf16.mxu0 0
      %625 = vmatpush1.bf16.xpose.msra.mxu0 0
      %626 = vmatprep.mubr.bf16.mxu0 0
      %627 = vmatmul.mubr.bf16.gmra.mrb[0].mxu0 %v589
      %v628 = vpop.f32.mrb[0].mxu0
      %v629 = vadd.f32 0.0, %v628
      %v630 = vpop.f32.mrb[0].mxu0
      %v631 = vpop.f32.mrb[0].mxu0
      %v632 = vadd.f32 0.0, %v631
      %v633 = vpop.f32.mrb[0].mxu0
      %634 = vdwg.mxu0
      %v635 = vsel %vm173, %v629, -inf
      %636 = vmax.xlane.f32.xlu0 %v635
      %v637 = vpop.xlane.xlu0 %636
      %v638 = vsel %vm173, %v632, -inf
      %639 = vmax.xlane.f32.xlu0 %v638
      %v640 = vpop.xlane.xlu0 %639
      %v641 = vsub.f32 %v629, %v637
      %v642 = vsub.f32 %v632, %v640
      %v643 = vmul.f32 %v641, 1.442695
      %v644 = vpow.pop %v643
      %v645 = vmul.f32 %v642, 1.442695
      %v646 = vpow.pop %v645
      %v647 = vsel %vm173, %v644, 0.0
      %648 = vadd.xlane.f32.xlu0 %v647
      %v649 = vpop.xlane.xlu0 %648
      %v650 = vsel %vm173, %v646, 0.0
      %651 = vadd.xlane.f32.xlu0 %v650
      %v652 = vpop.xlane.xlu0 %651
      %v653 = vrcp.pop %v649
      %v654 = vrcp.pop %v652
      %v655 = vmul.f32 %v644, %v653
      %v656 = vmul.f32 %v646, %v654
      %v657 = vpack.c.bf16 %v656, %v655
      %658 = vrot.lane.b32.xlu0 %v246, 72
      %v659 = vpop.permute.xlu0 %658
      %v661 = vsel %vm173, %v657, 0
      %v664 = vsel %vm252, %v659, 0
      %666 = vmatprep.subr.bf16.mxu0 0
      %667 = vmatpush1.bf16.msra.mxu0 %v664
      %668 = vmatprep.subr.bf16.mxu0 0
      %669 = vmatpush1.bf16.msra.mxu0 0
      %670 = vmatprep.subr.bf16.mxu0 0
      %671 = vmatpush1.bf16.msra.mxu0 0
      %672 = vmatprep.subr.bf16.mxu0 0
      %673 = vmatpush1.bf16.msra.mxu0 0
      %674 = vmatprep.subr.bf16.mxu0 0
      %675 = vmatpush1.bf16.msra.mxu0 0
      %676 = vmatprep.subr.bf16.mxu0 0
      %677 = vmatpush1.bf16.msra.mxu0 0
      %678 = vmatprep.subr.bf16.mxu0 0
      %679 = vmatpush1.bf16.msra.mxu0 0
      %680 = vmatprep.subr.bf16.mxu0 0
      %681 = vmatpush1.bf16.msra.mxu0 0
      %682 = vmatprep.subr.bf16.mxu0 0
      %683 = vmatpush1.bf16.msra.mxu0 0
      %684 = vmatprep.subr.bf16.mxu0 0
      %685 = vmatpush1.bf16.msra.mxu0 0
      %686 = vmatprep.subr.bf16.mxu0 0
      %687 = vmatpush1.bf16.msra.mxu0 0
      %688 = vmatprep.subr.bf16.mxu0 0
      %689 = vmatpush1.bf16.msra.mxu0 0
      %690 = vmatprep.subr.bf16.mxu0 0
      %691 = vmatpush1.bf16.msra.mxu0 0
      %692 = vmatprep.subr.bf16.mxu0 0
      %693 = vmatpush1.bf16.msra.mxu0 0
      %694 = vmatprep.subr.bf16.mxu0 0
      %695 = vmatpush1.bf16.msra.mxu0 0
      %696 = vmatprep.subr.bf16.mxu0 0
      %697 = vmatpush1.bf16.msra.mxu0 0
      %698 = vmatprep.mubr.bf16.mxu0 0
      %699 = vmatmul.mubr.bf16.gmra.mrb[0].mxu0 %v661
      %v700 = vpop.f32.mrb[0].mxu0
      %v701 = vadd.f32 0.0, %v700
      %v702 = vpop.f32.mrb[0].mxu0
      %v703 = vpop.f32.mrb[0].mxu0
      %v704 = vadd.f32 0.0, %v703
      %v705 = vpop.f32.mrb[0].mxu0
      %706 = vdwg.mxu0
      %v707 = vpack.c.bf16 %v704, %v701
      %v709 = vunpack.c.l.b16 %v707
      %v710 = vunpack.c.h.b16 %v707
      %v711 = vpack.c.b16 %v709, %v709
      %v712 = vpack.c.b16 %v710, %v710
      %713 = vrot.lane.b32.xlu0 %v711, 24
      %v714 = vpop.permute.xlu0 %713
      %715 = vrot.lane.b32.xlu0 %v712, 24
      %v716 = vpop.permute.xlu0 %715
      %vm719 = vcmask 257216
      %720 = vst.msk [vmem:[%s160] sm:$0xf] %vm719, %v714
      %721 = vst.msk [vmem:[%s160 + $0x4] sm:$0xf] %vm719, %v716
      %p722 = scmp.lt.s32.totalorder %s13, 1
      %s723 = scalar_select %p722, %s13, 1
      %s724 = smul.addr %s723, 2
      %s725 = smul.addr %s724, 4
      %s726 = scalar_lea.vmem %s2, %s725
      // Predicated region
      $region29: #{model_forward.24} parent=27 // pred_check
        %p727 = pneg %p83
      $region30: #{model_forward.24} parent=27 // pred_check_branch
        %729 = sbr.rel (%p727) target = $region32
      $region31: #{model_forward.24} parent=27 // pred_region
        _
      $region32: #{model_forward.24} parent=27 // pred_fallthru
        _
    $region28: #{model_forward.24} parent=5 // pred_fallthru
      _
    %p730 = scmp.le.s32.totalorder 2, %s8
    // Predicated region
    $region33: #{model_forward.24} parent=5 // pred_check
      %p731 = pneg %p730
    $region34: #{model_forward.24} parent=5 // pred_check_branch
      %733 = sbr.rel (%p731) target = $region36
    $region35: #{model_forward.24} parent=5 // pred_region
      %s734 = ssub.s32 %s8, 2
      // Predicated region
      $region37: #{model_forward.24} parent=35 // pred_check
        %p735 = pneg %p89
      $region38: #{model_forward.24} parent=35 // pred_check_branch
        %737 = sbr.rel (%p735) target = $region40
      $region39: #{model_forward.24} parent=35 // pred_region
        %p738 = scmp.lt.s32.totalorder %s14, 1
        %s739 = scalar_select %p738, %s14, 1
        %s740 = smul.addr %s739, 2
        %s741 = smul.addr %s740, 4
        %s742 = scalar_lea.vmem %s2, %s741
      $region40: #{model_forward.24} parent=35 // pred_fallthru
        _
    $region36: #{model_forward.24} parent=5 // pred_fallthru
      _
  $region6: #{model_forward.24} parent=0 // loop_footer
    %s12 = sadd.s32 1, %s8
  $region7: #{model_forward.24} parent=0 // loop_footer_branch
    %7 = sbr.rel target = $region3
  $region8: #{model_forward.24} parent=0 // loop_exit
    _

// kernel: model_forward.35
$region0: #{model_forward.35}
  #allocation0 [shape = 'u32[]', space=smem, size = 0x4, offset = 0x4, fixed_abs, tag = 'smem constant byte address 0x4 - core index']
  #allocation1 [shape = 'u32[144,128]{1,0:T(1,128)}', space=vmem, size = 0x12000, scoped, tag = 'internal scratch']
  %s0 = inlined_call_operand.vmem [shape: bf16[32,32], index: 0, kind: input, shape index: {}]
  %s1 = inlined_call_operand.vmem [shape: f32[1,32], index: 1, kind: input, shape index: {}]
  %s2 = inlined_call_operand.vmem [shape: f32[1,32], index: 2, kind: input, shape index: {}]
  %s3 = inlined_call_operand.vmem [shape: bf16[32,1024], index: 3, kind: input, shape index: {}]
  %s4 = inlined_call_operand.vmem [shape: f32[1,1024], index: 4, kind: input, shape index: {}]
  %s5 = inlined_call_operand.vmem [shape: s32[32,1], index: 5, kind: input, shape index: {}]
  %s6 = inlined_call_operand.hbm [shape: f32[32,1024], index: 6, kind: output, shape index: {0}]
  %s7 = inlined_call_operand.hbm [shape: f32[1,1], index: 7, kind: output, shape index: {1}]
  %s8 = inlined_call_operand.hbm [shape: f32[1,1], index: 8, kind: output, shape index: {2}]
  %9 = xla_tuple %s6, %s7, %s8
  %s10 = sld [smem:[#allocation0]]
  $region54: #{model_forward.35} parent=0
    _
  %s12 = ssub.s32 1, %s10
  %s13 = scalar_select 0, %s12, %s10
  $region1: #{model_forward.35} parent=0
    #allocation2 [shape = 'u8[131072]{0}', space=vmem, size = 0x20000, scoped, tag = 'output window, operand 0, single buffered']
    #allocation3 [shape = 's32[1]{0}', space=sflag, size = 0x4, scoped, tag = 'scoped memory for model_forward.35']
    #allocation4 [shape = 'u8[512]{0}', space=vmem, size = 0x400, scoped, tag = 'output window, operand 1, single buffered']
    #allocation5 [shape = 's32[1]{0}', space=sflag, size = 0x4, scoped, tag = 'scoped memory for model_forward.35']
    #allocation6 [shape = 'u8[512]{0}', space=vmem, size = 0x400, scoped, tag = 'output window, operand 2, single buffered']
    %14 = vsyncpa [#allocation3], 0
    %15 = vsyncpa [#allocation5], 0
    // Predicated region
    $region2: #{model_forward.35} parent=1 // pred_check
      _
    $region3: #{model_forward.35} parent=1 // pred_check_branch
      %17 = sbr.rel (0) target = $region5
    $region4: #{model_forward.35} parent=1 // pred_region
      _
    $region5: #{model_forward.35} parent=1 // pred_fallthru
      _
    // Predicated region
    $region6: #{model_forward.35} parent=1 // pred_check
      _
    $region7: #{model_forward.35} parent=1 // pred_check_branch
      %19 = sbr.rel (0) target = $region9
    $region8: #{model_forward.35} parent=1 // pred_region
      _
    $region9: #{model_forward.35} parent=1 // pred_fallthru
      _
    // Predicated region
    $region10: #{model_forward.35} parent=1 // pred_check
      _
    $region11: #{model_forward.35} parent=1 // pred_check_branch
      %21 = sbr.rel (0) target = $region13
    $region12: #{model_forward.35} parent=1 // pred_region
      _
    $region13: #{model_forward.35} parent=1 // pred_fallthru
      _
    // Predicated region
    $region14: #{model_forward.35} parent=1 // pred_check
      _
    $region15: #{model_forward.35} parent=1 // pred_check_branch
      %23 = sbr.rel (0) target = $region17
    $region16: #{model_forward.35} parent=1 // pred_region
      _
    $region17: #{model_forward.35} parent=1 // pred_fallthru
      _
    // Predicated region
    $region18: #{model_forward.35} parent=1 // pred_check
      _
    $region19: #{model_forward.35} parent=1 // pred_check_branch
      %25 = sbr.rel (0) target = $region21
    $region20: #{model_forward.35} parent=1 // pred_region
      _
    $region21: #{model_forward.35} parent=1 // pred_fallthru
      _
    // Predicated region
    $region22: #{model_forward.35} parent=1 // pred_check
      _
    $region23: #{model_forward.35} parent=1 // pred_check_branch
      %27 = sbr.rel (0) target = $region25
    $region24: #{model_forward.35} parent=1 // pred_region
      _
    $region25: #{model_forward.35} parent=1 // pred_fallthru
      _
    %p29 = scmp.eq.s32.totalorder 0, 0
    // Predicated region
    $region26: #{model_forward.35} parent=1 // pred_check
      %p30 = pneg %p29
    $region27: #{model_forward.35} parent=1 // pred_check_branch
      %32 = sbr.rel (%p30) target = $region29
    $region28: #{model_forward.35} parent=1 // pred_region
      %vm33 = vcmask 0
      %34 = vst.msk [vmem:[#allocation4] sm:$0x1] %vm33, 0.0
      %35 = vst.msk [vmem:[#allocation6] sm:$0x1] %vm33, 0.0
    $region29: #{model_forward.35} parent=1 // pred_fallthru
      _
    %v36 = vld [vmem:[%s0] sm:$0xf]
    %v37 = vld [vmem:[%s0 + $0x4] sm:$0xf]
    %v38 = vld [vmem:[%s0 + $0x8] sm:$0xf]
    %v39 = vld [vmem:[%s0 + $0xc] sm:$0xf]
    %v40 = vunpack.c.l.bf16 %v36
    %v41 = vunpack.c.l.bf16 %v37
    %v42 = vunpack.c.l.bf16 %v38
    %v43 = vunpack.c.l.bf16 %v39
    %vm44 = vcmask 261120
    %v45 = vsel %vm44, %v40, 0.0
    %46 = vadd.xlane.f32.xlu0 %v45
    %v47 = vpop.xlane.xlu0 %46
    %v48 = vsel %vm44, %v41, 0.0
    %49 = vadd.xlane.f32.xlu0 %v48
    %v50 = vpop.xlane.xlu0 %49
    %v51 = vsel %vm44, %v42, 0.0
    %52 = vadd.xlane.f32.xlu0 %v51
    %v53 = vpop.xlane.xlu0 %52
    %v54 = vsel %vm44, %v43, 0.0
    %55 = vadd.xlane.f32.xlu0 %v54
    %v56 = vpop.xlane.xlu0 %55
    %v57 = vrcp.pop 32.0
    %v58 = vmul.f32 %v47, %v57
    %v59 = vmul.f32 %v50, %v57
    %v60 = vmul.f32 %v53, %v57
    %v61 = vmul.f32 %v56, %v57
    %v62 = vsub.f32 %v40, %v58
    %v63 = vsub.f32 %v41, %v59
    %v64 = vsub.f32 %v42, %v60
    %v65 = vsub.f32 %v43, %v61
    %v66 = vmul.f32 %v62, %v62
    %v67 = vmul.f32 %v63, %v63
    %v68 = vmul.f32 %v64, %v64
    %v69 = vmul.f32 %v65, %v65
    %v70 = vsel %vm44, %v66, 0.0
    %71 = vadd.xlane.f32.xlu0 %v70
    %v72 = vpop.xlane.xlu0 %71
    %v73 = vsel %vm44, %v67, 0.0
    %74 = vadd.xlane.f32.xlu0 %v73
    %v75 = vpop.xlane.xlu0 %74
    %v76 = vsel %vm44, %v68, 0.0
    %77 = vadd.xlane.f32.xlu0 %v76
    %v78 = vpop.xlane.xlu0 %77
    %v79 = vsel %vm44, %v69, 0.0
    %80 = vadd.xlane.f32.xlu0 %v79
    %v81 = vpop.xlane.xlu0 %80
    %v82 = vmul.f32 %v72, %v57
    %v83 = vmul.f32 %v75, %v57
    %v84 = vmul.f32 %v78, %v57
    %v85 = vmul.f32 %v81, %v57
    %v86 = vadd.f32 %v82, 1e-05
    %v87 = vadd.f32 %v83, 1e-05
    %v88 = vadd.f32 %v84, 1e-05
    %v89 = vadd.f32 %v85, 1e-05
    %v90 = vrsqrt.pop %v86
    %v91 = vrsqrt.pop %v87
    %v92 = vrsqrt.pop %v88
    %v93 = vrsqrt.pop %v89
    %v94 = vmul.f32 %v62, %v90
    %v95 = vmul.f32 %v63, %v91
    %v96 = vmul.f32 %v64, %v92
    %v97 = vmul.f32 %v65, %v93
    %v98 = vld [vmem:[%s1] sm:$0x1]
    %v100 = vlaneseq
    %v101 = vshrl.u32 %v100, 7
    %v102 = vsub.s32 0, %v101
    %v103 = vrot.slane %v98, %v102
    %v105 = vmul.f32 %v94, %v103
    %v106 = vmul.f32 %v95, %v103
    %v107 = vmul.f32 %v96, %v103
    %v108 = vmul.f32 %v97, %v103
    %v109 = vld [vmem:[%s2] sm:$0x1]
    %v111 = vlaneseq
    %v112 = vshrl.u32 %v111, 7
    %v113 = vsub.s32 0, %v112
    %v114 = vrot.slane %v109, %v113
    %v116 = vadd.f32 %v105, %v114
    %v117 = vadd.f32 %v106, %v114
    %v118 = vadd.f32 %v107, %v114
    %v119 = vadd.f32 %v108, %v114
    %v120 = vpack.c.bf16 %v117, %v116
    %v121 = vpack.c.bf16 %v119, %v118
    %v122 = vld [vmem:[%s3] sm:$0xff]
    %v123 = vld [vmem:[%s3 + $0x8] sm:$0xff]
    %v124 = vld [vmem:[%s3 + $0x10] sm:$0xff]
    %v125 = vld [vmem:[%s3 + $0x18] sm:$0xff]
    %v126 = vld [vmem:[%s3 + $0x20] sm:$0xff]
    %v127 = vld [vmem:[%s3 + $0x28] sm:$0xff]
    %v128 = vld [vmem:[%s3 + $0x30] sm:$0xff]
    %v129 = vld [vmem:[%s3 + $0x38] sm:$0xff]
    %v130 = vld [vmem:[%s3 + $0x40] sm:$0xff]
    %v131 = vld [vmem:[%s3 + $0x48] sm:$0xff]
    %v132 = vld [vmem:[%s3 + $0x50] sm:$0xff]
    %v133 = vld [vmem:[%s3 + $0x58] sm:$0xff]
    %v134 = vld [vmem:[%s3 + $0x60] sm:$0xff]
    %v135 = vld [vmem:[%s3 + $0x68] sm:$0xff]
    %v136 = vld [vmem:[%s3 + $0x70] sm:$0xff]
    %v137 = vld [vmem:[%s3 + $0x78] sm:$0xff]
    %v138 = vld [vmem:[%s4] sm:$0xff]
    %v140 = vlaneseq
    %v141 = vshrl.u32 %v140, 7
    %v142 = vsub.s32 0, %v141
    %v143 = vrot.slane %v138, %v142
    %v144 = vlaneseq
    %v145 = vshrl.u32 %v144, 7
    %v146 = vsub.s32 1, %v145
    %v147 = vrot.slane %v138, %v146
    %v148 = vlaneseq
    %v149 = vshrl.u32 %v148, 7
    %v150 = vsub.s32 2, %v149
    %v151 = vrot.slane %v138, %v150
    %v152 = vlaneseq
    %v153 = vshrl.u32 %v152, 7
    %v154 = vsub.s32 3, %v153
    %v155 = vrot.slane %v138, %v154
    %v156 = vlaneseq
    %v157 = vshrl.u32 %v156, 7
    %v158 = vsub.s32 4, %v157
    %v159 = vrot.slane %v138, %v158
    %v160 = vlaneseq
    %v161 = vshrl.u32 %v160, 7
    %v162 = vsub.s32 5, %v161
    %v163 = vrot.slane %v138, %v162
    %v164 = vlaneseq
    %v165 = vshrl.u32 %v164, 7
    %v166 = vsub.s32 6, %v165
    %v167 = vrot.slane %v138, %v166
    %v168 = vlaneseq
    %v169 = vshrl.u32 %v168, 7
    %v170 = vsub.s32 7, %v169
    %v171 = vrot.slane %v138, %v170
    %v196 = vunpack.c.l.b16 %v122
    %v197 = vunpack.c.h.b16 %v122
    %v198 = vunpack.c.l.b16 %v123
    %v199 = vunpack.c.h.b16 %v123
    %v200 = vunpack.c.l.b16 %v124
    %v201 = vunpack.c.h.b16 %v124
    %v202 = vunpack.c.l.b16 %v125
    %v203 = vunpack.c.h.b16 %v125
    %v204 = vunpack.c.l.b16 %v126
    %v205 = vunpack.c.h.b16 %v126
    %v206 = vunpack.c.l.b16 %v127
    %v207 = vunpack.c.h.b16 %v127
    %v208 = vunpack.c.l.b16 %v128
    %v209 = vunpack.c.h.b16 %v128
    %v210 = vunpack.c.l.b16 %v129
    %v211 = vunpack.c.h.b16 %v129
    %v212 = vunpack.c.l.b16 %v130
    %v213 = vunpack.c.h.b16 %v130
    %v214 = vunpack.c.l.b16 %v131
    %v215 = vunpack.c.h.b16 %v131
    %v216 = vunpack.c.l.b16 %v132
    %v217 = vunpack.c.h.b16 %v132
    %v218 = vunpack.c.l.b16 %v133
    %v219 = vunpack.c.h.b16 %v133
    %v220 = vunpack.c.l.b16 %v134
    %v221 = vunpack.c.h.b16 %v134
    %v222 = vunpack.c.l.b16 %v135
    %v223 = vunpack.c.h.b16 %v135
    %v224 = vunpack.c.l.b16 %v136
    %v225 = vunpack.c.h.b16 %v136
    %v226 = vunpack.c.l.b16 %v137
    %v227 = vunpack.c.h.b16 %v137
    %v228 = vpack.c.b16 %v204, %v196
    %v229 = vpack.c.b16 %v205, %v197
    %v230 = vpack.c.b16 %v206, %v198
    %v231 = vpack.c.b16 %v207, %v199
    %v232 = vpack.c.b16 %v208, %v200
    %v233 = vpack.c.b16 %v209, %v201
    %v234 = vpack.c.b16 %v210, %v202
    %v235 = vpack.c.b16 %v211, %v203
    %v236 = vpack.c.b16 %v220, %v212
    %v237 = vpack.c.b16 %v221, %v213
    %v238 = vpack.c.b16 %v222, %v214
    %v239 = vpack.c.b16 %v223, %v215
    %v240 = vpack.c.b16 %v224, %v216
    %v241 = vpack.c.b16 %v225, %v217
    %v242 = vpack.c.b16 %v226, %v218
    %v243 = vpack.c.b16 %v227, %v219
    %v261 = vsel %vm44, %v120, 0
    %v264 = vsel %vm44, %v121, 0
    %266 = vmatprep.subr.bf16.mxu0 %v229
    %267 = vmatpush1.bf16.msra.mxu0 %v228
    %268 = vmatprep.subr.bf16.mxu0 %v237
    %269 = vmatpush1.bf16.msra.mxu0 %v236
    %270 = vmatprep.subr.bf16.mxu0 0
    %271 = vmatpush1.bf16.msra.mxu0 0
    %272 = vmatprep.subr.bf16.mxu0 0
    %273 = vmatpush1.bf16.msra.mxu0 0
    %274 = vmatprep.subr.bf16.mxu0 0
    %275 = vmatpush1.bf16.msra.mxu0 0
    %276 = vmatprep.subr.bf16.mxu0 0
    %277 = vmatpush1.bf16.msra.mxu0 0
    %278 = vmatprep.subr.bf16.mxu0 0
    %279 = vmatpush1.bf16.msra.mxu0 0
    %280 = vmatprep.subr.bf16.mxu0 0
    %281 = vmatpush1.bf16.msra.mxu0 0
    %282 = vmatprep.subr.bf16.mxu0 0
    %283 = vmatpush1.bf16.msra.mxu0 0
    %284 = vmatprep.subr.bf16.mxu0 0
    %285 = vmatpush1.bf16.msra.mxu0 0
    %286 = vmatprep.subr.bf16.mxu0 0
    %287 = vmatpush1.bf16.msra.mxu0 0
    %288 = vmatprep.subr.bf16.mxu0 0
    %289 = vmatpush1.bf16.msra.mxu0 0
    %290 = vmatprep.subr.bf16.mxu0 0
    %291 = vmatpush1.bf16.msra.mxu0 0
    %292 = vmatprep.subr.bf16.mxu0 0
    %293 = vmatpush1.bf16.msra.mxu0 0
    %294 = vmatprep.subr.bf16.mxu0 0
    %295 = vmatpush1.bf16.msra.mxu0 0
    %296 = vmatprep.subr.bf16.mxu0 0
    %297 = vmatpush1.bf16.msra.mxu0 0
    %298 = vmatprep.mubr.bf16.mxu0 0
    %299 = vmatmul.mubr.bf16.gmra.mrb[0].mxu0 %v261
    %v300 = vpop.f32.mrb[0].mxu0
    %v301 = vadd.f32 %v143, %v300
    %v302 = vpop.f32.mrb[0].mxu0
    %v303 = vadd.f32 %v147, %v302
    %v304 = vpop.f32.mrb[0].mxu0
    %v305 = vadd.f32 %v143, %v304
    %v306 = vpop.f32.mrb[0].mxu0
    %v307 = vadd.f32 %v147, %v306
    %308 = vmatprep.mubr.bf16.mxu0 0
    %309 = vmatmul.mubr.bf16.gmra.mrb[0].mxu0 %v264
    %v310 = vpop.f32.mrb[0].mxu0
    %v311 = vadd.f32 %v143, %v310
    %v312 = vpop.f32.mrb[0].mxu0
    %v313 = vadd.f32 %v147, %v312
    %v314 = vpop.f32.mrb[0].mxu0
    %v315 = vadd.f32 %v143, %v314
    %v316 = vpop.f32.mrb[0].mxu0
    %v317 = vadd.f32 %v147, %v316
    %318 = vdwg.mxu0
    %319 = vmatprep.subr.bf16.mxu0 %v231
    %320 = vmatpush1.bf16.msra.mxu0 %v230
    %321 = vmatprep.subr.bf16.mxu0 %v239
    %322 = vmatpush1.bf16.msra.mxu0 %v238
    %323 = vmatprep.subr.bf16.mxu0 0
    %324 = vmatpush1.bf16.msra.mxu0 0
    %325 = vmatprep.subr.bf16.mxu0 0
    %326 = vmatpush1.bf16.msra.mxu0 0
    %327 = vmatprep.subr.bf16.mxu0 0
    %328 = vmatpush1.bf16.msra.mxu0 0
    %329 = vmatprep.subr.bf16.mxu0 0
    %330 = vmatpush1.bf16.msra.mxu0 0
    %331 = vmatprep.subr.bf16.mxu0 0
    %332 = vmatpush1.bf16.msra.mxu0 0
    %333 = vmatprep.subr.bf16.mxu0 0
    %334 = vmatpush1.bf16.msra.mxu0 0
    %335 = vmatprep.subr.bf16.mxu0 0
    %336 = vmatpush1.bf16.msra.mxu0 0
    %337 = vmatprep.subr.bf16.mxu0 0
    %338 = vmatpush1.bf16.msra.mxu0 0
    %339 = vmatprep.subr.bf16.mxu0 0
    %340 = vmatpush1.bf16.msra.mxu0 0
    %341 = vmatprep.subr.bf16.mxu0 0
    %342 = vmatpush1.bf16.msra.mxu0 0
    %343 = vmatprep.subr.bf16.mxu0 0
    %344 = vmatpush1.bf16.msra.mxu0 0
    %345 = vmatprep.subr.bf16.mxu0 0
    %346 = vmatpush1.bf16.msra.mxu0 0
    %347 = vmatprep.subr.bf16.mxu0 0
    %348 = vmatpush1.bf16.msra.mxu0 0
    %349 = vmatprep.subr.bf16.mxu0 0
    %350 = vmatpush1.bf16.msra.mxu0 0
    %351 = vmatprep.mubr.bf16.mxu0 0
    %352 = vmatmul.mubr.bf16.gmra.mrb[0].mxu0 %v261
    %v353 = vpop.f32.mrb[0].mxu0
    %v354 = vadd.f32 %v151, %v353
    %v355 = vpop.f32.mrb[0].mxu0
    %v356 = vadd.f32 %v155, %v355
    %v357 = vpop.f32.mrb[0].mxu0
    %v358 = vadd.f32 %v151, %v357
    %v359 = vpop.f32.mrb[0].mxu0
    %v360 = vadd.f32 %v155, %v359
    %361 = vmatprep.mubr.bf16.mxu0 0
    %362 = vmatmul.mubr.bf16.gmra.mrb[0].mxu0 %v264
    %v363 = vpop.f32.mrb[0].mxu0
    %v364 = vadd.f32 %v151, %v363
    %v365 = vpop.f32.mrb[0].mxu0
    %v366 = vadd.f32 %v155, %v365
    %v367 = vpop.f32.mrb[0].mxu0
    %v368 = vadd.f32 %v151, %v367
    %v369 = vpop.f32.mrb[0].mxu0
    %v370 = vadd.f32 %v155, %v369
    %371 = vdwg.mxu0
    %372 = vmatprep.subr.bf16.mxu0 %v233
    %373 = vmatpush1.bf16.msra.mxu0 %v232
    %374 = vmatprep.subr.bf16.mxu0 %v241
    %375 = vmatpush1.bf16.msra.mxu0 %v240
    %376 = vmatprep.subr.bf16.mxu0 0
    %377 = vmatpush1.bf16.msra.mxu0 0
    %378 = vmatprep.subr.bf16.mxu0 0
    %379 = vmatpush1.bf16.msra.mxu0 0
    %380 = vmatprep.subr.bf16.mxu0 0
    %381 = vmatpush1.bf16.msra.mxu0 0
    %382 = vmatprep.subr.bf16.mxu0 0
    %383 = vmatpush1.bf16.msra.mxu0 0
    %384 = vmatprep.subr.bf16.mxu0 0
    %385 = vmatpush1.bf16.msra.mxu0 0
    %386 = vmatprep.subr.bf16.mxu0 0
    %387 = vmatpush1.bf16.msra.mxu0 0
    %388 = vmatprep.subr.bf16.mxu0 0
    %389 = vmatpush1.bf16.msra.mxu0 0
    %390 = vmatprep.subr.bf16.mxu0 0
    %391 = vmatpush1.bf16.msra.mxu0 0
    %392 = vmatprep.subr.bf16.mxu0 0
    %393 = vmatpush1.bf16.msra.mxu0 0
    %394 = vmatprep.subr.bf16.mxu0 0
    %395 = vmatpush1.bf16.msra.mxu0 0
    %396 = vmatprep.subr.bf16.mxu0 0
    %397 = vmatpush1.bf16.msra.mxu0 0
    %398 = vmatprep.subr.bf16.mxu0 0
    %399 = vmatpush1.bf16.msra.mxu0 0
    %400 = vmatprep.subr.bf16.mxu0 0
    %401 = vmatpush1.bf16.msra.mxu0 0
    %402 = vmatprep.subr.bf16.mxu0 0
    %403 = vmatpush1.bf16.msra.mxu0 0
    %404 = vmatprep.mubr.bf16.mxu0 0
    %405 = vmatmul.mubr.bf16.gmra.mrb[0].mxu0 %v261
    %v406 = vpop.f32.mrb[0].mxu0
    %v407 = vadd.f32 %v159, %v406
    %v408 = vpop.f32.mrb[0].mxu0
    %v409 = vadd.f32 %v163, %v408
    %v410 = vpop.f32.mrb[0].mxu0
    %v411 = vadd.f32 %v159, %v410
    %v412 = vpop.f32.mrb[0].mxu0
    %v413 = vadd.f32 %v163, %v412
    %414 = vmatprep.mubr.bf16.mxu0 0
    %415 = vmatmul.mubr.bf16.gmra.mrb[0].mxu0 %v264
    %v416 = vpop.f32.mrb[0].mxu0
    %v417 = vadd.f32 %v159, %v416
    %v418 = vpop.f32.mrb[0].mxu0
    %v419 = vadd.f32 %v163, %v418
    %v420 = vpop.f32.mrb[0].mxu0
    %v421 = vadd.f32 %v159, %v420
    %v422 = vpop.f32.mrb[0].mxu0
    %v423 = vadd.f32 %v163, %v422
    %424 = vdwg.mxu0
    %425 = vmatprep.subr.bf16.mxu0 %v235
    %426 = vmatpush1.bf16.msra.mxu0 %v234
    %427 = vmatprep.subr.bf16.mxu0 %v243
    %428 = vmatpush1.bf16.msra.mxu0 %v242
    %429 = vmatprep.subr.bf16.mxu0 0
    %430 = vmatpush1.bf16.msra.mxu0 0
    %431 = vmatprep.subr.bf16.mxu0 0
    %432 = vmatpush1.bf16.msra.mxu0 0
    %433 = vmatprep.subr.bf16.mxu0 0
    %434 = vmatpush1.bf16.msra.mxu0 0
    %435 = vmatprep.subr.bf16.mxu0 0
    %436 = vmatpush1.bf16.msra.mxu0 0
    %437 = vmatprep.subr.bf16.mxu0 0
    %438 = vmatpush1.bf16.msra.mxu0 0
    %439 = vmatprep.subr.bf16.mxu0 0
    %440 = vmatpush1.bf16.msra.mxu0 0
    %441 = vmatprep.subr.bf16.mxu0 0
    %442 = vmatpush1.bf16.msra.mxu0 0
    %443 = vmatprep.subr.bf16.mxu0 0
    %444 = vmatpush1.bf16.msra.mxu0 0
    %445 = vmatprep.subr.bf16.mxu0 0
    %446 = vmatpush1.bf16.msra.mxu0 0
    %447 = vmatprep.subr.bf16.mxu0 0
    %448 = vmatpush1.bf16.msra.mxu0 0
    %449 = vmatprep.subr.bf16.mxu0 0
    %450 = vmatpush1.bf16.msra.mxu0 0
    %451 = vmatprep.subr.bf16.mxu0 0
    %452 = vmatpush1.bf16.msra.mxu0 0
    %453 = vmatprep.subr.bf16.mxu0 0
    %454 = vmatpush1.bf16.msra.mxu0 0
    %455 = vmatprep.subr.bf16.mxu0 0
    %456 = vmatpush1.bf16.msra.mxu0 0
    %457 = vmatprep.mubr.bf16.mxu0 0
    %458 = vmatmul.mubr.bf16.gmra.mrb[0].mxu0 %v261
    %v459 = vpop.f32.mrb[0].mxu0
    %v460 = vadd.f32 %v167, %v459
    %v461 = vpop.f32.mrb[0].mxu0
    %v462 = vadd.f32 %v171, %v461
    %v463 = vpop.f32.mrb[0].mxu0
    %v464 = vadd.f32 %v167, %v463
    %v465 = vpop.f32.mrb[0].mxu0
    %v466 = vadd.f32 %v171, %v465
    %467 = vmatprep.mubr.bf16.mxu0 0
    %468 = vmatmul.mubr.bf16.gmra.mrb[0].mxu0 %v264
    %v469 = vpop.f32.mrb[0].mxu0
    %v470 = vadd.f32 %v167, %v469
    %v471 = vpop.f32.mrb[0].mxu0
    %v472 = vadd.f32 %v171, %v471
    %v473 = vpop.f32.mrb[0].mxu0
    %v474 = vadd.f32 %v167, %v473
    %v475 = vpop.f32.mrb[0].mxu0
    %v476 = vadd.f32 %v171, %v475
    %477 = vdwg.mxu0
    %478 = vst [vmem:[#allocation2] sm:$0xff] %v301
    %479 = vst [vmem:[#allocation2 + $0x8] sm:$0xff] %v303
    %480 = vst [vmem:[#allocation2 + $0x10] sm:$0xff] %v354
    %481 = vst [vmem:[#allocation2 + $0x18] sm:$0xff] %v356
    %482 = vst [vmem:[#allocation2 + $0x20] sm:$0xff] %v407
    %483 = vst [vmem:[#allocation2 + $0x28] sm:$0xff] %v409
    %484 = vst [vmem:[#allocation2 + $0x30] sm:$0xff] %v460
    %485 = vst [vmem:[#allocation2 + $0x38] sm:$0xff] %v462
    %486 = vst [vmem:[#allocation2 + $0x40] sm:$0xff] %v305
    %487 = vst [vmem:[#allocation2 + $0x48] sm:$0xff] %v307
    %488 = vst [vmem:[#allocation2 + $0x50] sm:$0xff] %v358
    %489 = vst [vmem:[#allocation2 + $0x58] sm:$0xff] %v360
    %490 = vst [vmem:[#allocation2 + $0x60] sm:$0xff] %v411
    %491 = vst [vmem:[#allocation2 + $0x68] sm:$0xff] %v413
    %492 = vst [vmem:[#allocation2 + $0x70] sm:$0xff] %v464
    %493 = vst [vmem:[#allocation2 + $0x78] sm:$0xff] %v466
    %494 = vst [vmem:[#allocation2 + $0x80] sm:$0xff] %v311
    %495 = vst [vmem:[#allocation2 + $0x88] sm:$0xff] %v313
    %496 = vst [vmem:[#allocation2 + $0x90] sm:$0xff] %v364
    %497 = vst [vmem:[#allocation2 + $0x98] sm:$0xff] %v366
    %498 = vst [vmem:[#allocation2 + $0xa0] sm:$0xff] %v417
    %499 = vst [vmem:[#allocation2 + $0xa8] sm:$0xff] %v419
    %500 = vst [vmem:[#allocation2 + $0xb0] sm:$0xff] %v470
    %501 = vst [vmem:[#allocation2 + $0xb8] sm:$0xff] %v472
    %502 = vst [vmem:[#allocation2 + $0xc0] sm:$0xff] %v315
    %503 = vst [vmem:[#allocation2 + $0xc8] sm:$0xff] %v317
    %504 = vst [vmem:[#allocation2 + $0xd0] sm:$0xff] %v368
    %505 = vst [vmem:[#allocation2 + $0xd8] sm:$0xff] %v370
    %506 = vst [vmem:[#allocation2 + $0xe0] sm:$0xff] %v421
    %507 = vst [vmem:[#allocation2 + $0xe8] sm:$0xff] %v423
    %508 = vst [vmem:[#allocation2 + $0xf0] sm:$0xff] %v474
    %509 = vst [vmem:[#allocation2 + $0xf8] sm:$0xff] %v476
    %v510 = vld [vmem:[%s5] sm:$0xff]
    %v511 = vld [vmem:[%s5 + $0x8] sm:$0xff]
    %v512 = vld [vmem:[%s5 + $0x10] sm:$0xff]
    %v513 = vld [vmem:[%s5 + $0x18] sm:$0xff]
    %v514 = vmax.f32 %v301, %v303
    %v515 = vmax.f32 %v514, %v354
    %v516 = vmax.f32 %v515, %v356
    %v517 = vmax.f32 %v516, %v407
    %v518 = vmax.f32 %v517, %v409
    %v519 = vmax.f32 %v518, %v460
    %v520 = vmax.f32 %v519, %v462
    %521 = vmax.xlane.f32.xlu0 %v520
    %v522 = vpop.xlane.xlu0 %521
    %v523 = vmax.f32 %v305, %v307
    %v524 = vmax.f32 %v523, %v358
    %v525 = vmax.f32 %v524, %v360
    %v526 = vmax.f32 %v525, %v411
    %v527 = vmax.f32 %v526, %v413
    %v528 = vmax.f32 %v527, %v464
    %v529 = vmax.f32 %v528, %v466
    %530 = vmax.xlane.f32.xlu0 %v529
    %v531 = vpop.xlane.xlu0 %530
    %v532 = vmax.f32 %v311, %v313
    %v533 = vmax.f32 %v532, %v364
    %v534 = vmax.f32 %v533, %v366
    %v535 = vmax.f32 %v534, %v417
    %v536 = vmax.f32 %v535, %v419
    %v537 = vmax.f32 %v536, %v470
    %v538 = vmax.f32 %v537, %v472
    %539 = vmax.xlane.f32.xlu0 %v538
    %v540 = vpop.xlane.xlu0 %539
    %v541 = vmax.f32 %v315, %v317
    %v542 = vmax.f32 %v541, %v368
    %v543 = vmax.f32 %v542, %v370
    %v544 = vmax.f32 %v543, %v421
    %v545 = vmax.f32 %v544, %v423
    %v546 = vmax.f32 %v545, %v474
    %v547 = vmax.f32 %v546, %v476
    %548 = vmax.xlane.f32.xlu0 %v547
    %v549 = vpop.xlane.xlu0 %548
    %v550 = vsub.f32 %v301, %v522
    %v551 = vsub.f32 %v303, %v522
    %v552 = vsub.f32 %v354, %v522
    %v553 = vsub.f32 %v356, %v522
    %v554 = vsub.f32 %v407, %v522
    %v555 = vsub.f32 %v409, %v522
    %v556 = vsub.f32 %v460, %v522
    %v557 = vsub.f32 %v462, %v522
    %v558 = vsub.f32 %v305, %v531
    %v559 = vsub.f32 %v307, %v531
    %v560 = vsub.f32 %v358, %v531
    %v561 = vsub.f32 %v360, %v531
    %v562 = vsub.f32 %v411, %v531
    %v563 = vsub.f32 %v413, %v531
    %v564 = vsub.f32 %v464, %v531
    %v565 = vsub.f32 %v466, %v531
    %v566 = vsub.f32 %v311, %v540
    %v567 = vsub.f32 %v313, %v540
    %v568 = vsub.f32 %v364, %v540
    %v569 = vsub.f32 %v366, %v540
    %v570 = vsub.f32 %v417, %v540
    %v571 = vsub.f32 %v419, %v540
    %v572 = vsub.f32 %v470, %v540
    %v573 = vsub.f32 %v472, %v540
    %v574 = vsub.f32 %v315, %v549
    %v575 = vsub.f32 %v317, %v549
    %v576 = vsub.f32 %v368, %v549
    %v577 = vsub.f32 %v370, %v549
    %v578 = vsub.f32 %v421, %v549
    %v579 = vsub.f32 %v423, %v549
    %v580 = vsub.f32 %v474, %v549
    %v581 = vsub.f32 %v476, %v549
    %v582 = vmul.f32 %v550, 1.442695
    %v583 = vpow.pop %v582
    %v584 = vmul.f32 %v551, 1.442695
    %v585 = vpow.pop %v584
    %v586 = vmul.f32 %v552, 1.442695
    %v587 = vpow.pop %v586
    %v588 = vmul.f32 %v553, 1.442695
    %v589 = vpow.pop %v588
    %v590 = vmul.f32 %v554, 1.442695
    %v591 = vpow.pop %v590
    %v592 = vmul.f32 %v555, 1.442695
    %v593 = vpow.pop %v592
    %v594 = vmul.f32 %v556, 1.442695
    %v595 = vpow.pop %v594
    %v596 = vmul.f32 %v557, 1.442695
    %v597 = vpow.pop %v596
    %v598 = vmul.f32 %v558, 1.442695
    %v599 = vpow.pop %v598
    %v600 = vmul.f32 %v559, 1.442695
    %v601 = vpow.pop %v600
    %v602 = vmul.f32 %v560, 1.442695
    %v603 = vpow.pop %v602
    %v604 = vmul.f32 %v561, 1.442695
    %v605 = vpow.pop %v604
    %v606 = vmul.f32 %v562, 1.442695
    %v607 = vpow.pop %v606
    %v608 = vmul.f32 %v563, 1.442695
    %v609 = vpow.pop %v608
    %v610 = vmul.f32 %v564, 1.442695
    %v611 = vpow.pop %v610
    %v612 = vmul.f32 %v565, 1.442695
    %v613 = vpow.pop %v612
    %v614 = vmul.f32 %v566, 1.442695
    %v615 = vpow.pop %v614
    %v616 = vmul.f32 %v567, 1.442695
    %v617 = vpow.pop %v616
    %v618 = vmul.f32 %v568, 1.442695
    %v619 = vpow.pop %v618
    %v620 = vmul.f32 %v569, 1.442695
    %v621 = vpow.pop %v620
    %v622 = vmul.f32 %v570, 1.442695
    %v623 = vpow.pop %v622
    %v624 = vmul.f32 %v571, 1.442695
    %v625 = vpow.pop %v624
    %v626 = vmul.f32 %v572, 1.442695
    %v627 = vpow.pop %v626
    %v628 = vmul.f32 %v573, 1.442695
    %v629 = vpow.pop %v628
    %v630 = vmul.f32 %v574, 1.442695
    %v631 = vpow.pop %v630
    %v632 = vmul.f32 %v575, 1.442695
    %v633 = vpow.pop %v632
    %v634 = vmul.f32 %v576, 1.442695
    %v635 = vpow.pop %v634
    %v636 = vmul.f32 %v577, 1.442695
    %v637 = vpow.pop %v636
    %v638 = vmul.f32 %v578, 1.442695
    %v639 = vpow.pop %v638
    %v640 = vmul.f32 %v579, 1.442695
    %v641 = vpow.pop %v640
    %v642 = vmul.f32 %v580, 1.442695
    %v643 = vpow.pop %v642
    %v644 = vmul.f32 %v581, 1.442695
    %v645 = vpow.pop %v644
    %v646 = vadd.f32 %v583, %v585
    %v647 = vadd.f32 %v646, %v587
    %v648 = vadd.f32 %v647, %v589
    %v649 = vadd.f32 %v648, %v591
    %v650 = vadd.f32 %v649, %v593
    %v651 = vadd.f32 %v650, %v595
    %v652 = vadd.f32 %v651, %v597
    %653 = vadd.xlane.f32.xlu0 %v652
    %v654 = vpop.xlane.xlu0 %653
    %v655 = vadd.f32 %v599, %v601
    %v656 = vadd.f32 %v655, %v603
    %v657 = vadd.f32 %v656, %v605
    %v658 = vadd.f32 %v657, %v607
    %v659 = vadd.f32 %v658, %v609
    %v660 = vadd.f32 %v659, %v611
    %v661 = vadd.f32 %v660, %v613
    %662 = vadd.xlane.f32.xlu0 %v661
    %v663 = vpop.xlane.xlu0 %662
    %v664 = vadd.f32 %v615, %v617
    %v665 = vadd.f32 %v664, %v619
    %v666 = vadd.f32 %v665, %v621
    %v667 = vadd.f32 %v666, %v623
    %v668 = vadd.f32 %v667, %v625
    %v669 = vadd.f32 %v668, %v627
    %v670 = vadd.f32 %v669, %v629
    %671 = vadd.xlane.f32.xlu0 %v670
    %v672 = vpop.xlane.xlu0 %671
    %v673 = vadd.f32 %v631, %v633
    %v674 = vadd.f32 %v673, %v635
    %v675 = vadd.f32 %v674, %v637
    %v676 = vadd.f32 %v675, %v639
    %v677 = vadd.f32 %v676, %v641
    %v678 = vadd.f32 %v677, %v643
    %v679 = vadd.f32 %v678, %v645
    %680 = vadd.xlane.f32.xlu0 %v679
    %v681 = vpop.xlane.xlu0 %680
    %v682 = vlog2.pop %v654
    %v683 = vmul.f32 %v682, 0.6931472
    %v684 = vlog2.pop %v663
    %v685 = vmul.f32 %v684, 0.6931472
    %v686 = vlog2.pop %v672
    %v687 = vmul.f32 %v686, 0.6931472
    %v688 = vlog2.pop %v681
    %v689 = vmul.f32 %v688, 0.6931472
    %v690 = vadd.f32 %v683, %v522
    %v691 = vadd.f32 %v685, %v531
    %v692 = vadd.f32 %v687, %v540
    %v693 = vadd.f32 %v689, %v549
    %v694 = vlaneseq
    %v695 = vand.u32 %v694, 127
    %v696 = vadd.s32 %v695, 128
    %v697 = vadd.s32 %v695, 256
    %v698 = vadd.s32 %v695, 384
    %v699 = vadd.s32 %v695, 512
    %v700 = vadd.s32 %v695, 640
    %v701 = vadd.s32 %v695, 768
    %v702 = vadd.s32 %v695, 896
    %703 = vset.pattern.permute.xlu0 0
    %704 = vperm.xlu0 %703, %v510
    %v705 = vpop.permute.xlu0 %704
    %706 = vset.pattern.permute.xlu0 0
    %707 = vperm.xlu0 %706, %v511
    %v708 = vpop.permute.xlu0 %707
    %709 = vset.pattern.permute.xlu0 0
    %710 = vperm.xlu0 %709, %v512
    %v711 = vpop.permute.xlu0 %710
    %712 = vset.pattern.permute.xlu0 0
    %713 = vperm.xlu0 %712, %v513
    %v714 = vpop.permute.xlu0 %713
    %vm715 = vcmp.eq.s32.totalorder %v695, %v705
    %vm716 = vcmp.eq.s32.totalorder %v696, %v705
    %vm717 = vcmp.eq.s32.totalorder %v697, %v705
    %vm718 = vcmp.eq.s32.totalorder %v698, %v705
    %vm719 = vcmp.eq.s32.totalorder %v699, %v705
    %vm720 = vcmp.eq.s32.totalorder %v700, %v705
    %vm721 = vcmp.eq.s32.totalorder %v701, %v705
    %vm722 = vcmp.eq.s32.totalorder %v702, %v705
    %vm723 = vcmp.eq.s32.totalorder %v695, %v708
    %vm724 = vcmp.eq.s32.totalorder %v696, %v708
    %vm725 = vcmp.eq.s32.totalorder %v697, %v708
    %vm726 = vcmp.eq.s32.totalorder %v698, %v708
    %vm727 = vcmp.eq.s32.totalorder %v699, %v708
    %vm728 = vcmp.eq.s32.totalorder %v700, %v708
    %vm729 = vcmp.eq.s32.totalorder %v701, %v708
    %vm730 = vcmp.eq.s32.totalorder %v702, %v708
    %vm731 = vcmp.eq.s32.totalorder %v695, %v711
    %vm732 = vcmp.eq.s32.totalorder %v696, %v711
    %vm733 = vcmp.eq.s32.totalorder %v697, %v711
    %vm734 = vcmp.eq.s32.totalorder %v698, %v711
    %vm735 = vcmp.eq.s32.totalorder %v699, %v711
    %vm736 = vcmp.eq.s32.totalorder %v700, %v711
    %vm737 = vcmp.eq.s32.totalorder %v701, %v711
    %vm738 = vcmp.eq.s32.totalorder %v702, %v711
    %vm739 = vcmp.eq.s32.totalorder %v695, %v714
    %vm740 = vcmp.eq.s32.totalorder %v696, %v714
    %vm741 = vcmp.eq.s32.totalorder %v697, %v714
    %vm742 = vcmp.eq.s32.totalorder %v698, %v714
    %vm743 = vcmp.eq.s32.totalorder %v699, %v714
    %vm744 = vcmp.eq.s32.totalorder %v700, %v714
    %vm745 = vcmp.eq.s32.totalorder %v701, %v714
    %vm746 = vcmp.eq.s32.totalorder %v702, %v714
    %v747 = vsel %vm715, %v301, 0.0
    %v748 = vsel %vm716, %v303, 0.0
    %v749 = vsel %vm717, %v354, 0.0
    %v750 = vsel %vm718, %v356, 0.0
    %v751 = vsel %vm719, %v407, 0.0
    %v752 = vsel %vm720, %v409, 0.0
    %v753 = vsel %vm721, %v460, 0.0
    %v754 = vsel %vm722, %v462, 0.0
    %v755 = vsel %vm723, %v305, 0.0
    %v756 = vsel %vm724, %v307, 0.0
    %v757 = vsel %vm725, %v358, 0.0
    %v758 = vsel %vm726, %v360, 0.0
    %v759 = vsel %vm727, %v411, 0.0
    %v760 = vsel %vm728, %v413, 0.0
    %v761 = vsel %vm729, %v464, 0.0
    %v762 = vsel %vm730, %v466, 0.0
    %v763 = vsel %vm731, %v311, 0.0
    %v764 = vsel %vm732, %v313, 0.0
    %v765 = vsel %vm733, %v364, 0.0
    %v766 = vsel %vm734, %v366, 0.0
    %v767 = vsel %vm735, %v417, 0.0
    %v768 = vsel %vm736, %v419, 0.0
    %v769 = vsel %vm737, %v470, 0.0
    %v770 = vsel %vm738, %v472, 0.0
    %v771 = vsel %vm739, %v315, 0.0
    %v772 = vsel %vm740, %v317, 0.0
    %v773 = vsel %vm741, %v368, 0.0
    %v774 = vsel %vm742, %v370, 0.0
    %v775 = vsel %vm743, %v421, 0.0
    %v776 = vsel %vm744, %v423, 0.0
    %v777 = vsel %vm745, %v474, 0.0
    %v778 = vsel %vm746, %v476, 0.0
    %v779 = vadd.f32 %v747, %v748
    %v780 = vadd.f32 %v779, %v749
    %v781 = vadd.f32 %v780, %v750
    %v782 = vadd.f32 %v781, %v751
    %v783 = vadd.f32 %v782, %v752
    %v784 = vadd.f32 %v783, %v753
    %v785 = vadd.f32 %v784, %v754
    %786 = vadd.xlane.f32.xlu0 %v785
    %v787 = vpop.xlane.xlu0 %786
    %v788 = vadd.f32 %v755, %v756
    %v789 = vadd.f32 %v788, %v757
    %v790 = vadd.f32 %v789, %v758
    %v791 = vadd.f32 %v790, %v759
    %v792 = vadd.f32 %v791, %v760
    %v793 = vadd.f32 %v792, %v761
    %v794 = vadd.f32 %v793, %v762
    %795 = vadd.xlane.f32.xlu0 %v794
    %v796 = vpop.xlane.xlu0 %795
    %v797 = vadd.f32 %v763, %v764
    %v798 = vadd.f32 %v797, %v765
    %v799 = vadd.f32 %v798, %v766
    %v800 = vadd.f32 %v799, %v767
    %v801 = vadd.f32 %v800, %v768
    %v802 = vadd.f32 %v801, %v769
    %v803 = vadd.f32 %v802, %v770
    %804 = vadd.xlane.f32.xlu0 %v803
    %v805 = vpop.xlane.xlu0 %804
    %v806 = vadd.f32 %v771, %v772
    %v807 = vadd.f32 %v806, %v773
    %v808 = vadd.f32 %v807, %v774
    %v809 = vadd.f32 %v808, %v775
    %v810 = vadd.f32 %v809, %v776
    %v811 = vadd.f32 %v810, %v777
    %v812 = vadd.f32 %v811, %v778
    %813 = vadd.xlane.f32.xlu0 %v812
    %v814 = vpop.xlane.xlu0 %813
    %vm815 = vcmp.ne.s32.totalorder %v510, 4294967295
    %vm816 = vcmp.ne.s32.totalorder %v511, 4294967295
    %vm817 = vcmp.ne.s32.totalorder %v512, 4294967295
    %vm818 = vcmp.ne.s32.totalorder %v513, 4294967295
    %v819 = vsub.f32 %v690, %v787
    %v820 = vsub.f32 %v691, %v796
    %v821 = vsub.f32 %v692, %v805
    %v822 = vsub.f32 %v693, %v814
    %v823 = vsel %vm815, %v819, 0.0
    %v824 = vsel %vm816, %v820, 0.0
    %v825 = vsel %vm817, %v821, 0.0
    %v826 = vsel %vm818, %v822, 0.0
    %v827 = vld [vmem:[#allocation4] sm:$0x1]
    %vm828 = vcmask 7168
    %v829 = vsel %vm828, %v823, 0.0
    %v830 = vsel %vm828, %v824, 0.0
    %v831 = vadd.f32 %v829, %v830
    %v832 = vsel %vm828, %v825, 0.0
    %v833 = vadd.f32 %v831, %v832
    %v834 = vsel %vm828, %v826, 0.0
    %v835 = vadd.f32 %v833, %v834
    %836 = vadd.xlane.f32.xlu0 %v835
    %v837 = vpop.xlane.xlu0 %836
    %v838 = vrot.slane %v837, 4
    %v839 = vadd.f32 %v837, %v838
    %v840 = vrot.slane %v839, 2
    %v841 = vadd.f32 %v839, %v840
    %v842 = vrot.slane %v841, 1
    %v843 = vadd.f32 %v841, %v842
    %s844 = vtos %v843
    %v845 = vstv %s844
    %v846 = vadd.f32 %v827, %v845
    %vm847 = vcmask 0
    %848 = vst.msk [vmem:[#allocation4] sm:$0x1] %vm847, %v846
    %v849 = vld [vmem:[#allocation6] sm:$0x1]
    %v850 = vsel %vm815, 1, 0
    %v851 = vsel %vm816, 1, 0
    %v852 = vsel %vm817, 1, 0
    %v853 = vsel %vm818, 1, 0
    %v854 = vcvt.s32.f32 %v850
    %v855 = vcvt.s32.f32 %v851
    %v856 = vcvt.s32.f32 %v852
    %v857 = vcvt.s32.f32 %v853
    %v858 = vsel %vm828, %v854, 0.0
    %v859 = vsel %vm828, %v855, 0.0
    %v860 = vadd.f32 %v858, %v859
    %v861 = vsel %vm828, %v856, 0.0
    %v862 = vadd.f32 %v860, %v861
    %v863 = vsel %vm828, %v857, 0.0
    %v864 = vadd.f32 %v862, %v863
    %865 = vadd.xlane.f32.xlu0 %v864
    %v866 = vpop.xlane.xlu0 %865
    %v867 = vrot.slane %v866, 4
    %v868 = vadd.f32 %v866, %v867
    %v869 = vrot.slane %v868, 2
    %v870 = vadd.f32 %v868, %v869
    %v871 = vrot.slane %v870, 1
    %v872 = vadd.f32 %v870, %v871
    %s873 = vtos %v872
    %v874 = vstv %s873
    %v875 = vadd.f32 %v849, %v874
    %876 = vst.msk [vmem:[#allocation6] sm:$0x1] %vm847, %v875
    // Predicated region
    $region30: #{model_forward.35} parent=1 // pred_check
      _
    $region31: #{model_forward.35} parent=1 // pred_check_branch
      %878 = sbr.rel (0) target = $region33
    $region32: #{model_forward.35} parent=1 // pred_region
      %s880 = ssub.s32 4096, 4096
      %881 = vsyncadd [#allocation3], %s880
      %s882 = sshll.u32 [#allocation2], 4
      %s883 = int_to_ptr.vmem [resolvable:$true] %s882
      %888 = dma.vmem_to_hbm [thread:$0]  %s883, 4096, %s6, [#allocation3], 1024, 1024, 64
    $region33: #{model_forward.35} parent=1 // pred_fallthru
      _
    // Predicated region
    $region34: #{model_forward.35} parent=1 // pred_check
      _
    $region35: #{model_forward.35} parent=1 // pred_check_branch
      %890 = sbr.rel (0) target = $region37
    $region36: #{model_forward.35} parent=1 // pred_region
      %s892 = ssub.s32 16, 16
      %893 = vsyncadd [#allocation5], %s892
      %s895 = sshll.u32 [#allocation4], 4
      %s896 = int_to_ptr.vmem [resolvable:$true] %s895
      %898 = dma.vmem_to_hbm [thread:$0]  %s896, 16, %s7, [#allocation5]
    $region37: #{model_forward.35} parent=1 // pred_fallthru
      _
    // Predicated region
    $region38: #{model_forward.35} parent=1 // pred_check
      _
    $region39: #{model_forward.35} parent=1 // pred_check_branch
      %900 = sbr.rel (0) target = $region41
    $region40: #{model_forward.35} parent=1 // pred_region
      %s902 = ssub.s32 16, 16
      %903 = vsyncadd [#allocation5], %s902
      %s905 = sshll.u32 [#allocation6], 4
      %s906 = int_to_ptr.vmem [resolvable:$true] %s905
      %908 = dma.vmem_to_hbm [thread:$0]  %s906, 16, %s8, [#allocation5]
    $region41: #{model_forward.35} parent=1 // pred_fallthru
      _
    // Predicated region
    $region42: #{model_forward.35} parent=1 // pred_check
      _
    $region43: #{model_forward.35} parent=1 // pred_check_branch
      %910 = sbr.rel (0) target = $region45
    $region44: #{model_forward.35} parent=1 // pred_region
      %911 = dma.done [#allocation3], 4096
    $region45: #{model_forward.35} parent=1 // pred_fallthru
      _
    // Predicated region
    $region46: #{model_forward.35} parent=1 // pred_check
      _
    $region47: #{model_forward.35} parent=1 // pred_check_branch
      %913 = sbr.rel (0) target = $region49
    $region48: #{model_forward.35} parent=1 // pred_region
      %914 = dma.done [#allocation5], 16
    $region49: #{model_forward.35} parent=1 // pred_fallthru
      _
    // Predicated region
    $region50: #{model_forward.35} parent=1 // pred_check
      _
    $region51: #{model_forward.35} parent=1 // pred_check_branch
      %916 = sbr.rel (0) target = $region53
    $region52: #{model_forward.35} parent=1 // pred_region
      %917 = dma.done [#allocation5], 16
    $region53: #{model_forward.35} parent=1 // pred_fallthru
      _
    %918 = vsyncpa [#allocation3], 1
    %919 = vsyncpa [#allocation5], 1

</llo_original>
